<compile_context>
chip_gen: v6e
topology: v6e:2x2x1
jax: 0.10.0
libtpu: 0.0.40
codegen_flags: <defaults>
</compile_context>

<pallas_src>
import functools

import jax
import jax.numpy as jnp
from jax.experimental import pallas as pl
from jax.experimental.pallas import tpu as pltpu

BN_EPS = 1e-3
LANE = 128


# ------------------------------------------------------------------
# Pallas kernel: direct conv (tap-summed matmuls) + partial BN stats
# ------------------------------------------------------------------
def _conv_stats_kernel(x_ref, w_ref, mask_ref, y_ref, stats_ref, *,
                       tap_offsets, out_rows, stride):
    """One batch element per grid step.

    x_ref:     (Lp, Cin)         bf16  flattened padded image (+ tail zeros)
    w_ref:     (kh*kw, Cin, Cp)  bf16  per-tap weight matrices (resident)
    mask_ref:  (out_rows, 1)     f32   1.0 where the flat position is a valid wo
    y_ref:     (out_rows, Cp)    bf16  conv output, padded-width (Wp) pitch
    stats_ref: (2, Cp)           f32   [sum; sum_sq] over valid positions
    """
    cp = y_ref.shape[-1]
    acc = jnp.zeros((out_rows, cp), jnp.float32)
    # Static loop over the kh*kw taps: each tap is a shifted contiguous slab
    # of the flattened image -> one MXU matmul, f32 accumulation.
    for t, off in enumerate(tap_offsets):
        if stride == 1:
            xs = x_ref[pl.ds(off, out_rows), :]
        else:
            xs = x_ref[pl.ds(off, out_rows, stride), :]
        acc = acc + jnp.dot(xs, w_ref[t], preferred_element_type=jnp.float32)

    y_ref[...] = acc.astype(y_ref.dtype)

    # Partial BN statistics from the f32 accumulator (wrap columns masked out).
    masked = acc * mask_ref[...]
    s1 = jnp.sum(masked, axis=0, keepdims=True)
    s2 = jnp.sum(masked * acc, axis=0, keepdims=True)
    stats_ref[...] = jnp.concatenate([s1, s2], axis=0)


# ------------------------------------------------------------------
# Wrapper
# ------------------------------------------------------------------
def conv2d_bn(x_nchw, w, gamma, beta, *, stride=1, padding="same",
              activation=True, compute_dtype=jnp.bfloat16):
    """Forward of Conv2d_bn. x: NCHW f32, w: (Cout, Cin, KH, KW) PyTorch layout."""
    cout, cin, kh, kw = w.shape

    # Padding (PyTorch semantics; for 'same' the extra pad goes right/bottom).
    if padding == "same":
        if stride != 1:
            raise ValueError("padding='same' requires stride 1 (PyTorch semantics)")
        ph0, ph1 = (kh - 1) // 2, (kh - 1) - (kh - 1) // 2
        pw0, pw1 = (kw - 1) // 2, (kw - 1) - (kw - 1) // 2
    elif padding == "valid":
        ph0 = ph1 = pw0 = pw1 = 0
    elif isinstance(padding, (tuple, list)):
        ph0 = ph1 = int(padding[0]); pw0 = pw1 = int(padding[1])
    else:
        p = int(padding); ph0 = ph1 = pw0 = pw1 = p

    x = jnp.transpose(x_nchw, (0, 2, 3, 1)).astype(jnp.float32)   # NCHW -> NHWC
    N, H, W, _ = x.shape
    Hp, Wp = H + ph0 + ph1, W + pw0 + pw1
    Ho = (Hp - kh) // stride + 1
    Wo = (Wp - kw) // stride + 1
    out_rows = Ho * Wp                      # padded-width pitch (wrap trick)

    x = jnp.pad(x, ((0, 0), (ph0, ph1), (pw0, pw1), (0, 0)))
    x = x.reshape(N, Hp * Wp, cin)
    # Tail-pad the flattened image so every tap slab stays in bounds.
    max_off = (kh - 1) * Wp + (kw - 1)
    needed = max_off + stride * (out_rows - 1) + 1
    Lp = ((max(Hp * Wp, needed) + 7) // 8) * 8
    if Lp > Hp * Wp:
        x = jnp.pad(x, ((0, 0), (0, Lp - Hp * Wp), (0, 0)))
    x = x.astype(compute_dtype)

    # Per-tap weight matrices; pad Cout to a lane-dense multiple of 128.
    cp = ((cout + LANE - 1) // LANE) * LANE
    w_taps = jnp.transpose(w, (2, 3, 1, 0)).reshape(kh * kw, cin, cout)
    if cp != cout:
        w_taps = jnp.pad(w_taps, ((0, 0), (0, 0), (0, cp - cout)))
    w_taps = w_taps.astype(compute_dtype)

    # Validity mask over the padded-width output pitch (wrap columns -> 0).
    wo_idx = jnp.arange(out_rows, dtype=jnp.int32) % Wp
    mask = (wo_idx < Wo).astype(jnp.float32).reshape(out_rows, 1)

    tap_offsets = tuple(i * Wp + j for i in range(kh) for j in range(kw))

    # VMEM estimate; only raise the scoped limit when actually needed.
    ew = jnp.dtype(compute_dtype).itemsize
    vmem_need = (2 * (Lp * cin + out_rows * cp) * ew        # double-buffered x / y
                 + kh * kw * cin * cp * ew                  # resident weights
                 + out_rows * LANE * 4                      # mask (lane-padded)
                 + out_rows * cp * 4                        # f32 accumulator
                 + 4 * cp * 4)
    cparams = dict(dimension_semantics=("parallel",))
    if vmem_need > 12 * 1024 * 1024:
        cparams["vmem_limit_bytes"] = min(int(vmem_need * 3 // 2), 64 * 1024 * 1024)
        # TODO(synk): for very large images add an Ho-block grid axis with a
        # manually DMA'd halo instead of whole-image VMEM residency.

    flops = 2 * N * out_rows * cin * cp * kh * kw
    bytes_accessed = (N * Lp * cin * ew + kh * kw * cin * cp * ew
                      + N * out_rows * cp * ew + N * 2 * cp * 4 + out_rows * 4)

    kernel = functools.partial(_conv_stats_kernel, tap_offsets=tap_offsets,
                               out_rows=out_rows, stride=stride)

    conv_out, stats = pl.pallas_call(
        kernel,
        out_shape=(
            jax.ShapeDtypeStruct((N, out_rows, cp), compute_dtype),
            jax.ShapeDtypeStruct((N, 2, cp), jnp.float32),
        ),
        grid=(N,),
        in_specs=[
            pl.BlockSpec((None, Lp, cin), lambda n: (n, 0, 0)),      # image
            pl.BlockSpec((kh * kw, cin, cp), lambda n: (0, 0, 0)),   # weights (resident)
            pl.BlockSpec((out_rows, 1), lambda n: (0, 0)),           # mask (resident)
        ],
        out_specs=(
            pl.BlockSpec((None, out_rows, cp), lambda n: (n, 0, 0)),
            pl.BlockSpec((None, 2, cp), lambda n: (n, 0, 0)),
        ),
        compiler_params=pltpu.CompilerParams(**cparams),
        cost_estimate=pl.CostEstimate(flops=flops, transcendentals=0,
                                      bytes_accessed=bytes_accessed),
    )(x, w_taps, mask)

    # ---- BN finalize (tiny): train-mode biased stats -> scale/shift ---------
    M = N * Ho * Wo
    sums = jnp.sum(stats[:, :, :cout], axis=0)               # (2, Cout)
    mean = sums[0] / M
    var = jnp.maximum(sums[1] / M - mean * mean, 0.0)         # biased variance
    scale = gamma * jax.lax.rsqrt(var + BN_EPS)
    shift = beta - mean * scale

    # ---- Fused epilogue (XLA): slice valid cols/channels, affine, ReLU, NCHW
    y = conv_out.reshape(N, Ho, Wp, cp)[:, :, :Wo, :cout].astype(jnp.float32)
    y = y * scale.reshape(1, 1, 1, cout) + shift.reshape(1, 1, 1, cout)
    if activation:
        y = jnp.maximum(y, 0.0)
    return jnp.transpose(y, (0, 3, 1, 2))                     # NHWC -> NCHW


# ------------------------------------------------------------------
# Pure-JAX reference (loose correctness check; kernel uses bf16 operands)
# ------------------------------------------------------------------
def conv2d_bn_ref(x, w, gamma, beta, *, activation=True):
    y = jax.lax.conv_general_dilated(
        x, w, window_strides=(1, 1), padding="SAME",
        dimension_numbers=("NCHW", "OIHW", "NCHW"))
    mean = jnp.mean(y, axis=(0, 2, 3), keepdims=True)
    var = jnp.mean(jnp.square(y - mean), axis=(0, 2, 3), keepdims=True)
    y = (y - mean) * jax.lax.rsqrt(var + BN_EPS)
    y = y * gamma.reshape(1, -1, 1, 1) + beta.reshape(1, -1, 1, 1)
    return jnp.maximum(y, 0.0) if activation else y


# ------------------------------------------------------------------
# Demo
# ------------------------------------------------------------------
if __name__ == "__main__":
    key = jax.random.PRNGKey(0)
    kx, kw_, kg, kb = jax.random.split(key, 4)

    # Small shapes consistent with the module: in_size=32, filters=128, k=3.
    N, Cin, H, W = 2, 32, 20, 20
    Cout, ksz = 128, 3

    x = jax.random.normal(kx, (N, Cin, H, W), jnp.float32)
    w = 0.05 * jax.random.normal(kw_, (Cout, Cin, ksz, ksz), jnp.float32)
    gamma = 1.0 + 0.1 * jax.random.normal(kg, (Cout,), jnp.float32)
    beta = 0.1 * jax.random.normal(kb, (Cout,), jnp.float32)

    out = jax.block_until_ready(
        conv2d_bn(x, w, gamma, beta, stride=1, padding="same", activation=True))
    assert out.shape == (N, Cout, H, W), out.shape
    assert bool(jnp.all(jnp.isfinite(out)))

    # Loose tolerance: kernel feeds the MXU bf16 operands and stores the conv
    # intermediate in bf16 (f32 accumulation + f32 BN statistics).
    ref = jax.block_until_ready(conv2d_bn_ref(x, w, gamma, beta, activation=True))
    assert bool(jnp.allclose(out, ref, atol=5e-2, rtol=5e-2)), (
        float(jnp.max(jnp.abs(out - ref))))

    # TODO(synk): BatchNorm running_mean/running_var (momentum=0.1) updates are
    # not reproduced; only the train-mode forward normalization is implemented.
    print("KERNEL_OK")
</pallas_src>

<mosaic_0001>
module attributes {stable_mosaic.version = 11 : i64} {
  func.func @_conv_stats_kernel(%arg0: i32, %arg1: memref<1x488x32xbf16, #tpu.memory_space<vmem>>, %arg2: memref<9x32x128xbf16, #tpu.memory_space<vmem>>, %arg3: memref<440x1xf32, #tpu.memory_space<vmem>>, %arg4: memref<1x440x128xbf16, #tpu.memory_space<vmem>>, %arg5: memref<1x2x128xf32, #tpu.memory_space<vmem>>) attributes {dimension_semantics = [#tpu.dimension_semantics<parallel>], iteration_bounds = array<i64: 2>, scalar_prefetch = 0 : i64, scratch_operands = 0 : i64, tpu.core_type = #tpu.core_type<tc>, window_params = [{transform_indices = @transform_0, window_bounds = array<i64: 1, 488, 32>}, {pipeline_mode = #tpu.pipeline_mode<synchronous>, transform_indices = @transform_1, window_bounds = array<i64: 9, 32, 128>}, {pipeline_mode = #tpu.pipeline_mode<synchronous>, transform_indices = @transform_2, window_bounds = array<i64: 440, 1>}, {transform_indices = @transform_3, window_bounds = array<i64: 1, 440, 128>}, {transform_indices = @transform_4, window_bounds = array<i64: 1, 2, 128>}]} {
    %cst = arith.constant 0.000000e+00 : f32
    %0 = vector.broadcast %cst : f32 to vector<440x128xf32>
    %c0 = arith.constant 0 : index
    %c0_0 = arith.constant 0 : index
    %c0_1 = arith.constant 0 : index
    %1 = vector.load %arg1[%c0, %c0_0, %c0_1] : memref<1x488x32xbf16, #tpu.memory_space<vmem>>, vector<1x440x32xbf16>
    %2 = vector.shape_cast %1 : vector<1x440x32xbf16> to vector<440x32xbf16>
    %c0_2 = arith.constant 0 : index
    %c0_3 = arith.constant 0 : index
    %c0_4 = arith.constant 0 : index
    %3 = vector.load %arg2[%c0_2, %c0_3, %c0_4] : memref<9x32x128xbf16, #tpu.memory_space<vmem>>, vector<1x32x128xbf16>
    %4 = vector.shape_cast %3 : vector<1x32x128xbf16> to vector<32x128xbf16>
    %cst_5 = arith.constant dense<0.000000e+00> : vector<440x128xf32>
    %5 = tpu.matmul %2, %4, %cst_5 {dimension_numbers = #tpu.dot_dimension_numbers<[1], [0], [0], [1], [0, 0, 1, 1], [], []>} : vector<440x32xbf16>, vector<32x128xbf16>, vector<440x128xf32> -> vector<440x128xf32>
    %6 = arith.addf %0, %5 : vector<440x128xf32>
    %c0_6 = arith.constant 0 : index
    %c1 = arith.constant 1 : index
    %c0_7 = arith.constant 0 : index
    %7 = vector.load %arg1[%c0_6, %c1, %c0_7] : memref<1x488x32xbf16, #tpu.memory_space<vmem>>, vector<1x440x32xbf16>
    %8 = vector.shape_cast %7 : vector<1x440x32xbf16> to vector<440x32xbf16>
    %c1_8 = arith.constant 1 : index
    %c0_9 = arith.constant 0 : index
    %c0_10 = arith.constant 0 : index
    %9 = vector.load %arg2[%c1_8, %c0_9, %c0_10] : memref<9x32x128xbf16, #tpu.memory_space<vmem>>, vector<1x32x128xbf16>
    %10 = vector.shape_cast %9 : vector<1x32x128xbf16> to vector<32x128xbf16>
    %cst_11 = arith.constant dense<0.000000e+00> : vector<440x128xf32>
    %11 = tpu.matmul %8, %10, %cst_11 {dimension_numbers = #tpu.dot_dimension_numbers<[1], [0], [0], [1], [0, 0, 1, 1], [], []>} : vector<440x32xbf16>, vector<32x128xbf16>, vector<440x128xf32> -> vector<440x128xf32>
    %12 = arith.addf %6, %11 : vector<440x128xf32>
    %c0_12 = arith.constant 0 : index
    %c2 = arith.constant 2 : index
    %c0_13 = arith.constant 0 : index
    %13 = vector.load %arg1[%c0_12, %c2, %c0_13] : memref<1x488x32xbf16, #tpu.memory_space<vmem>>, vector<1x440x32xbf16>
    %14 = vector.shape_cast %13 : vector<1x440x32xbf16> to vector<440x32xbf16>
    %c2_14 = arith.constant 2 : index
    %c0_15 = arith.constant 0 : index
    %c0_16 = arith.constant 0 : index
    %15 = vector.load %arg2[%c2_14, %c0_15, %c0_16] : memref<9x32x128xbf16, #tpu.memory_space<vmem>>, vector<1x32x128xbf16>
    %16 = vector.shape_cast %15 : vector<1x32x128xbf16> to vector<32x128xbf16>
    %cst_17 = arith.constant dense<0.000000e+00> : vector<440x128xf32>
    %17 = tpu.matmul %14, %16, %cst_17 {dimension_numbers = #tpu.dot_dimension_numbers<[1], [0], [0], [1], [0, 0, 1, 1], [], []>} : vector<440x32xbf16>, vector<32x128xbf16>, vector<440x128xf32> -> vector<440x128xf32>
    %18 = arith.addf %12, %17 : vector<440x128xf32>
    %c0_18 = arith.constant 0 : index
    %c22 = arith.constant 22 : index
    %c0_19 = arith.constant 0 : index
    %19 = vector.load %arg1[%c0_18, %c22, %c0_19] : memref<1x488x32xbf16, #tpu.memory_space<vmem>>, vector<1x440x32xbf16>
    %20 = vector.shape_cast %19 : vector<1x440x32xbf16> to vector<440x32xbf16>
    %c3 = arith.constant 3 : index
    %c0_20 = arith.constant 0 : index
    %c0_21 = arith.constant 0 : index
    %21 = vector.load %arg2[%c3, %c0_20, %c0_21] : memref<9x32x128xbf16, #tpu.memory_space<vmem>>, vector<1x32x128xbf16>
    %22 = vector.shape_cast %21 : vector<1x32x128xbf16> to vector<32x128xbf16>
    %cst_22 = arith.constant dense<0.000000e+00> : vector<440x128xf32>
    %23 = tpu.matmul %20, %22, %cst_22 {dimension_numbers = #tpu.dot_dimension_numbers<[1], [0], [0], [1], [0, 0, 1, 1], [], []>} : vector<440x32xbf16>, vector<32x128xbf16>, vector<440x128xf32> -> vector<440x128xf32>
    %24 = arith.addf %18, %23 : vector<440x128xf32>
    %c0_23 = arith.constant 0 : index
    %c23 = arith.constant 23 : index
    %c0_24 = arith.constant 0 : index
    %25 = vector.load %arg1[%c0_23, %c23, %c0_24] : memref<1x488x32xbf16, #tpu.memory_space<vmem>>, vector<1x440x32xbf16>
    %26 = vector.shape_cast %25 : vector<1x440x32xbf16> to vector<440x32xbf16>
    %c4 = arith.constant 4 : index
    %c0_25 = arith.constant 0 : index
    %c0_26 = arith.constant 0 : index
    %27 = vector.load %arg2[%c4, %c0_25, %c0_26] : memref<9x32x128xbf16, #tpu.memory_space<vmem>>, vector<1x32x128xbf16>
    %28 = vector.shape_cast %27 : vector<1x32x128xbf16> to vector<32x128xbf16>
    %cst_27 = arith.constant dense<0.000000e+00> : vector<440x128xf32>
    %29 = tpu.matmul %26, %28, %cst_27 {dimension_numbers = #tpu.dot_dimension_numbers<[1], [0], [0], [1], [0, 0, 1, 1], [], []>} : vector<440x32xbf16>, vector<32x128xbf16>, vector<440x128xf32> -> vector<440x128xf32>
    %30 = arith.addf %24, %29 : vector<440x128xf32>
    %c0_28 = arith.constant 0 : index
    %c24 = arith.constant 24 : index
    %c0_29 = arith.constant 0 : index
    %31 = vector.load %arg1[%c0_28, %c24, %c0_29] : memref<1x488x32xbf16, #tpu.memory_space<vmem>>, vector<1x440x32xbf16>
    %32 = vector.shape_cast %31 : vector<1x440x32xbf16> to vector<440x32xbf16>
    %c5 = arith.constant 5 : index
    %c0_30 = arith.constant 0 : index
    %c0_31 = arith.constant 0 : index
    %33 = vector.load %arg2[%c5, %c0_30, %c0_31] : memref<9x32x128xbf16, #tpu.memory_space<vmem>>, vector<1x32x128xbf16>
    %34 = vector.shape_cast %33 : vector<1x32x128xbf16> to vector<32x128xbf16>
    %cst_32 = arith.constant dense<0.000000e+00> : vector<440x128xf32>
    %35 = tpu.matmul %32, %34, %cst_32 {dimension_numbers = #tpu.dot_dimension_numbers<[1], [0], [0], [1], [0, 0, 1, 1], [], []>} : vector<440x32xbf16>, vector<32x128xbf16>, vector<440x128xf32> -> vector<440x128xf32>
    %36 = arith.addf %30, %35 : vector<440x128xf32>
    %c0_33 = arith.constant 0 : index
    %c44 = arith.constant 44 : index
    %c0_34 = arith.constant 0 : index
    %37 = vector.load %arg1[%c0_33, %c44, %c0_34] : memref<1x488x32xbf16, #tpu.memory_space<vmem>>, vector<1x440x32xbf16>
    %38 = vector.shape_cast %37 : vector<1x440x32xbf16> to vector<440x32xbf16>
    %c6 = arith.constant 6 : index
    %c0_35 = arith.constant 0 : index
    %c0_36 = arith.constant 0 : index
    %39 = vector.load %arg2[%c6, %c0_35, %c0_36] : memref<9x32x128xbf16, #tpu.memory_space<vmem>>, vector<1x32x128xbf16>
    %40 = vector.shape_cast %39 : vector<1x32x128xbf16> to vector<32x128xbf16>
    %cst_37 = arith.constant dense<0.000000e+00> : vector<440x128xf32>
    %41 = tpu.matmul %38, %40, %cst_37 {dimension_numbers = #tpu.dot_dimension_numbers<[1], [0], [0], [1], [0, 0, 1, 1], [], []>} : vector<440x32xbf16>, vector<32x128xbf16>, vector<440x128xf32> -> vector<440x128xf32>
    %42 = arith.addf %36, %41 : vector<440x128xf32>
    %c0_38 = arith.constant 0 : index
    %c45 = arith.constant 45 : index
    %c0_39 = arith.constant 0 : index
    %43 = vector.load %arg1[%c0_38, %c45, %c0_39] : memref<1x488x32xbf16, #tpu.memory_space<vmem>>, vector<1x440x32xbf16>
    %44 = vector.shape_cast %43 : vector<1x440x32xbf16> to vector<440x32xbf16>
    %c7 = arith.constant 7 : index
    %c0_40 = arith.constant 0 : index
    %c0_41 = arith.constant 0 : index
    %45 = vector.load %arg2[%c7, %c0_40, %c0_41] : memref<9x32x128xbf16, #tpu.memory_space<vmem>>, vector<1x32x128xbf16>
    %46 = vector.shape_cast %45 : vector<1x32x128xbf16> to vector<32x128xbf16>
    %cst_42 = arith.constant dense<0.000000e+00> : vector<440x128xf32>
    %47 = tpu.matmul %44, %46, %cst_42 {dimension_numbers = #tpu.dot_dimension_numbers<[1], [0], [0], [1], [0, 0, 1, 1], [], []>} : vector<440x32xbf16>, vector<32x128xbf16>, vector<440x128xf32> -> vector<440x128xf32>
    %48 = arith.addf %42, %47 : vector<440x128xf32>
    %c0_43 = arith.constant 0 : index
    %c46 = arith.constant 46 : index
    %c0_44 = arith.constant 0 : index
    %49 = vector.load %arg1[%c0_43, %c46, %c0_44] : memref<1x488x32xbf16, #tpu.memory_space<vmem>>, vector<1x440x32xbf16>
    %50 = vector.shape_cast %49 : vector<1x440x32xbf16> to vector<440x32xbf16>
    %c8 = arith.constant 8 : index
    %c0_45 = arith.constant 0 : index
    %c0_46 = arith.constant 0 : index
    %51 = vector.load %arg2[%c8, %c0_45, %c0_46] : memref<9x32x128xbf16, #tpu.memory_space<vmem>>, vector<1x32x128xbf16>
    %52 = vector.shape_cast %51 : vector<1x32x128xbf16> to vector<32x128xbf16>
    %cst_47 = arith.constant dense<0.000000e+00> : vector<440x128xf32>
    %53 = tpu.matmul %50, %52, %cst_47 {dimension_numbers = #tpu.dot_dimension_numbers<[1], [0], [0], [1], [0, 0, 1, 1], [], []>} : vector<440x32xbf16>, vector<32x128xbf16>, vector<440x128xf32> -> vector<440x128xf32>
    %54 = arith.addf %48, %53 : vector<440x128xf32>
    %55 = arith.truncf %54 : vector<440x128xf32> to vector<440x128xbf16>
    %c0_48 = arith.constant 0 : index
    %c0_49 = arith.constant 0 : index
    %c0_50 = arith.constant 0 : index
    %56 = vector.load %arg4[%c0_48, %c0_49, %c0_50] : memref<1x440x128xbf16, #tpu.memory_space<vmem>>, vector<1x440x128xbf16>
    %57 = vector.shape_cast %56 : vector<1x440x128xbf16> to vector<440x128xbf16>
    %58 = vector.shape_cast %55 : vector<440x128xbf16> to vector<1x440x128xbf16>
    tpu.vector_store %arg4[%c0_48, %c0_49, %c0_50], %58 {strides = array<i32>} : memref<1x440x128xbf16, #tpu.memory_space<vmem>>, vector<1x440x128xbf16>,
    %c0_51 = arith.constant 0 : index
    %c0_52 = arith.constant 0 : index
    %59 = vector.load %arg3[%c0_51, %c0_52] : memref<440x1xf32, #tpu.memory_space<vmem>>, vector<440x1xf32>
    %60 = vector.broadcast %59 : vector<440x1xf32> to vector<440x128xf32>
    %61 = arith.mulf %54, %60 : vector<440x128xf32>
    %cst_53 = arith.constant dense<0.000000e+00> : vector<128xf32>
    %62 = vector.multi_reduction <add>, %61, %cst_53 [0] : vector<440x128xf32> to vector<128xf32>
    %63 = vector.shape_cast %62 : vector<128xf32> to vector<1x128xf32>
    %64 = arith.mulf %61, %54 : vector<440x128xf32>
    %cst_54 = arith.constant dense<0.000000e+00> : vector<128xf32>
    %65 = vector.multi_reduction <add>, %64, %cst_54 [0] : vector<440x128xf32> to vector<128xf32>
    %66 = vector.shape_cast %65 : vector<128xf32> to vector<1x128xf32>
    %67 = tpu.concatenate %63, %66 in 0 : vector<1x128xf32>, vector<1x128xf32> -> vector<2x128xf32>
    %c0_55 = arith.constant 0 : index
    %c0_56 = arith.constant 0 : index
    %c0_57 = arith.constant 0 : index
    %68 = vector.load %arg5[%c0_55, %c0_56, %c0_57] : memref<1x2x128xf32, #tpu.memory_space<vmem>>, vector<1x2x128xf32>
    %69 = vector.shape_cast %68 : vector<1x2x128xf32> to vector<2x128xf32>
    %70 = vector.shape_cast %67 : vector<2x128xf32> to vector<1x2x128xf32>
    tpu.vector_store %arg5[%c0_55, %c0_56, %c0_57], %70 {strides = array<i32>} : memref<1x2x128xf32, #tpu.memory_space<vmem>>, vector<1x2x128xf32>,
    return
  }
  func.func @transform_0(%arg0: i32) -> (i32, i32, i32) {
    %c0_i32 = arith.constant 0 : i32
    %c0_i32_0 = arith.constant 0 : i32
    %c0_i32_1 = arith.constant 0 : i32
    return %arg0, %c0_i32, %c0_i32_0 : i32, i32, i32
  }
  func.func @transform_1(%arg0: i32) -> (i32, i32, i32) {
    %c0_i32 = arith.constant 0 : i32
    %c0_i32_0 = arith.constant 0 : i32
    %c0_i32_1 = arith.constant 0 : i32
    %c0_i32_2 = arith.constant 0 : i32
    return %c0_i32, %c0_i32_0, %c0_i32_1 : i32, i32, i32
  }
  func.func @transform_2(%arg0: i32) -> (i32, i32) {
    %c0_i32 = arith.constant 0 : i32
    %c0_i32_0 = arith.constant 0 : i32
    %c0_i32_1 = arith.constant 0 : i32
    return %c0_i32, %c0_i32_0 : i32, i32
  }
  func.func @transform_3(%arg0: i32) -> (i32, i32, i32) {
    %c0_i32 = arith.constant 0 : i32
    %c0_i32_0 = arith.constant 0 : i32
    %c0_i32_1 = arith.constant 0 : i32
    return %arg0, %c0_i32, %c0_i32_0 : i32, i32, i32
  }
  func.func @transform_4(%arg0: i32) -> (i32, i32, i32) {
    %c0_i32 = arith.constant 0 : i32
    %c0_i32_0 = arith.constant 0 : i32
    %c0_i32_1 = arith.constant 0 : i32
    return %arg0, %c0_i32, %c0_i32_0 : i32, i32, i32
  }
}

</mosaic_0001>

<llo_original>
// kernel: tpu_custom_call.1
$region0: #{tpu_custom_call.1}
  #allocation0 [shape = 'u32[]', space=smem, size = 0x4, offset = 0x4, fixed_abs, tag = 'smem constant byte address 0x4 - core index']
  #allocation1 [shape = 'u32[144,128]{1,0:T(1,128)}', space=vmem, size = 0x12000, scoped, tag = 'internal scratch']
  %s0 = inlined_call_operand.vmem [shape: bf16[2,488,32], index: 0, kind: input, shape index: {}]
  %s1 = inlined_call_operand.vmem [shape: bf16[9,32,128], index: 1, kind: input, shape index: {}]
  %s2 = inlined_call_operand.vmem [shape: f32[440,1], index: 2, kind: input, shape index: {}]
  %s3 = inlined_call_operand.hbm [shape: bf16[2,440,128], index: 3, kind: output, shape index: {0}]
  %s4 = inlined_call_operand.hbm [shape: f32[2,2,128], index: 4, kind: output, shape index: {1}]
  %5 = xla_tuple %s3, %s4
  %s6 = sld [smem:[#allocation0]]
  $region53: #{tpu_custom_call.1} parent=0
    _
  %s8 = ssub.s32 1, %s6
  %s9 = scalar_select 0, %s8, %s6
  $region1: #{tpu_custom_call.1} parent=0
    #allocation2 [shape = 'u8[225280]{0}', space=vmem, size = 0x37000, scoped, tag = 'output window, operand 0']
    #allocation3 [shape = 's32[2]{0}', space=sflag, size = 0x8, scoped, tag = 'scoped memory for tpu_custom_call.1']
    #allocation4 [shape = 'u8[2048]{0}', space=vmem, size = 0x800, scoped, tag = 'output window, operand 1']
    #allocation5 [shape = 's32[2]{0}', space=sflag, size = 0x8, scoped, tag = 'scoped memory for tpu_custom_call.1']
    %10 = vsyncpa [#allocation3], 0
    %s11 = scalar_lea.sflag [#allocation3], 1
    %12 = vsyncpa %s11, 0
    %13 = vsyncpa [#allocation5], 0
    %s14 = scalar_lea.sflag [#allocation5], 1
    %15 = vsyncpa %s14, 0
    loop: start=0, step=1, limit=4
    $region2: #{tpu_custom_call.1} parent=1 // loop_pre_header
      _
    $region3: #{tpu_custom_call.1} parent=1 // loop_header
      %s17 = sphi 0, %s21
      %p18 = scmp.ge.s32.totalorder %s17, 4
      %s27 = sphi 0, %s29
      %s30 = sphi 0, %s27
      %s31 = sphi 0, %s30
      %s47 = sphi 0, %s31
      %s51 = sphi 0, %s51
      %s53 = sphi 0, %s51
      %s54 = sphi 0, %s53
      %s68 = sphi 0, %s54
      %s72 = sphi 0, %s72
      %s74 = sphi 0, %s72
      %s75 = sphi 0, %s74
      %s89 = sphi 0, %s75
      %s95 = sphi 0, %s97
      %s98 = sphi 0, %s95
      %s99 = sphi 0, %s98
      %s115 = sphi 0, %s99
      %s121 = sphi 0, %s123
      %s124 = sphi 0, %s121
      %s125 = sphi 0, %s124
      %s141 = sphi 0, %s125
    $region4: #{tpu_custom_call.1} parent=1 // loop_header_branch
      %20 = sbr.rel (%p18) target = $region8
    $region5: #{tpu_custom_call.1} parent=1 // loop_body
      %s22 = ssub.s32 %s17, 1
      %s23 = ssub.s32 %s17, 2
      %s24 = sadd.s32 %s17, 1
      %s25 = ssub.s32 %s17, %s24
      %p26 = scmp.eq.s32.totalorder %s25, 0
      %s28 = sadd.s32 %s27, 1
      %s29 = scalar_select %p26, %s27, %s28
      %p32 = pneg %p26
      %p33 = scmp.eq.s32.totalorder %s17, 1
      %p34 = por %p32, %p33
      %p35 = scmp.ne.s32.totalorder %s27, %s30
      %p36 = scmp.eq.s32.totalorder %s17, 0
      %p37 = por %p35, %p36
      %p38 = scmp.ne.s32.totalorder %s27, %s30
      %p39 = scmp.eq.s32.totalorder %s22, 1
      %p40 = por %p38, %p39
      %p41 = scmp.ne.s32.totalorder %s30, %s31
      %p42 = scmp.eq.s32.totalorder %s22, 0
      %p43 = por %p41, %p42
      %p44 = scmp.ne.s32.totalorder %s30, %s31
      %p45 = scmp.eq.s32.totalorder %s23, 1
      %p46 = por %p44, %p45
      %p48 = scmp.ne.s32.totalorder %s31, %s47
      %p49 = scmp.eq.s32.totalorder %s23, 0
      %p50 = por %p48, %p49
      %s52 = sadd.s32 %s51, 1
      %p55 = scmp.eq.s32.totalorder %s17, 1
      %p56 = scmp.ne.s32.totalorder %s51, %s53
      %p57 = scmp.eq.s32.totalorder %s17, 0
      %p58 = por %p56, %p57
      %p59 = scmp.ne.s32.totalorder %s51, %s53
      %p60 = scmp.eq.s32.totalorder %s22, 1
      %p61 = por %p59, %p60
      %p62 = scmp.ne.s32.totalorder %s53, %s54
      %p63 = scmp.eq.s32.totalorder %s22, 0
      %p64 = por %p62, %p63
      %p65 = scmp.ne.s32.totalorder %s53, %s54
      %p66 = scmp.eq.s32.totalorder %s23, 1
      %p67 = por %p65, %p66
      %p69 = scmp.ne.s32.totalorder %s54, %s68
      %p70 = scmp.eq.s32.totalorder %s23, 0
      %p71 = por %p69, %p70
      %s73 = sadd.s32 %s72, 1
      %p76 = scmp.eq.s32.totalorder %s17, 1
      %p77 = scmp.ne.s32.totalorder %s72, %s74
      %p78 = scmp.eq.s32.totalorder %s17, 0
      %p79 = por %p77, %p78
      %p80 = scmp.ne.s32.totalorder %s72, %s74
      %p81 = scmp.eq.s32.totalorder %s22, 1
      %p82 = por %p80, %p81
      %p83 = scmp.ne.s32.totalorder %s74, %s75
      %p84 = scmp.eq.s32.totalorder %s22, 0
      %p85 = por %p83, %p84
      %p86 = scmp.ne.s32.totalorder %s74, %s75
      %p87 = scmp.eq.s32.totalorder %s23, 1
      %p88 = por %p86, %p87
      %p90 = scmp.ne.s32.totalorder %s75, %s89
      %p91 = scmp.eq.s32.totalorder %s23, 0
      %p92 = por %p90, %p91
      %s93 = ssub.s32 %s17, %s24
      %p94 = scmp.eq.s32.totalorder %s93, 0
      %s96 = sadd.s32 %s95, 1
      %s97 = scalar_select %p94, %s95, %s96
      %p100 = pneg %p94
      %p101 = scmp.eq.s32.totalorder %s17, 1
      %p102 = por %p100, %p101
      %p103 = scmp.ne.s32.totalorder %s95, %s98
      %p104 = scmp.eq.s32.totalorder %s17, 0
      %p105 = por %p103, %p104
      %p106 = scmp.ne.s32.totalorder %s95, %s98
      %p107 = scmp.eq.s32.totalorder %s22, 1
      %p108 = por %p106, %p107
      %p109 = scmp.ne.s32.totalorder %s98, %s99
      %p110 = scmp.eq.s32.totalorder %s22, 0
      %p111 = por %p109, %p110
      %p112 = scmp.ne.s32.totalorder %s98, %s99
      %p113 = scmp.eq.s32.totalorder %s23, 1
      %p114 = por %p112, %p113
      %p116 = scmp.ne.s32.totalorder %s99, %s115
      %p117 = scmp.eq.s32.totalorder %s23, 0
      %p118 = por %p116, %p117
      %s119 = ssub.s32 %s17, %s24
      %p120 = scmp.eq.s32.totalorder %s119, 0
      %s122 = sadd.s32 %s121, 1
      %s123 = scalar_select %p120, %s121, %s122
      %p126 = pneg %p120
      %p127 = scmp.eq.s32.totalorder %s17, 1
      %p128 = por %p126, %p127
      %p129 = scmp.ne.s32.totalorder %s121, %s124
      %p130 = scmp.eq.s32.totalorder %s17, 0
      %p131 = por %p129, %p130
      %p132 = scmp.ne.s32.totalorder %s121, %s124
      %p133 = scmp.eq.s32.totalorder %s22, 1
      %p134 = por %p132, %p133
      %p135 = scmp.ne.s32.totalorder %s124, %s125
      %p136 = scmp.eq.s32.totalorder %s22, 0
      %p137 = por %p135, %p136
      %p138 = scmp.ne.s32.totalorder %s124, %s125
      %p139 = scmp.eq.s32.totalorder %s23, 1
      %p140 = por %p138, %p139
      %p142 = scmp.ne.s32.totalorder %s125, %s141
      %p143 = scmp.eq.s32.totalorder %s23, 0
      %p144 = por %p142, %p143
      %p145 = scmp.le.s32.totalorder 1, %s17
      %p146 = scmp.lt.s32.totalorder %s17, 3
      %p147 = pnand %p145, %p146
      %p148 = pneg %p147
      // Predicated region
      $region9: #{tpu_custom_call.1} parent=5 // pred_check
        _
      $region10: #{tpu_custom_call.1} parent=5 // pred_check_branch
        %150 = sbr.rel (%p147) target = $region12
      $region11: #{tpu_custom_call.1} parent=5 // pred_region
        %s151 = ssub.s32 %s17, 1
        // Predicated region
        $region13: #{tpu_custom_call.1} parent=11 // pred_check
          %p152 = pneg %p64
        $region14: #{tpu_custom_call.1} parent=11 // pred_check_branch
          %154 = sbr.rel (%p152) target = $region16
        $region15: #{tpu_custom_call.1} parent=11 // pred_region
          _
        $region16: #{tpu_custom_call.1} parent=11 // pred_fallthru
          _
        // Predicated region
        $region17: #{tpu_custom_call.1} parent=11 // pred_check
          %p155 = pneg %p85
        $region18: #{tpu_custom_call.1} parent=11 // pred_check_branch
          %157 = sbr.rel (%p155) target = $region20
        $region19: #{tpu_custom_call.1} parent=11 // pred_region
          _
        $region20: #{tpu_custom_call.1} parent=11 // pred_fallthru
          _
      $region12: #{tpu_custom_call.1} parent=5 // pred_fallthru
        _
      %p158 = scmp.lt.s32.totalorder %s17, 2
      // Predicated region
      $region21: #{tpu_custom_call.1} parent=5 // pred_check
        %p159 = pneg %p158
      $region22: #{tpu_custom_call.1} parent=5 // pred_check_branch
        %161 = sbr.rel (%p159) target = $region24
      $region23: #{tpu_custom_call.1} parent=5 // pred_region
        // Predicated region
        $region25: #{tpu_custom_call.1} parent=23 // pred_check
          %p162 = pneg %p37
        $region26: #{tpu_custom_call.1} parent=23 // pred_check_branch
          %164 = sbr.rel (%p162) target = $region28
        $region27: #{tpu_custom_call.1} parent=23 // pred_region
          %p165 = scmp.lt.s32.totalorder %s17, 1
          %s166 = scalar_select %p165, %s17, 1
          %s167 = smul.addr %s166, 61
          %s168 = smul.addr %s167, 4
          %s169 = scalar_lea.vmem %s0, %s168
        $region28: #{tpu_custom_call.1} parent=23 // pred_fallthru
          _
      $region24: #{tpu_custom_call.1} parent=5 // pred_fallthru
        _
      %p170 = scmp.le.s32.totalorder 1, %s17
      %p171 = scmp.lt.s32.totalorder %s17, 3
      %p172 = pnand %p170, %p171
      %p173 = pneg %p172
      // Predicated region
      $region29: #{tpu_custom_call.1} parent=5 // pred_check
        _
      $region30: #{tpu_custom_call.1} parent=5 // pred_check_branch
        %175 = sbr.rel (%p172) target = $region32
      $region31: #{tpu_custom_call.1} parent=5 // pred_region
        %s176 = ssub.s32 %s17, 1
        %p177 = scmp.lt.s32.totalorder %s22, 1
        %s178 = scalar_select %p177, %s22, 1
        %s179 = smul.addr %s178, 61
        %s180 = smul.addr %s179, 4
        %s181 = scalar_lea.vmem %s0, %s180
        %p182 = pneg %p43
        %p183 = pneg %p40
        %p184 = pneg %p64
        %p185 = pneg %p61
        %p186 = pneg %p85
        %p187 = pneg %p82
        %p188 = pneg %p111
        %p189 = pneg %p108
        %s190 = sand.u32 %s98, 1
        %s191 = scalar_lea.sflag [#allocation3], %s190
        %s192 = sand.u32 %s98, 1
        %s193 = smul.addr %s192, 220
        %s194 = scalar_lea.vmem [#allocation2], %s193
        %p195 = pneg %p137
        %p196 = pneg %p134
        %s197 = sand.u32 %s124, 1
        %s198 = scalar_lea.sflag [#allocation5], %s197
        %s199 = sand.u32 %s124, 1
        %s200 = smul.addr %s199, 2
        %s201 = scalar_lea.vmem [#allocation4], %s200
        %p202 = scmp.lt.s32.totalorder %s22, 1
        %s203 = scalar_select %p202, %s22, 1
        %s204 = smul.addr %s203, 61
        %s205 = smul.addr %s204, 4
        %s206 = scalar_lea.vmem %s0, %s205
        %v208 = vld [vmem:[%s206] sm:$0xf]
        %v209 = vld [vmem:[%s206 + $0x4] sm:$0xf]
        %v210 = vld [vmem:[%s206 + $0x8] sm:$0xf]
        %v211 = vld [vmem:[%s206 + $0xc] sm:$0xf]
        %v212 = vld [vmem:[%s206 + $0x10] sm:$0xf]
        %v213 = vld [vmem:[%s206 + $0x14] sm:$0xf]
        %v214 = vld [vmem:[%s206 + $0x18] sm:$0xf]
        %v215 = vld [vmem:[%s206 + $0x1c] sm:$0xf]
        %v216 = vld [vmem:[%s206 + $0x20] sm:$0xf]
        %v217 = vld [vmem:[%s206 + $0x24] sm:$0xf]
        %v218 = vld [vmem:[%s206 + $0x28] sm:$0xf]
        %v219 = vld [vmem:[%s206 + $0x2c] sm:$0xf]
        %v220 = vld [vmem:[%s206 + $0x30] sm:$0xf]
        %v221 = vld [vmem:[%s206 + $0x34] sm:$0xf]
        %v222 = vld [vmem:[%s206 + $0x38] sm:$0xf]
        %v223 = vld [vmem:[%s206 + $0x3c] sm:$0xf]
        %v224 = vld [vmem:[%s206 + $0x40] sm:$0xf]
        %v225 = vld [vmem:[%s206 + $0x44] sm:$0xf]
        %v226 = vld [vmem:[%s206 + $0x48] sm:$0xf]
        %v227 = vld [vmem:[%s206 + $0x4c] sm:$0xf]
        %v228 = vld [vmem:[%s206 + $0x50] sm:$0xf]
        %v229 = vld [vmem:[%s206 + $0x54] sm:$0xf]
        %v230 = vld [vmem:[%s206 + $0x58] sm:$0xf]
        %v231 = vld [vmem:[%s206 + $0x5c] sm:$0xf]
        %v232 = vld [vmem:[%s206 + $0x60] sm:$0xf]
        %v233 = vld [vmem:[%s206 + $0x64] sm:$0xf]
        %v234 = vld [vmem:[%s206 + $0x68] sm:$0xf]
        %v235 = vld [vmem:[%s206 + $0x6c] sm:$0xf]
        %v236 = vld [vmem:[%s206 + $0x70] sm:$0xf]
        %v237 = vld [vmem:[%s206 + $0x74] sm:$0xf]
        %v238 = vld [vmem:[%s206 + $0x78] sm:$0xf]
        %v239 = vld [vmem:[%s206 + $0x7c] sm:$0xf]
        %v240 = vld [vmem:[%s206 + $0x80] sm:$0xf]
        %v241 = vld [vmem:[%s206 + $0x84] sm:$0xf]
        %v242 = vld [vmem:[%s206 + $0x88] sm:$0xf]
        %v243 = vld [vmem:[%s206 + $0x8c] sm:$0xf]
        %v244 = vld [vmem:[%s206 + $0x90] sm:$0xf]
        %v245 = vld [vmem:[%s206 + $0x94] sm:$0xf]
        %v246 = vld [vmem:[%s206 + $0x98] sm:$0xf]
        %v247 = vld [vmem:[%s206 + $0x9c] sm:$0xf]
        %v248 = vld [vmem:[%s206 + $0xa0] sm:$0xf]
        %v249 = vld [vmem:[%s206 + $0xa4] sm:$0xf]
        %v250 = vld [vmem:[%s206 + $0xa8] sm:$0xf]
        %v251 = vld [vmem:[%s206 + $0xac] sm:$0xf]
        %v252 = vld [vmem:[%s206 + $0xb0] sm:$0xf]
        %v253 = vld [vmem:[%s206 + $0xb4] sm:$0xf]
        %v254 = vld [vmem:[%s206 + $0xb8] sm:$0xf]
        %v255 = vld [vmem:[%s206 + $0xbc] sm:$0xf]
        %v256 = vld [vmem:[%s206 + $0xc0] sm:$0xf]
        %v257 = vld [vmem:[%s206 + $0xc4] sm:$0xf]
        %v258 = vld [vmem:[%s206 + $0xc8] sm:$0xf]
        %v259 = vld [vmem:[%s206 + $0xcc] sm:$0xf]
        %v260 = vld [vmem:[%s206 + $0xd0] sm:$0xf]
        %v261 = vld [vmem:[%s206 + $0xd4] sm:$0xf]
        %v262 = vld [vmem:[%s206 + $0xd8] sm:$0xf]
        %v263 = vld [vmem:[%s1] sm:$0xf]
        %v264 = vld [vmem:[%s1 + $0x4] sm:$0xf]
        %v265 = vld [vmem:[%s1 + $0x8] sm:$0xf]
        %v266 = vld [vmem:[%s1 + $0xc] sm:$0xf]
        %v267 = vld [vmem:[%s206 + $0xdc] sm:$0x1]
        %s268 = scalar_lea.vmem %s1, 16
        %v269 = vld [vmem:[%s268] sm:$0xf]
        %v270 = vld [vmem:[%s268 + $0x4] sm:$0xf]
        %v271 = vld [vmem:[%s268 + $0x8] sm:$0xf]
        %v272 = vld [vmem:[%s268 + $0xc] sm:$0xf]
        %v329 = vunpack.c.l.b16 %v208
        %v330 = vunpack.c.l.b16 %v209
        %v331 = vunpack.c.l.b16 %v210
        %v332 = vunpack.c.l.b16 %v211
        %v333 = vunpack.c.l.b16 %v212
        %v334 = vunpack.c.l.b16 %v213
        %v335 = vunpack.c.l.b16 %v214
        %v336 = vunpack.c.l.b16 %v215
        %v337 = vunpack.c.l.b16 %v216
        %v338 = vunpack.c.l.b16 %v217
        %v339 = vunpack.c.l.b16 %v218
        %v340 = vunpack.c.l.b16 %v219
        %v341 = vunpack.c.l.b16 %v220
        %v342 = vunpack.c.l.b16 %v221
        %v343 = vunpack.c.l.b16 %v222
        %v344 = vunpack.c.l.b16 %v223
        %v345 = vunpack.c.l.b16 %v224
        %v346 = vunpack.c.l.b16 %v225
        %v347 = vunpack.c.l.b16 %v226
        %v348 = vunpack.c.l.b16 %v227
        %v349 = vunpack.c.l.b16 %v228
        %v350 = vunpack.c.l.b16 %v229
        %v351 = vunpack.c.l.b16 %v230
        %v352 = vunpack.c.l.b16 %v231
        %v353 = vunpack.c.l.b16 %v232
        %v354 = vunpack.c.l.b16 %v233
        %v355 = vunpack.c.l.b16 %v234
        %v356 = vunpack.c.l.b16 %v235
        %v357 = vunpack.c.l.b16 %v236
        %v358 = vunpack.c.l.b16 %v237
        %v359 = vunpack.c.l.b16 %v238
        %v360 = vunpack.c.l.b16 %v239
        %v361 = vunpack.c.l.b16 %v240
        %v362 = vunpack.c.l.b16 %v241
        %v363 = vunpack.c.l.b16 %v242
        %v364 = vunpack.c.l.b16 %v243
        %v365 = vunpack.c.l.b16 %v244
        %v366 = vunpack.c.l.b16 %v245
        %v367 = vunpack.c.l.b16 %v246
        %v368 = vunpack.c.l.b16 %v247
        %v369 = vunpack.c.l.b16 %v248
        %v370 = vunpack.c.l.b16 %v249
        %v371 = vunpack.c.l.b16 %v250
        %v372 = vunpack.c.l.b16 %v251
        %v373 = vunpack.c.l.b16 %v252
        %v374 = vunpack.c.l.b16 %v253
        %v375 = vunpack.c.l.b16 %v254
        %v376 = vunpack.c.l.b16 %v255
        %v377 = vunpack.c.l.b16 %v256
        %v378 = vunpack.c.l.b16 %v257
        %v379 = vunpack.c.l.b16 %v258
        %v380 = vunpack.c.l.b16 %v259
        %v381 = vunpack.c.l.b16 %v260
        %v382 = vunpack.c.l.b16 %v261
        %v383 = vunpack.c.l.b16 %v262
        %v384 = vunpack.c.l.b16 %v267
        %v385 = vpack.c.b16 %v330, %v329
        %v386 = vpack.c.b16 %v332, %v331
        %v387 = vpack.c.b16 %v334, %v333
        %v388 = vpack.c.b16 %v336, %v335
        %v389 = vpack.c.b16 %v338, %v337
        %v390 = vpack.c.b16 %v340, %v339
        %v391 = vpack.c.b16 %v342, %v341
        %v392 = vpack.c.b16 %v344, %v343
        %v393 = vpack.c.b16 %v346, %v345
        %v394 = vpack.c.b16 %v348, %v347
        %v395 = vpack.c.b16 %v350, %v349
        %v396 = vpack.c.b16 %v352, %v351
        %v397 = vpack.c.b16 %v354, %v353
        %v398 = vpack.c.b16 %v356, %v355
        %v399 = vpack.c.b16 %v358, %v357
        %v400 = vpack.c.b16 %v360, %v359
        %v401 = vpack.c.b16 %v362, %v361
        %v402 = vpack.c.b16 %v364, %v363
        %v403 = vpack.c.b16 %v366, %v365
        %v404 = vpack.c.b16 %v368, %v367
        %v405 = vpack.c.b16 %v370, %v369
        %v406 = vpack.c.b16 %v372, %v371
        %v407 = vpack.c.b16 %v374, %v373
        %v408 = vpack.c.b16 %v376, %v375
        %v409 = vpack.c.b16 %v378, %v377
        %v410 = vpack.c.b16 %v380, %v379
        %v411 = vpack.c.b16 %v382, %v381
        %v412 = vpack.c.b16 %v384, %v383
        %vm413 = vsmask.f32 7424
        %v415 = vshrl.u32 %v385, 16
        %v417 = vshll.u32 %v385, 16
        %v419 = vrot.slane %v417, 1
        %v420 = vor.u32 %v415, %v419
        %v422 = vshll.u32 %v386, 16
        %v424 = vrot.slane %v422, 1
        %v425 = vsel %vm413, %v420, %v424
        %v426 = vshrl.u32 %v386, 16
        %v428 = vor.u32 %v426, %v424
        %v430 = vshll.u32 %v387, 16
        %v432 = vrot.slane %v430, 1
        %v433 = vsel %vm413, %v428, %v432
        %v434 = vshrl.u32 %v387, 16
        %v436 = vor.u32 %v434, %v432
        %v438 = vshll.u32 %v388, 16
        %v440 = vrot.slane %v438, 1
        %v441 = vsel %vm413, %v436, %v440
        %v442 = vshrl.u32 %v388, 16
        %v444 = vor.u32 %v442, %v440
        %v446 = vshll.u32 %v389, 16
        %v448 = vrot.slane %v446, 1
        %v449 = vsel %vm413, %v444, %v448
        %v450 = vshrl.u32 %v389, 16
        %v452 = vor.u32 %v450, %v448
        %v454 = vshll.u32 %v390, 16
        %v456 = vrot.slane %v454, 1
        %v457 = vsel %vm413, %v452, %v456
        %v458 = vshrl.u32 %v390, 16
        %v460 = vor.u32 %v458, %v456
        %v462 = vshll.u32 %v391, 16
        %v464 = vrot.slane %v462, 1
        %v465 = vsel %vm413, %v460, %v464
        %v466 = vshrl.u32 %v391, 16
        %v468 = vor.u32 %v466, %v464
        %v470 = vshll.u32 %v392, 16
        %v472 = vrot.slane %v470, 1
        %v473 = vsel %vm413, %v468, %v472
        %v474 = vshrl.u32 %v392, 16
        %v476 = vor.u32 %v474, %v472
        %v478 = vshll.u32 %v393, 16
        %v480 = vrot.slane %v478, 1
        %v481 = vsel %vm413, %v476, %v480
        %v482 = vshrl.u32 %v393, 16
        %v484 = vor.u32 %v482, %v480
        %v486 = vshll.u32 %v394, 16
        %v488 = vrot.slane %v486, 1
        %v489 = vsel %vm413, %v484, %v488
        %v490 = vshrl.u32 %v394, 16
        %v492 = vor.u32 %v490, %v488
        %v494 = vshll.u32 %v395, 16
        %v496 = vrot.slane %v494, 1
        %v497 = vsel %vm413, %v492, %v496
        %v498 = vshrl.u32 %v395, 16
        %v500 = vor.u32 %v498, %v496
        %v502 = vshll.u32 %v396, 16
        %v504 = vrot.slane %v502, 1
        %v505 = vsel %vm413, %v500, %v504
        %v506 = vshrl.u32 %v396, 16
        %v508 = vor.u32 %v506, %v504
        %v510 = vshll.u32 %v397, 16
        %v512 = vrot.slane %v510, 1
        %v513 = vsel %vm413, %v508, %v512
        %v514 = vshrl.u32 %v397, 16
        %v516 = vor.u32 %v514, %v512
        %v518 = vshll.u32 %v398, 16
        %v520 = vrot.slane %v518, 1
        %v521 = vsel %vm413, %v516, %v520
        %v522 = vshrl.u32 %v398, 16
        %v524 = vor.u32 %v522, %v520
        %v526 = vshll.u32 %v399, 16
        %v528 = vrot.slane %v526, 1
        %v529 = vsel %vm413, %v524, %v528
        %v530 = vshrl.u32 %v399, 16
        %v532 = vor.u32 %v530, %v528
        %v534 = vshll.u32 %v400, 16
        %v536 = vrot.slane %v534, 1
        %v537 = vsel %vm413, %v532, %v536
        %v538 = vshrl.u32 %v400, 16
        %v540 = vor.u32 %v538, %v536
        %v542 = vshll.u32 %v401, 16
        %v544 = vrot.slane %v542, 1
        %v545 = vsel %vm413, %v540, %v544
        %v546 = vshrl.u32 %v401, 16
        %v548 = vor.u32 %v546, %v544
        %v550 = vshll.u32 %v402, 16
        %v552 = vrot.slane %v550, 1
        %v553 = vsel %vm413, %v548, %v552
        %v554 = vshrl.u32 %v402, 16
        %v556 = vor.u32 %v554, %v552
        %v558 = vshll.u32 %v403, 16
        %v560 = vrot.slane %v558, 1
        %v561 = vsel %vm413, %v556, %v560
        %v562 = vshrl.u32 %v403, 16
        %v564 = vor.u32 %v562, %v560
        %v566 = vshll.u32 %v404, 16
        %v568 = vrot.slane %v566, 1
        %v569 = vsel %vm413, %v564, %v568
        %v570 = vshrl.u32 %v404, 16
        %v572 = vor.u32 %v570, %v568
        %v574 = vshll.u32 %v405, 16
        %v576 = vrot.slane %v574, 1
        %v577 = vsel %vm413, %v572, %v576
        %v578 = vshrl.u32 %v405, 16
        %v580 = vor.u32 %v578, %v576
        %v582 = vshll.u32 %v406, 16
        %v584 = vrot.slane %v582, 1
        %v585 = vsel %vm413, %v580, %v584
        %v586 = vshrl.u32 %v406, 16
        %v588 = vor.u32 %v586, %v584
        %v590 = vshll.u32 %v407, 16
        %v592 = vrot.slane %v590, 1
        %v593 = vsel %vm413, %v588, %v592
        %v594 = vshrl.u32 %v407, 16
        %v596 = vor.u32 %v594, %v592
        %v598 = vshll.u32 %v408, 16
        %v600 = vrot.slane %v598, 1
        %v601 = vsel %vm413, %v596, %v600
        %v602 = vshrl.u32 %v408, 16
        %v604 = vor.u32 %v602, %v600
        %v606 = vshll.u32 %v409, 16
        %v608 = vrot.slane %v606, 1
        %v609 = vsel %vm413, %v604, %v608
        %v610 = vshrl.u32 %v409, 16
        %v612 = vor.u32 %v610, %v608
        %v614 = vshll.u32 %v410, 16
        %v616 = vrot.slane %v614, 1
        %v617 = vsel %vm413, %v612, %v616
        %v618 = vshrl.u32 %v410, 16
        %v620 = vor.u32 %v618, %v616
        %v622 = vshll.u32 %v411, 16
        %v624 = vrot.slane %v622, 1
        %v625 = vsel %vm413, %v620, %v624
        %v626 = vshrl.u32 %v411, 16
        %v628 = vor.u32 %v626, %v624
        %v630 = vshll.u32 %v412, 16
        %v632 = vrot.slane %v630, 1
        %v633 = vsel %vm413, %v628, %v632
        %v634 = vshrl.u32 %v412, 16
        %v636 = vor.u32 %v634, %v632
        %v641 = vunpack.c.l.b16 %v269
        %v642 = vunpack.c.l.b16 %v270
        %v643 = vunpack.c.l.b16 %v271
        %v644 = vunpack.c.l.b16 %v272
        %v645 = vpack.c.b16 %v642, %v641
        %v646 = vpack.c.b16 %v644, %v643
        %vm649 = vcmask 261120
        %v651 = vsel %vm649, %v425, 0
        %v654 = vsel %vm649, %v433, 0
        %v657 = vsel %vm649, %v441, 0
        %v660 = vsel %vm649, %v449, 0
        %v663 = vsel %vm649, %v457, 0
        %v666 = vsel %vm649, %v465, 0
        %v669 = vsel %vm649, %v473, 0
        %v672 = vsel %vm649, %v481, 0
        %v675 = vsel %vm649, %v489, 0
        %v678 = vsel %vm649, %v497, 0
        %v681 = vsel %vm649, %v505, 0
        %v684 = vsel %vm649, %v513, 0
        %v687 = vsel %vm649, %v521, 0
        %v690 = vsel %vm649, %v529, 0
        %v693 = vsel %vm649, %v537, 0
        %v696 = vsel %vm649, %v545, 0
        %v699 = vsel %vm649, %v553, 0
        %v702 = vsel %vm649, %v561, 0
        %v705 = vsel %vm649, %v569, 0
        %v708 = vsel %vm649, %v577, 0
        %v711 = vsel %vm649, %v585, 0
        %v714 = vsel %vm649, %v593, 0
        %v717 = vsel %vm649, %v601, 0
        %v720 = vsel %vm649, %v609, 0
        %v723 = vsel %vm649, %v617, 0
        %v726 = vsel %vm649, %v625, 0
        %v729 = vsel %vm649, %v633, 0
        %v732 = vsel %vm649, %v636, 0
        %734 = vmatprep.subr.bf16.mxu0 0
        %735 = vmatpush1.bf16.msra.mxu0 0
        %736 = vmatprep.subr.bf16.mxu0 0
        %737 = vmatpush1.bf16.msra.mxu0 0
        %738 = vmatprep.subr.bf16.mxu0 0
        %739 = vmatpush1.bf16.msra.mxu0 0
        %740 = vmatprep.subr.bf16.mxu0 0
        %741 = vmatpush1.bf16.msra.mxu0 0
        %742 = vmatprep.subr.bf16.mxu0 0
        %743 = vmatpush1.bf16.msra.mxu0 0
        %744 = vmatprep.subr.bf16.mxu0 0
        %745 = vmatpush1.bf16.msra.mxu0 0
        %746 = vmatprep.subr.bf16.mxu0 0
        %747 = vmatpush1.bf16.msra.mxu0 %v646
        %748 = vmatprep.subr.bf16.mxu0 0
        %749 = vmatpush1.bf16.msra.mxu0 %v645
        %750 = vmatprep.subr.bf16.mxu0 0
        %751 = vmatpush2.bf16.msra.mxu0 0
        %752 = vmatprep.subr.bf16.mxu0 0
        %753 = vmatpush2.bf16.msra.mxu0 0
        %754 = vmatprep.subr.bf16.mxu0 0
        %755 = vmatpush2.bf16.msra.mxu0 0
        %756 = vmatprep.subr.bf16.mxu0 0
        %757 = vmatpush2.bf16.msra.mxu0 0
        %758 = vmatprep.subr.bf16.mxu0 0
        %759 = vmatpush2.bf16.msra.mxu0 0
        %760 = vmatprep.subr.bf16.mxu0 0
        %761 = vmatpush2.bf16.msra.mxu0 0
        %762 = vmatprep.subr.bf16.mxu0 0
        %763 = vmatpush2.bf16.msra.mxu0 0
        %764 = vmatprep.subr.bf16.mxu0 0
        %765 = vmatpush2.bf16.msra.mxu0 0
        %766 = vmatprep.mubr.bf16.mxu0 0
        %767 = vmatmul.mubr.bf16.gmra.mxu0 %v651
        %v768 = vpop.f32.mrf.mxu0
        %v769 = vadd.f32 0.0, %v768
        %v770 = vpop.f32.mrf.mxu0
        %v771 = vpop.f32.mrf.mxu0
        %v772 = vadd.f32 0.0, %v771
        %v773 = vpop.f32.mrf.mxu0
        %774 = vmatprep.mubr.bf16.mxu0 0
        %775 = vmatmul.mubr.bf16.gmra.mxu0 %v654
        %v776 = vpop.f32.mrf.mxu0
        %v777 = vadd.f32 0.0, %v776
        %v778 = vpop.f32.mrf.mxu0
        %v779 = vpop.f32.mrf.mxu0
        %v780 = vadd.f32 0.0, %v779
        %v781 = vpop.f32.mrf.mxu0
        %782 = vmatprep.mubr.bf16.mxu0 0
        %783 = vmatmul.mubr.bf16.gmra.mxu0 %v657
        %v784 = vpop.f32.mrf.mxu0
        %v785 = vadd.f32 0.0, %v784
        %v786 = vpop.f32.mrf.mxu0
        %v787 = vpop.f32.mrf.mxu0
        %v788 = vadd.f32 0.0, %v787
        %v789 = vpop.f32.mrf.mxu0
        %790 = vmatprep.mubr.bf16.mxu0 0
        %791 = vmatmul.mubr.bf16.gmra.mxu0 %v660
        %v792 = vpop.f32.mrf.mxu0
        %v793 = vadd.f32 0.0, %v792
        %v794 = vpop.f32.mrf.mxu0
        %v795 = vpop.f32.mrf.mxu0
        %v796 = vadd.f32 0.0, %v795
        %v797 = vpop.f32.mrf.mxu0
        %798 = vmatprep.mubr.bf16.mxu0 0
        %799 = vmatmul.mubr.bf16.gmra.mxu0 %v663
        %v800 = vpop.f32.mrf.mxu0
        %v801 = vadd.f32 0.0, %v800
        %v802 = vpop.f32.mrf.mxu0
        %v803 = vpop.f32.mrf.mxu0
        %v804 = vadd.f32 0.0, %v803
        %v805 = vpop.f32.mrf.mxu0
        %806 = vmatprep.mubr.bf16.mxu0 0
        %807 = vmatmul.mubr.bf16.gmra.mxu0 %v666
        %v808 = vpop.f32.mrf.mxu0
        %v809 = vadd.f32 0.0, %v808
        %v810 = vpop.f32.mrf.mxu0
        %v811 = vpop.f32.mrf.mxu0
        %v812 = vadd.f32 0.0, %v811
        %v813 = vpop.f32.mrf.mxu0
        %814 = vmatprep.mubr.bf16.mxu0 0
        %815 = vmatmul.mubr.bf16.gmra.mxu0 %v669
        %v816 = vpop.f32.mrf.mxu0
        %v817 = vadd.f32 0.0, %v816
        %v818 = vpop.f32.mrf.mxu0
        %v819 = vpop.f32.mrf.mxu0
        %v820 = vadd.f32 0.0, %v819
        %v821 = vpop.f32.mrf.mxu0
        %822 = vmatprep.mubr.bf16.mxu0 0
        %823 = vmatmul.mubr.bf16.gmra.mxu0 %v672
        %v824 = vpop.f32.mrf.mxu0
        %v825 = vadd.f32 0.0, %v824
        %v826 = vpop.f32.mrf.mxu0
        %v827 = vpop.f32.mrf.mxu0
        %v828 = vadd.f32 0.0, %v827
        %v829 = vpop.f32.mrf.mxu0
        %830 = vmatprep.mubr.bf16.mxu0 0
        %831 = vmatmul.mubr.bf16.gmra.mxu0 %v675
        %v832 = vpop.f32.mrf.mxu0
        %v833 = vadd.f32 0.0, %v832
        %v834 = vpop.f32.mrf.mxu0
        %v835 = vpop.f32.mrf.mxu0
        %v836 = vadd.f32 0.0, %v835
        %v837 = vpop.f32.mrf.mxu0
        %838 = vmatprep.mubr.bf16.mxu0 0
        %839 = vmatmul.mubr.bf16.gmra.mxu0 %v678
        %v840 = vpop.f32.mrf.mxu0
        %v841 = vadd.f32 0.0, %v840
        %v842 = vpop.f32.mrf.mxu0
        %v843 = vpop.f32.mrf.mxu0
        %v844 = vadd.f32 0.0, %v843
        %v845 = vpop.f32.mrf.mxu0
        %846 = vmatprep.mubr.bf16.mxu0 0
        %847 = vmatmul.mubr.bf16.gmra.mxu0 %v681
        %v848 = vpop.f32.mrf.mxu0
        %v849 = vadd.f32 0.0, %v848
        %v850 = vpop.f32.mrf.mxu0
        %v851 = vpop.f32.mrf.mxu0
        %v852 = vadd.f32 0.0, %v851
        %v853 = vpop.f32.mrf.mxu0
        %854 = vmatprep.mubr.bf16.mxu0 0
        %855 = vmatmul.mubr.bf16.gmra.mxu0 %v684
        %v856 = vpop.f32.mrf.mxu0
        %v857 = vadd.f32 0.0, %v856
        %v858 = vpop.f32.mrf.mxu0
        %v859 = vpop.f32.mrf.mxu0
        %v860 = vadd.f32 0.0, %v859
        %v861 = vpop.f32.mrf.mxu0
        %862 = vmatprep.mubr.bf16.mxu0 0
        %863 = vmatmul.mubr.bf16.gmra.mxu0 %v687
        %v864 = vpop.f32.mrf.mxu0
        %v865 = vadd.f32 0.0, %v864
        %v866 = vpop.f32.mrf.mxu0
        %v867 = vpop.f32.mrf.mxu0
        %v868 = vadd.f32 0.0, %v867
        %v869 = vpop.f32.mrf.mxu0
        %870 = vmatprep.mubr.bf16.mxu0 0
        %871 = vmatmul.mubr.bf16.gmra.mxu0 %v690
        %v872 = vpop.f32.mrf.mxu0
        %v873 = vadd.f32 0.0, %v872
        %v874 = vpop.f32.mrf.mxu0
        %v875 = vpop.f32.mrf.mxu0
        %v876 = vadd.f32 0.0, %v875
        %v877 = vpop.f32.mrf.mxu0
        %878 = vmatprep.mubr.bf16.mxu0 0
        %879 = vmatmul.mubr.bf16.gmra.mxu0 %v693
        %v880 = vpop.f32.mrf.mxu0
        %v881 = vadd.f32 0.0, %v880
        %v882 = vpop.f32.mrf.mxu0
        %v883 = vpop.f32.mrf.mxu0
        %v884 = vadd.f32 0.0, %v883
        %v885 = vpop.f32.mrf.mxu0
        %886 = vmatprep.mubr.bf16.mxu0 0
        %887 = vmatmul.mubr.bf16.gmra.mxu0 %v696
        %v888 = vpop.f32.mrf.mxu0
        %v889 = vadd.f32 0.0, %v888
        %v890 = vpop.f32.mrf.mxu0
        %v891 = vpop.f32.mrf.mxu0
        %v892 = vadd.f32 0.0, %v891
        %v893 = vpop.f32.mrf.mxu0
        %894 = vmatprep.mubr.bf16.mxu0 0
        %895 = vmatmul.mubr.bf16.gmra.mxu0 %v699
        %v896 = vpop.f32.mrf.mxu0
        %v897 = vadd.f32 0.0, %v896
        %v898 = vpop.f32.mrf.mxu0
        %v899 = vpop.f32.mrf.mxu0
        %v900 = vadd.f32 0.0, %v899
        %v901 = vpop.f32.mrf.mxu0
        %902 = vmatprep.mubr.bf16.mxu0 0
        %903 = vmatmul.mubr.bf16.gmra.mxu0 %v702
        %v904 = vpop.f32.mrf.mxu0
        %v905 = vadd.f32 0.0, %v904
        %v906 = vpop.f32.mrf.mxu0
        %v907 = vpop.f32.mrf.mxu0
        %v908 = vadd.f32 0.0, %v907
        %v909 = vpop.f32.mrf.mxu0
        %910 = vmatprep.mubr.bf16.mxu0 0
        %911 = vmatmul.mubr.bf16.gmra.mxu0 %v705
        %v912 = vpop.f32.mrf.mxu0
        %v913 = vadd.f32 0.0, %v912
        %v914 = vpop.f32.mrf.mxu0
        %v915 = vpop.f32.mrf.mxu0
        %v916 = vadd.f32 0.0, %v915
        %v917 = vpop.f32.mrf.mxu0
        %918 = vmatprep.mubr.bf16.mxu0 0
        %919 = vmatmul.mubr.bf16.gmra.mxu0 %v708
        %v920 = vpop.f32.mrf.mxu0
        %v921 = vadd.f32 0.0, %v920
        %v922 = vpop.f32.mrf.mxu0
        %v923 = vpop.f32.mrf.mxu0
        %v924 = vadd.f32 0.0, %v923
        %v925 = vpop.f32.mrf.mxu0
        %926 = vmatprep.mubr.bf16.mxu0 0
        %927 = vmatmul.mubr.bf16.gmra.mxu0 %v711
        %v928 = vpop.f32.mrf.mxu0
        %v929 = vadd.f32 0.0, %v928
        %v930 = vpop.f32.mrf.mxu0
        %v931 = vpop.f32.mrf.mxu0
        %v932 = vadd.f32 0.0, %v931
        %v933 = vpop.f32.mrf.mxu0
        %934 = vmatprep.mubr.bf16.mxu0 0
        %935 = vmatmul.mubr.bf16.gmra.mxu0 %v714
        %v936 = vpop.f32.mrf.mxu0
        %v937 = vadd.f32 0.0, %v936
        %v938 = vpop.f32.mrf.mxu0
        %v939 = vpop.f32.mrf.mxu0
        %v940 = vadd.f32 0.0, %v939
        %v941 = vpop.f32.mrf.mxu0
        %942 = vmatprep.mubr.bf16.mxu0 0
        %943 = vmatmul.mubr.bf16.gmra.mxu0 %v717
        %v944 = vpop.f32.mrf.mxu0
        %v945 = vadd.f32 0.0, %v944
        %v946 = vpop.f32.mrf.mxu0
        %v947 = vpop.f32.mrf.mxu0
        %v948 = vadd.f32 0.0, %v947
        %v949 = vpop.f32.mrf.mxu0
        %950 = vmatprep.mubr.bf16.mxu0 0
        %951 = vmatmul.mubr.bf16.gmra.mxu0 %v720
        %v952 = vpop.f32.mrf.mxu0
        %v953 = vadd.f32 0.0, %v952
        %v954 = vpop.f32.mrf.mxu0
        %v955 = vpop.f32.mrf.mxu0
        %v956 = vadd.f32 0.0, %v955
        %v957 = vpop.f32.mrf.mxu0
        %958 = vmatprep.mubr.bf16.mxu0 0
        %959 = vmatmul.mubr.bf16.gmra.mxu0 %v723
        %v960 = vpop.f32.mrf.mxu0
        %v961 = vadd.f32 0.0, %v960
        %v962 = vpop.f32.mrf.mxu0
        %v963 = vpop.f32.mrf.mxu0
        %v964 = vadd.f32 0.0, %v963
        %v965 = vpop.f32.mrf.mxu0
        %966 = vmatprep.mubr.bf16.mxu0 0
        %967 = vmatmul.mubr.bf16.gmra.mxu0 %v726
        %v968 = vpop.f32.mrf.mxu0
        %v969 = vadd.f32 0.0, %v968
        %v970 = vpop.f32.mrf.mxu0
        %v971 = vpop.f32.mrf.mxu0
        %v972 = vadd.f32 0.0, %v971
        %v973 = vpop.f32.mrf.mxu0
        %974 = vmatprep.mubr.bf16.mxu0 0
        %975 = vmatmul.mubr.bf16.gmra.mxu0 %v729
        %v976 = vpop.f32.mrf.mxu0
        %v977 = vadd.f32 0.0, %v976
        %v978 = vpop.f32.mrf.mxu0
        %v979 = vpop.f32.mrf.mxu0
        %v980 = vadd.f32 0.0, %v979
        %v981 = vpop.f32.mrf.mxu0
        %982 = vmatprep.mubr.bf16.mxu0 0
        %983 = vmatmul.mubr.bf16.gmra.mxu0 %v732
        %v984 = vpop.f32.mrf.mxu0
        %v985 = vadd.f32 0.0, %v984
        %v986 = vpop.f32.mrf.mxu0
        %v987 = vpop.f32.mrf.mxu0
        %v988 = vpop.f32.mrf.mxu0
        %989 = vdwg.mxu0
        %v990 = vpack.c.b16 %v383, %v383
        %v995 = vunpack.c.l.b16 %v263
        %v996 = vunpack.c.l.b16 %v264
        %v997 = vunpack.c.l.b16 %v265
        %v998 = vunpack.c.l.b16 %v266
        %v999 = vpack.c.b16 %v996, %v995
        %v1000 = vpack.c.b16 %v998, %v997
        %v1003 = vsel %vm649, %v385, 0
        %v1005 = vsel %vm649, %v386, 0
        %v1007 = vsel %vm649, %v387, 0
        %v1009 = vsel %vm649, %v388, 0
        %v1011 = vsel %vm649, %v389, 0
        %v1013 = vsel %vm649, %v390, 0
        %v1015 = vsel %vm649, %v391, 0
        %v1017 = vsel %vm649, %v392, 0
        %v1019 = vsel %vm649, %v393, 0
        %v1021 = vsel %vm649, %v394, 0
        %v1023 = vsel %vm649, %v395, 0
        %v1025 = vsel %vm649, %v396, 0
        %v1027 = vsel %vm649, %v397, 0
        %v1029 = vsel %vm649, %v398, 0
        %v1031 = vsel %vm649, %v399, 0
        %v1033 = vsel %vm649, %v400, 0
        %v1035 = vsel %vm649, %v401, 0
        %v1037 = vsel %vm649, %v402, 0
        %v1039 = vsel %vm649, %v403, 0
        %v1041 = vsel %vm649, %v404, 0
        %v1043 = vsel %vm649, %v405, 0
        %v1045 = vsel %vm649, %v406, 0
        %v1047 = vsel %vm649, %v407, 0
        %v1049 = vsel %vm649, %v408, 0
        %v1051 = vsel %vm649, %v409, 0
        %v1053 = vsel %vm649, %v410, 0
        %v1055 = vsel %vm649, %v411, 0
        %v1058 = vsel %vm649, %v990, 0
        %1060 = vmatprep.subr.bf16.mxu0 0
        %1061 = vmatpush1.bf16.msra.mxu0 0
        %1062 = vmatprep.subr.bf16.mxu0 0
        %1063 = vmatpush1.bf16.msra.mxu0 0
        %1064 = vmatprep.subr.bf16.mxu0 0
        %1065 = vmatpush1.bf16.msra.mxu0 0
        %1066 = vmatprep.subr.bf16.mxu0 0
        %1067 = vmatpush1.bf16.msra.mxu0 0
        %1068 = vmatprep.subr.bf16.mxu0 0
        %1069 = vmatpush1.bf16.msra.mxu0 0
        %1070 = vmatprep.subr.bf16.mxu0 0
        %1071 = vmatpush1.bf16.msra.mxu0 0
        %1072 = vmatprep.subr.bf16.mxu0 0
        %1073 = vmatpush1.bf16.msra.mxu0 %v1000
        %1074 = vmatprep.subr.bf16.mxu0 0
        %1075 = vmatpush1.bf16.msra.mxu0 %v999
        %1076 = vmatprep.subr.bf16.mxu0 0
        %1077 = vmatpush2.bf16.msra.mxu0 0
        %1078 = vmatprep.subr.bf16.mxu0 0
        %1079 = vmatpush2.bf16.msra.mxu0 0
        %1080 = vmatprep.subr.bf16.mxu0 0
        %1081 = vmatpush2.bf16.msra.mxu0 0
        %1082 = vmatprep.subr.bf16.mxu0 0
        %1083 = vmatpush2.bf16.msra.mxu0 0
        %1084 = vmatprep.subr.bf16.mxu0 0
        %1085 = vmatpush2.bf16.msra.mxu0 0
        %1086 = vmatprep.subr.bf16.mxu0 0
        %1087 = vmatpush2.bf16.msra.mxu0 0
        %1088 = vmatprep.subr.bf16.mxu0 0
        %1089 = vmatpush2.bf16.msra.mxu0 0
        %1090 = vmatprep.subr.bf16.mxu0 0
        %1091 = vmatpush2.bf16.msra.mxu0 0
        %1092 = vmatprep.mubr.bf16.mxu0 0
        %1093 = vmatmul.mubr.bf16.gmra.mxu0 %v1003
        %v1094 = vpop.f32.mrf.mxu0
        %v1095 = vadd.f32 %v769, %v1094
        %v1096 = vpop.f32.mrf.mxu0
        %v1097 = vpop.f32.mrf.mxu0
        %v1098 = vadd.f32 %v772, %v1097
        %v1099 = vpop.f32.mrf.mxu0
        %1100 = vmatprep.mubr.bf16.mxu0 0
        %1101 = vmatmul.mubr.bf16.gmra.mxu0 %v1005
        %v1102 = vpop.f32.mrf.mxu0
        %v1103 = vadd.f32 %v777, %v1102
        %v1104 = vpop.f32.mrf.mxu0
        %v1105 = vpop.f32.mrf.mxu0
        %v1106 = vadd.f32 %v780, %v1105
        %v1107 = vpop.f32.mrf.mxu0
        %1108 = vmatprep.mubr.bf16.mxu0 0
        %1109 = vmatmul.mubr.bf16.gmra.mxu0 %v1007
        %v1110 = vpop.f32.mrf.mxu0
        %v1111 = vadd.f32 %v785, %v1110
        %v1112 = vpop.f32.mrf.mxu0
        %v1113 = vpop.f32.mrf.mxu0
        %v1114 = vadd.f32 %v788, %v1113
        %v1115 = vpop.f32.mrf.mxu0
        %1116 = vmatprep.mubr.bf16.mxu0 0
        %1117 = vmatmul.mubr.bf16.gmra.mxu0 %v1009
        %v1118 = vpop.f32.mrf.mxu0
        %v1119 = vadd.f32 %v793, %v1118
        %v1120 = vpop.f32.mrf.mxu0
        %v1121 = vpop.f32.mrf.mxu0
        %v1122 = vadd.f32 %v796, %v1121
        %v1123 = vpop.f32.mrf.mxu0
        %1124 = vmatprep.mubr.bf16.mxu0 0
        %1125 = vmatmul.mubr.bf16.gmra.mxu0 %v1011
        %v1126 = vpop.f32.mrf.mxu0
        %v1127 = vadd.f32 %v801, %v1126
        %v1128 = vpop.f32.mrf.mxu0
        %v1129 = vpop.f32.mrf.mxu0
        %v1130 = vadd.f32 %v804, %v1129
        %v1131 = vpop.f32.mrf.mxu0
        %1132 = vmatprep.mubr.bf16.mxu0 0
        %1133 = vmatmul.mubr.bf16.gmra.mxu0 %v1013
        %v1134 = vpop.f32.mrf.mxu0
        %v1135 = vadd.f32 %v809, %v1134
        %v1136 = vpop.f32.mrf.mxu0
        %v1137 = vpop.f32.mrf.mxu0
        %v1138 = vadd.f32 %v812, %v1137
        %v1139 = vpop.f32.mrf.mxu0
        %1140 = vmatprep.mubr.bf16.mxu0 0
        %1141 = vmatmul.mubr.bf16.gmra.mxu0 %v1015
        %v1142 = vpop.f32.mrf.mxu0
        %v1143 = vadd.f32 %v817, %v1142
        %v1144 = vpop.f32.mrf.mxu0
        %v1145 = vpop.f32.mrf.mxu0
        %v1146 = vadd.f32 %v820, %v1145
        %v1147 = vpop.f32.mrf.mxu0
        %1148 = vmatprep.mubr.bf16.mxu0 0
        %1149 = vmatmul.mubr.bf16.gmra.mxu0 %v1017
        %v1150 = vpop.f32.mrf.mxu0
        %v1151 = vadd.f32 %v825, %v1150
        %v1152 = vpop.f32.mrf.mxu0
        %v1153 = vpop.f32.mrf.mxu0
        %v1154 = vadd.f32 %v828, %v1153
        %v1155 = vpop.f32.mrf.mxu0
        %1156 = vmatprep.mubr.bf16.mxu0 0
        %1157 = vmatmul.mubr.bf16.gmra.mxu0 %v1019
        %v1158 = vpop.f32.mrf.mxu0
        %v1159 = vadd.f32 %v833, %v1158
        %v1160 = vpop.f32.mrf.mxu0
        %v1161 = vpop.f32.mrf.mxu0
        %v1162 = vadd.f32 %v836, %v1161
        %v1163 = vpop.f32.mrf.mxu0
        %1164 = vmatprep.mubr.bf16.mxu0 0
        %1165 = vmatmul.mubr.bf16.gmra.mxu0 %v1021
        %v1166 = vpop.f32.mrf.mxu0
        %v1167 = vadd.f32 %v841, %v1166
        %v1168 = vpop.f32.mrf.mxu0
        %v1169 = vpop.f32.mrf.mxu0
        %v1170 = vadd.f32 %v844, %v1169
        %v1171 = vpop.f32.mrf.mxu0
        %1172 = vmatprep.mubr.bf16.mxu0 0
        %1173 = vmatmul.mubr.bf16.gmra.mxu0 %v1023
        %v1174 = vpop.f32.mrf.mxu0
        %v1175 = vadd.f32 %v849, %v1174
        %v1176 = vpop.f32.mrf.mxu0
        %v1177 = vpop.f32.mrf.mxu0
        %v1178 = vadd.f32 %v852, %v1177
        %v1179 = vpop.f32.mrf.mxu0
        %1180 = vmatprep.mubr.bf16.mxu0 0
        %1181 = vmatmul.mubr.bf16.gmra.mxu0 %v1025
        %v1182 = vpop.f32.mrf.mxu0
        %v1183 = vadd.f32 %v857, %v1182
        %v1184 = vpop.f32.mrf.mxu0
        %v1185 = vpop.f32.mrf.mxu0
        %v1186 = vadd.f32 %v860, %v1185
        %v1187 = vpop.f32.mrf.mxu0
        %1188 = vmatprep.mubr.bf16.mxu0 0
        %1189 = vmatmul.mubr.bf16.gmra.mxu0 %v1027
        %v1190 = vpop.f32.mrf.mxu0
        %v1191 = vadd.f32 %v865, %v1190
        %v1192 = vpop.f32.mrf.mxu0
        %v1193 = vpop.f32.mrf.mxu0
        %v1194 = vadd.f32 %v868, %v1193
        %v1195 = vpop.f32.mrf.mxu0
        %1196 = vmatprep.mubr.bf16.mxu0 0
        %1197 = vmatmul.mubr.bf16.gmra.mxu0 %v1029
        %v1198 = vpop.f32.mrf.mxu0
        %v1199 = vadd.f32 %v873, %v1198
        %v1200 = vpop.f32.mrf.mxu0
        %v1201 = vpop.f32.mrf.mxu0
        %v1202 = vadd.f32 %v876, %v1201
        %v1203 = vpop.f32.mrf.mxu0
        %1204 = vmatprep.mubr.bf16.mxu0 0
        %1205 = vmatmul.mubr.bf16.gmra.mxu0 %v1031
        %v1206 = vpop.f32.mrf.mxu0
        %v1207 = vadd.f32 %v881, %v1206
        %v1208 = vpop.f32.mrf.mxu0
        %v1209 = vpop.f32.mrf.mxu0
        %v1210 = vadd.f32 %v884, %v1209
        %v1211 = vpop.f32.mrf.mxu0
        %1212 = vmatprep.mubr.bf16.mxu0 0
        %1213 = vmatmul.mubr.bf16.gmra.mxu0 %v1033
        %v1214 = vpop.f32.mrf.mxu0
        %v1215 = vadd.f32 %v889, %v1214
        %v1216 = vpop.f32.mrf.mxu0
        %v1217 = vpop.f32.mrf.mxu0
        %v1218 = vadd.f32 %v892, %v1217
        %v1219 = vpop.f32.mrf.mxu0
        %1220 = vmatprep.mubr.bf16.mxu0 0
        %1221 = vmatmul.mubr.bf16.gmra.mxu0 %v1035
        %v1222 = vpop.f32.mrf.mxu0
        %v1223 = vadd.f32 %v897, %v1222
        %v1224 = vpop.f32.mrf.mxu0
        %v1225 = vpop.f32.mrf.mxu0
        %v1226 = vadd.f32 %v900, %v1225
        %v1227 = vpop.f32.mrf.mxu0
        %1228 = vmatprep.mubr.bf16.mxu0 0
        %1229 = vmatmul.mubr.bf16.gmra.mxu0 %v1037
        %v1230 = vpop.f32.mrf.mxu0
        %v1231 = vadd.f32 %v905, %v1230
        %v1232 = vpop.f32.mrf.mxu0
        %v1233 = vpop.f32.mrf.mxu0
        %v1234 = vadd.f32 %v908, %v1233
        %v1235 = vpop.f32.mrf.mxu0
        %1236 = vmatprep.mubr.bf16.mxu0 0
        %1237 = vmatmul.mubr.bf16.gmra.mxu0 %v1039
        %v1238 = vpop.f32.mrf.mxu0
        %v1239 = vadd.f32 %v913, %v1238
        %v1240 = vpop.f32.mrf.mxu0
        %v1241 = vpop.f32.mrf.mxu0
        %v1242 = vadd.f32 %v916, %v1241
        %v1243 = vpop.f32.mrf.mxu0
        %1244 = vmatprep.mubr.bf16.mxu0 0
        %1245 = vmatmul.mubr.bf16.gmra.mxu0 %v1041
        %v1246 = vpop.f32.mrf.mxu0
        %v1247 = vadd.f32 %v921, %v1246
        %v1248 = vpop.f32.mrf.mxu0
        %v1249 = vpop.f32.mrf.mxu0
        %v1250 = vadd.f32 %v924, %v1249
        %v1251 = vpop.f32.mrf.mxu0
        %1252 = vmatprep.mubr.bf16.mxu0 0
        %1253 = vmatmul.mubr.bf16.gmra.mxu0 %v1043
        %v1254 = vpop.f32.mrf.mxu0
        %v1255 = vadd.f32 %v929, %v1254
        %v1256 = vpop.f32.mrf.mxu0
        %v1257 = vpop.f32.mrf.mxu0
        %v1258 = vadd.f32 %v932, %v1257
        %v1259 = vpop.f32.mrf.mxu0
        %1260 = vmatprep.mubr.bf16.mxu0 0
        %1261 = vmatmul.mubr.bf16.gmra.mxu0 %v1045
        %v1262 = vpop.f32.mrf.mxu0
        %v1263 = vadd.f32 %v937, %v1262
        %v1264 = vpop.f32.mrf.mxu0
        %v1265 = vpop.f32.mrf.mxu0
        %v1266 = vadd.f32 %v940, %v1265
        %v1267 = vpop.f32.mrf.mxu0
        %1268 = vmatprep.mubr.bf16.mxu0 0
        %1269 = vmatmul.mubr.bf16.gmra.mxu0 %v1047
        %v1270 = vpop.f32.mrf.mxu0
        %v1271 = vadd.f32 %v945, %v1270
        %v1272 = vpop.f32.mrf.mxu0
        %v1273 = vpop.f32.mrf.mxu0
        %v1274 = vadd.f32 %v948, %v1273
        %v1275 = vpop.f32.mrf.mxu0
        %1276 = vmatprep.mubr.bf16.mxu0 0
        %1277 = vmatmul.mubr.bf16.gmra.mxu0 %v1049
        %v1278 = vpop.f32.mrf.mxu0
        %v1279 = vadd.f32 %v953, %v1278
        %v1280 = vpop.f32.mrf.mxu0
        %v1281 = vpop.f32.mrf.mxu0
        %v1282 = vadd.f32 %v956, %v1281
        %v1283 = vpop.f32.mrf.mxu0
        %1284 = vmatprep.mubr.bf16.mxu0 0
        %1285 = vmatmul.mubr.bf16.gmra.mxu0 %v1051
        %v1286 = vpop.f32.mrf.mxu0
        %v1287 = vadd.f32 %v961, %v1286
        %v1288 = vpop.f32.mrf.mxu0
        %v1289 = vpop.f32.mrf.mxu0
        %v1290 = vadd.f32 %v964, %v1289
        %v1291 = vpop.f32.mrf.mxu0
        %1292 = vmatprep.mubr.bf16.mxu0 0
        %1293 = vmatmul.mubr.bf16.gmra.mxu0 %v1053
        %v1294 = vpop.f32.mrf.mxu0
        %v1295 = vadd.f32 %v969, %v1294
        %v1296 = vpop.f32.mrf.mxu0
        %v1297 = vpop.f32.mrf.mxu0
        %v1298 = vadd.f32 %v972, %v1297
        %v1299 = vpop.f32.mrf.mxu0
        %1300 = vmatprep.mubr.bf16.mxu0 0
        %1301 = vmatmul.mubr.bf16.gmra.mxu0 %v1055
        %v1302 = vpop.f32.mrf.mxu0
        %v1303 = vadd.f32 %v977, %v1302
        %v1304 = vpop.f32.mrf.mxu0
        %v1305 = vpop.f32.mrf.mxu0
        %v1306 = vadd.f32 %v980, %v1305
        %v1307 = vpop.f32.mrf.mxu0
        %1308 = vmatprep.mubr.bf16.mxu0 0
        %1309 = vmatmul.mubr.bf16.gmra.mxu0 %v1058
        %v1310 = vpop.f32.mrf.mxu0
        %v1311 = vadd.f32 %v985, %v1310
        %v1312 = vpop.f32.mrf.mxu0
        %v1313 = vpop.f32.mrf.mxu0
        %v1314 = vpop.f32.mrf.mxu0
        %1315 = vdwg.mxu0
        %v1316 = vld [vmem:[%s206] sm:$0xe]
        %s1317 = scalar_lea.vmem %s1, 32
        %v1318 = vld [vmem:[%s1317] sm:$0xf]
        %v1319 = vld [vmem:[%s1317 + $0x4] sm:$0xf]
        %v1320 = vld [vmem:[%s1317 + $0x8] sm:$0xf]
        %v1321 = vld [vmem:[%s1317 + $0xc] sm:$0xf]
        %v1323 = vunpack.c.l.b16 %v1316
        %v1324 = vpack.c.b16 %v330, %v1323
        %vm1325 = vcmask 1046528
        %v1326 = vrot.slane %v1324, 1
        %v1327 = vrot.slane %v386, 1
        %v1328 = vsel %vm1325, %v1326, %v1327
        %v1329 = vrot.slane %v387, 1
        %v1330 = vsel %vm1325, %v1327, %v1329
        %v1331 = vrot.slane %v388, 1
        %v1332 = vsel %vm1325, %v1329, %v1331
        %v1333 = vrot.slane %v389, 1
        %v1334 = vsel %vm1325, %v1331, %v1333
        %v1335 = vrot.slane %v390, 1
        %v1336 = vsel %vm1325, %v1333, %v1335
        %v1337 = vrot.slane %v391, 1
        %v1338 = vsel %vm1325, %v1335, %v1337
        %v1339 = vrot.slane %v392, 1
        %v1340 = vsel %vm1325, %v1337, %v1339
        %v1341 = vrot.slane %v393, 1
        %v1342 = vsel %vm1325, %v1339, %v1341
        %v1343 = vrot.slane %v394, 1
        %v1344 = vsel %vm1325, %v1341, %v1343
        %v1345 = vrot.slane %v395, 1
        %v1346 = vsel %vm1325, %v1343, %v1345
        %v1347 = vrot.slane %v396, 1
        %v1348 = vsel %vm1325, %v1345, %v1347
        %v1349 = vrot.slane %v397, 1
        %v1350 = vsel %vm1325, %v1347, %v1349
        %v1351 = vrot.slane %v398, 1
        %v1352 = vsel %vm1325, %v1349, %v1351
        %v1353 = vrot.slane %v399, 1
        %v1354 = vsel %vm1325, %v1351, %v1353
        %v1355 = vrot.slane %v400, 1
        %v1356 = vsel %vm1325, %v1353, %v1355
        %v1357 = vrot.slane %v401, 1
        %v1358 = vsel %vm1325, %v1355, %v1357
        %v1359 = vrot.slane %v402, 1
        %v1360 = vsel %vm1325, %v1357, %v1359
        %v1361 = vrot.slane %v403, 1
        %v1362 = vsel %vm1325, %v1359, %v1361
        %v1363 = vrot.slane %v404, 1
        %v1364 = vsel %vm1325, %v1361, %v1363
        %v1365 = vrot.slane %v405, 1
        %v1366 = vsel %vm1325, %v1363, %v1365
        %v1367 = vrot.slane %v406, 1
        %v1368 = vsel %vm1325, %v1365, %v1367
        %v1369 = vrot.slane %v407, 1
        %v1370 = vsel %vm1325, %v1367, %v1369
        %v1371 = vrot.slane %v408, 1
        %v1372 = vsel %vm1325, %v1369, %v1371
        %v1373 = vrot.slane %v409, 1
        %v1374 = vsel %vm1325, %v1371, %v1373
        %v1375 = vrot.slane %v410, 1
        %v1376 = vsel %vm1325, %v1373, %v1375
        %v1377 = vrot.slane %v411, 1
        %v1378 = vsel %vm1325, %v1375, %v1377
        %v1379 = vrot.slane %v412, 1
        %v1380 = vsel %vm1325, %v1377, %v1379
        %v1385 = vunpack.c.l.b16 %v1318
        %v1386 = vunpack.c.l.b16 %v1319
        %v1387 = vunpack.c.l.b16 %v1320
        %v1388 = vunpack.c.l.b16 %v1321
        %v1389 = vpack.c.b16 %v1386, %v1385
        %v1390 = vpack.c.b16 %v1388, %v1387
        %v1394 = vsel %vm649, %v1328, 0
        %v1397 = vsel %vm649, %v1330, 0
        %v1400 = vsel %vm649, %v1332, 0
        %v1403 = vsel %vm649, %v1334, 0
        %v1406 = vsel %vm649, %v1336, 0
        %v1409 = vsel %vm649, %v1338, 0
        %v1412 = vsel %vm649, %v1340, 0
        %v1415 = vsel %vm649, %v1342, 0
        %v1418 = vsel %vm649, %v1344, 0
        %v1421 = vsel %vm649, %v1346, 0
        %v1424 = vsel %vm649, %v1348, 0
        %v1427 = vsel %vm649, %v1350, 0
        %v1430 = vsel %vm649, %v1352, 0
        %v1433 = vsel %vm649, %v1354, 0
        %v1436 = vsel %vm649, %v1356, 0
        %v1439 = vsel %vm649, %v1358, 0
        %v1442 = vsel %vm649, %v1360, 0
        %v1445 = vsel %vm649, %v1362, 0
        %v1448 = vsel %vm649, %v1364, 0
        %v1451 = vsel %vm649, %v1366, 0
        %v1454 = vsel %vm649, %v1368, 0
        %v1457 = vsel %vm649, %v1370, 0
        %v1460 = vsel %vm649, %v1372, 0
        %v1463 = vsel %vm649, %v1374, 0
        %v1466 = vsel %vm649, %v1376, 0
        %v1469 = vsel %vm649, %v1378, 0
        %v1472 = vsel %vm649, %v1380, 0
        %v1475 = vsel %vm649, %v1379, 0
        %1477 = vmatprep.subr.bf16.mxu0 0
        %1478 = vmatpush1.bf16.msra.mxu0 0
        %1479 = vmatprep.subr.bf16.mxu0 0
        %1480 = vmatpush1.bf16.msra.mxu0 0
        %1481 = vmatprep.subr.bf16.mxu0 0
        %1482 = vmatpush1.bf16.msra.mxu0 0
        %1483 = vmatprep.subr.bf16.mxu0 0
        %1484 = vmatpush1.bf16.msra.mxu0 0
        %1485 = vmatprep.subr.bf16.mxu0 0
        %1486 = vmatpush1.bf16.msra.mxu0 0
        %1487 = vmatprep.subr.bf16.mxu0 0
        %1488 = vmatpush1.bf16.msra.mxu0 0
        %1489 = vmatprep.subr.bf16.mxu0 0
        %1490 = vmatpush1.bf16.msra.mxu0 %v1390
        %1491 = vmatprep.subr.bf16.mxu0 0
        %1492 = vmatpush1.bf16.msra.mxu0 %v1389
        %1493 = vmatprep.subr.bf16.mxu0 0
        %1494 = vmatpush2.bf16.msra.mxu0 0
        %1495 = vmatprep.subr.bf16.mxu0 0
        %1496 = vmatpush2.bf16.msra.mxu0 0
        %1497 = vmatprep.subr.bf16.mxu0 0
        %1498 = vmatpush2.bf16.msra.mxu0 0
        %1499 = vmatprep.subr.bf16.mxu0 0
        %1500 = vmatpush2.bf16.msra.mxu0 0
        %1501 = vmatprep.subr.bf16.mxu0 0
        %1502 = vmatpush2.bf16.msra.mxu0 0
        %1503 = vmatprep.subr.bf16.mxu0 0
        %1504 = vmatpush2.bf16.msra.mxu0 0
        %1505 = vmatprep.subr.bf16.mxu0 0
        %1506 = vmatpush2.bf16.msra.mxu0 0
        %1507 = vmatprep.subr.bf16.mxu0 0
        %1508 = vmatpush2.bf16.msra.mxu0 0
        %1509 = vmatprep.mubr.bf16.mxu0 0
        %1510 = vmatmul.mubr.bf16.gmra.mxu0 %v1394
        %v1511 = vpop.f32.mrf.mxu0
        %v1512 = vadd.f32 0.0, %v1511
        %v1513 = vpop.f32.mrf.mxu0
        %v1514 = vpop.f32.mrf.mxu0
        %v1515 = vadd.f32 0.0, %v1514
        %v1516 = vpop.f32.mrf.mxu0
        %1517 = vmatprep.mubr.bf16.mxu0 0
        %1518 = vmatmul.mubr.bf16.gmra.mxu0 %v1397
        %v1519 = vpop.f32.mrf.mxu0
        %v1520 = vadd.f32 0.0, %v1519
        %v1521 = vpop.f32.mrf.mxu0
        %v1522 = vpop.f32.mrf.mxu0
        %v1523 = vadd.f32 0.0, %v1522
        %v1524 = vpop.f32.mrf.mxu0
        %1525 = vmatprep.mubr.bf16.mxu0 0
        %1526 = vmatmul.mubr.bf16.gmra.mxu0 %v1400
        %v1527 = vpop.f32.mrf.mxu0
        %v1528 = vadd.f32 0.0, %v1527
        %v1529 = vpop.f32.mrf.mxu0
        %v1530 = vpop.f32.mrf.mxu0
        %v1531 = vadd.f32 0.0, %v1530
        %v1532 = vpop.f32.mrf.mxu0
        %1533 = vmatprep.mubr.bf16.mxu0 0
        %1534 = vmatmul.mubr.bf16.gmra.mxu0 %v1403
        %v1535 = vpop.f32.mrf.mxu0
        %v1536 = vadd.f32 0.0, %v1535
        %v1537 = vpop.f32.mrf.mxu0
        %v1538 = vpop.f32.mrf.mxu0
        %v1539 = vadd.f32 0.0, %v1538
        %v1540 = vpop.f32.mrf.mxu0
        %1541 = vmatprep.mubr.bf16.mxu0 0
        %1542 = vmatmul.mubr.bf16.gmra.mxu0 %v1406
        %v1543 = vpop.f32.mrf.mxu0
        %v1544 = vadd.f32 0.0, %v1543
        %v1545 = vpop.f32.mrf.mxu0
        %v1546 = vpop.f32.mrf.mxu0
        %v1547 = vadd.f32 0.0, %v1546
        %v1548 = vpop.f32.mrf.mxu0
        %1549 = vmatprep.mubr.bf16.mxu0 0
        %1550 = vmatmul.mubr.bf16.gmra.mxu0 %v1409
        %v1551 = vpop.f32.mrf.mxu0
        %v1552 = vadd.f32 0.0, %v1551
        %v1553 = vpop.f32.mrf.mxu0
        %v1554 = vpop.f32.mrf.mxu0
        %v1555 = vadd.f32 0.0, %v1554
        %v1556 = vpop.f32.mrf.mxu0
        %1557 = vmatprep.mubr.bf16.mxu0 0
        %1558 = vmatmul.mubr.bf16.gmra.mxu0 %v1412
        %v1559 = vpop.f32.mrf.mxu0
        %v1560 = vadd.f32 0.0, %v1559
        %v1561 = vpop.f32.mrf.mxu0
        %v1562 = vpop.f32.mrf.mxu0
        %v1563 = vadd.f32 0.0, %v1562
        %v1564 = vpop.f32.mrf.mxu0
        %1565 = vmatprep.mubr.bf16.mxu0 0
        %1566 = vmatmul.mubr.bf16.gmra.mxu0 %v1415
        %v1567 = vpop.f32.mrf.mxu0
        %v1568 = vadd.f32 0.0, %v1567
        %v1569 = vpop.f32.mrf.mxu0
        %v1570 = vpop.f32.mrf.mxu0
        %v1571 = vadd.f32 0.0, %v1570
        %v1572 = vpop.f32.mrf.mxu0
        %1573 = vmatprep.mubr.bf16.mxu0 0
        %1574 = vmatmul.mubr.bf16.gmra.mxu0 %v1418
        %v1575 = vpop.f32.mrf.mxu0
        %v1576 = vadd.f32 0.0, %v1575
        %v1577 = vpop.f32.mrf.mxu0
        %v1578 = vpop.f32.mrf.mxu0
        %v1579 = vadd.f32 0.0, %v1578
        %v1580 = vpop.f32.mrf.mxu0
        %1581 = vmatprep.mubr.bf16.mxu0 0
        %1582 = vmatmul.mubr.bf16.gmra.mxu0 %v1421
        %v1583 = vpop.f32.mrf.mxu0
        %v1584 = vadd.f32 0.0, %v1583
        %v1585 = vpop.f32.mrf.mxu0
        %v1586 = vpop.f32.mrf.mxu0
        %v1587 = vadd.f32 0.0, %v1586
        %v1588 = vpop.f32.mrf.mxu0
        %1589 = vmatprep.mubr.bf16.mxu0 0
        %1590 = vmatmul.mubr.bf16.gmra.mxu0 %v1424
        %v1591 = vpop.f32.mrf.mxu0
        %v1592 = vadd.f32 0.0, %v1591
        %v1593 = vpop.f32.mrf.mxu0
        %v1594 = vpop.f32.mrf.mxu0
        %v1595 = vadd.f32 0.0, %v1594
        %v1596 = vpop.f32.mrf.mxu0
        %1597 = vmatprep.mubr.bf16.mxu0 0
        %1598 = vmatmul.mubr.bf16.gmra.mxu0 %v1427
        %v1599 = vpop.f32.mrf.mxu0
        %v1600 = vadd.f32 0.0, %v1599
        %v1601 = vpop.f32.mrf.mxu0
        %v1602 = vpop.f32.mrf.mxu0
        %v1603 = vadd.f32 0.0, %v1602
        %v1604 = vpop.f32.mrf.mxu0
        %1605 = vmatprep.mubr.bf16.mxu0 0
        %1606 = vmatmul.mubr.bf16.gmra.mxu0 %v1430
        %v1607 = vpop.f32.mrf.mxu0
        %v1608 = vadd.f32 0.0, %v1607
        %v1609 = vpop.f32.mrf.mxu0
        %v1610 = vpop.f32.mrf.mxu0
        %v1611 = vadd.f32 0.0, %v1610
        %v1612 = vpop.f32.mrf.mxu0
        %1613 = vmatprep.mubr.bf16.mxu0 0
        %1614 = vmatmul.mubr.bf16.gmra.mxu0 %v1433
        %v1615 = vpop.f32.mrf.mxu0
        %v1616 = vadd.f32 0.0, %v1615
        %v1617 = vpop.f32.mrf.mxu0
        %v1618 = vpop.f32.mrf.mxu0
        %v1619 = vadd.f32 0.0, %v1618
        %v1620 = vpop.f32.mrf.mxu0
        %1621 = vmatprep.mubr.bf16.mxu0 0
        %1622 = vmatmul.mubr.bf16.gmra.mxu0 %v1436
        %v1623 = vpop.f32.mrf.mxu0
        %v1624 = vadd.f32 0.0, %v1623
        %v1625 = vpop.f32.mrf.mxu0
        %v1626 = vpop.f32.mrf.mxu0
        %v1627 = vadd.f32 0.0, %v1626
        %v1628 = vpop.f32.mrf.mxu0
        %1629 = vmatprep.mubr.bf16.mxu0 0
        %1630 = vmatmul.mubr.bf16.gmra.mxu0 %v1439
        %v1631 = vpop.f32.mrf.mxu0
        %v1632 = vadd.f32 0.0, %v1631
        %v1633 = vpop.f32.mrf.mxu0
        %v1634 = vpop.f32.mrf.mxu0
        %v1635 = vadd.f32 0.0, %v1634
        %v1636 = vpop.f32.mrf.mxu0
        %1637 = vmatprep.mubr.bf16.mxu0 0
        %1638 = vmatmul.mubr.bf16.gmra.mxu0 %v1442
        %v1639 = vpop.f32.mrf.mxu0
        %v1640 = vadd.f32 0.0, %v1639
        %v1641 = vpop.f32.mrf.mxu0
        %v1642 = vpop.f32.mrf.mxu0
        %v1643 = vadd.f32 0.0, %v1642
        %v1644 = vpop.f32.mrf.mxu0
        %1645 = vmatprep.mubr.bf16.mxu0 0
        %1646 = vmatmul.mubr.bf16.gmra.mxu0 %v1445
        %v1647 = vpop.f32.mrf.mxu0
        %v1648 = vadd.f32 0.0, %v1647
        %v1649 = vpop.f32.mrf.mxu0
        %v1650 = vpop.f32.mrf.mxu0
        %v1651 = vadd.f32 0.0, %v1650
        %v1652 = vpop.f32.mrf.mxu0
        %1653 = vmatprep.mubr.bf16.mxu0 0
        %1654 = vmatmul.mubr.bf16.gmra.mxu0 %v1448
        %v1655 = vpop.f32.mrf.mxu0
        %v1656 = vadd.f32 0.0, %v1655
        %v1657 = vpop.f32.mrf.mxu0
        %v1658 = vpop.f32.mrf.mxu0
        %v1659 = vadd.f32 0.0, %v1658
        %v1660 = vpop.f32.mrf.mxu0
        %1661 = vmatprep.mubr.bf16.mxu0 0
        %1662 = vmatmul.mubr.bf16.gmra.mxu0 %v1451
        %v1663 = vpop.f32.mrf.mxu0
        %v1664 = vadd.f32 0.0, %v1663
        %v1665 = vpop.f32.mrf.mxu0
        %v1666 = vpop.f32.mrf.mxu0
        %v1667 = vadd.f32 0.0, %v1666
        %v1668 = vpop.f32.mrf.mxu0
        %1669 = vmatprep.mubr.bf16.mxu0 0
        %1670 = vmatmul.mubr.bf16.gmra.mxu0 %v1454
        %v1671 = vpop.f32.mrf.mxu0
        %v1672 = vadd.f32 0.0, %v1671
        %v1673 = vpop.f32.mrf.mxu0
        %v1674 = vpop.f32.mrf.mxu0
        %v1675 = vadd.f32 0.0, %v1674
        %v1676 = vpop.f32.mrf.mxu0
        %1677 = vmatprep.mubr.bf16.mxu0 0
        %1678 = vmatmul.mubr.bf16.gmra.mxu0 %v1457
        %v1679 = vpop.f32.mrf.mxu0
        %v1680 = vadd.f32 0.0, %v1679
        %v1681 = vpop.f32.mrf.mxu0
        %v1682 = vpop.f32.mrf.mxu0
        %v1683 = vadd.f32 0.0, %v1682
        %v1684 = vpop.f32.mrf.mxu0
        %1685 = vmatprep.mubr.bf16.mxu0 0
        %1686 = vmatmul.mubr.bf16.gmra.mxu0 %v1460
        %v1687 = vpop.f32.mrf.mxu0
        %v1688 = vadd.f32 0.0, %v1687
        %v1689 = vpop.f32.mrf.mxu0
        %v1690 = vpop.f32.mrf.mxu0
        %v1691 = vadd.f32 0.0, %v1690
        %v1692 = vpop.f32.mrf.mxu0
        %1693 = vmatprep.mubr.bf16.mxu0 0
        %1694 = vmatmul.mubr.bf16.gmra.mxu0 %v1463
        %v1695 = vpop.f32.mrf.mxu0
        %v1696 = vadd.f32 0.0, %v1695
        %v1697 = vpop.f32.mrf.mxu0
        %v1698 = vpop.f32.mrf.mxu0
        %v1699 = vadd.f32 0.0, %v1698
        %v1700 = vpop.f32.mrf.mxu0
        %1701 = vmatprep.mubr.bf16.mxu0 0
        %1702 = vmatmul.mubr.bf16.gmra.mxu0 %v1466
        %v1703 = vpop.f32.mrf.mxu0
        %v1704 = vadd.f32 0.0, %v1703
        %v1705 = vpop.f32.mrf.mxu0
        %v1706 = vpop.f32.mrf.mxu0
        %v1707 = vadd.f32 0.0, %v1706
        %v1708 = vpop.f32.mrf.mxu0
        %1709 = vmatprep.mubr.bf16.mxu0 0
        %1710 = vmatmul.mubr.bf16.gmra.mxu0 %v1469
        %v1711 = vpop.f32.mrf.mxu0
        %v1712 = vadd.f32 0.0, %v1711
        %v1713 = vpop.f32.mrf.mxu0
        %v1714 = vpop.f32.mrf.mxu0
        %v1715 = vadd.f32 0.0, %v1714
        %v1716 = vpop.f32.mrf.mxu0
        %1717 = vmatprep.mubr.bf16.mxu0 0
        %1718 = vmatmul.mubr.bf16.gmra.mxu0 %v1472
        %v1719 = vpop.f32.mrf.mxu0
        %v1720 = vadd.f32 0.0, %v1719
        %v1721 = vpop.f32.mrf.mxu0
        %v1722 = vpop.f32.mrf.mxu0
        %v1723 = vadd.f32 0.0, %v1722
        %v1724 = vpop.f32.mrf.mxu0
        %1725 = vmatprep.mubr.bf16.mxu0 0
        %1726 = vmatmul.mubr.bf16.gmra.mxu0 %v1475
        %v1727 = vpop.f32.mrf.mxu0
        %v1728 = vadd.f32 0.0, %v1727
        %v1729 = vpop.f32.mrf.mxu0
        %v1730 = vpop.f32.mrf.mxu0
        %v1731 = vpop.f32.mrf.mxu0
        %1732 = vdwg.mxu0
        %v1733 = vadd.f32 %v1095, %v1512
        %v1734 = vadd.f32 %v1098, %v1515
        %v1735 = vadd.f32 %v1103, %v1520
        %v1736 = vadd.f32 %v1106, %v1523
        %v1737 = vadd.f32 %v1111, %v1528
        %v1738 = vadd.f32 %v1114, %v1531
        %v1739 = vadd.f32 %v1119, %v1536
        %v1740 = vadd.f32 %v1122, %v1539
        %v1741 = vadd.f32 %v1127, %v1544
        %v1742 = vadd.f32 %v1130, %v1547
        %v1743 = vadd.f32 %v1135, %v1552
        %v1744 = vadd.f32 %v1138, %v1555
        %v1745 = vadd.f32 %v1143, %v1560
        %v1746 = vadd.f32 %v1146, %v1563
        %v1747 = vadd.f32 %v1151, %v1568
        %v1748 = vadd.f32 %v1154, %v1571
        %v1749 = vadd.f32 %v1159, %v1576
        %v1750 = vadd.f32 %v1162, %v1579
        %v1751 = vadd.f32 %v1167, %v1584
        %v1752 = vadd.f32 %v1170, %v1587
        %v1753 = vadd.f32 %v1175, %v1592
        %v1754 = vadd.f32 %v1178, %v1595
        %v1755 = vadd.f32 %v1183, %v1600
        %v1756 = vadd.f32 %v1186, %v1603
        %v1757 = vadd.f32 %v1191, %v1608
        %v1758 = vadd.f32 %v1194, %v1611
        %v1759 = vadd.f32 %v1199, %v1616
        %v1760 = vadd.f32 %v1202, %v1619
        %v1761 = vadd.f32 %v1207, %v1624
        %v1762 = vadd.f32 %v1210, %v1627
        %v1763 = vadd.f32 %v1215, %v1632
        %v1764 = vadd.f32 %v1218, %v1635
        %v1765 = vadd.f32 %v1223, %v1640
        %v1766 = vadd.f32 %v1226, %v1643
        %v1767 = vadd.f32 %v1231, %v1648
        %v1768 = vadd.f32 %v1234, %v1651
        %v1769 = vadd.f32 %v1239, %v1656
        %v1770 = vadd.f32 %v1242, %v1659
        %v1771 = vadd.f32 %v1247, %v1664
        %v1772 = vadd.f32 %v1250, %v1667
        %v1773 = vadd.f32 %v1255, %v1672
        %v1774 = vadd.f32 %v1258, %v1675
        %v1775 = vadd.f32 %v1263, %v1680
        %v1776 = vadd.f32 %v1266, %v1683
        %v1777 = vadd.f32 %v1271, %v1688
        %v1778 = vadd.f32 %v1274, %v1691
        %v1779 = vadd.f32 %v1279, %v1696
        %v1780 = vadd.f32 %v1282, %v1699
        %v1781 = vadd.f32 %v1287, %v1704
        %v1782 = vadd.f32 %v1290, %v1707
        %v1783 = vadd.f32 %v1295, %v1712
        %v1784 = vadd.f32 %v1298, %v1715
        %v1785 = vadd.f32 %v1303, %v1720
        %v1786 = vadd.f32 %v1306, %v1723
        %v1787 = vadd.f32 %v1311, %v1728
        %v1788 = vld [vmem:[%s206 + $0x8] sm:$0x8]
        %v1789 = vld [vmem:[%s206 + $0xc] sm:$0xf]
        %v1790 = vld [vmem:[%s206 + $0x10] sm:$0xf]
        %v1791 = vld [vmem:[%s206 + $0x14] sm:$0xf]
        %v1792 = vld [vmem:[%s206 + $0x18] sm:$0xf]
        %v1793 = vld [vmem:[%s206 + $0x1c] sm:$0xf]
        %v1794 = vld [vmem:[%s206 + $0x20] sm:$0xf]
        %v1795 = vld [vmem:[%s206 + $0x24] sm:$0xf]
        %v1796 = vld [vmem:[%s206 + $0x28] sm:$0xf]
        %v1797 = vld [vmem:[%s206 + $0x2c] sm:$0xf]
        %v1798 = vld [vmem:[%s206 + $0x30] sm:$0xf]
        %v1799 = vld [vmem:[%s206 + $0x34] sm:$0xf]
        %v1800 = vld [vmem:[%s206 + $0x38] sm:$0xf]
        %v1801 = vld [vmem:[%s206 + $0x3c] sm:$0xf]
        %v1802 = vld [vmem:[%s206 + $0x40] sm:$0xf]
        %v1803 = vld [vmem:[%s206 + $0x44] sm:$0xf]
        %v1804 = vld [vmem:[%s206 + $0x48] sm:$0xf]
        %v1805 = vld [vmem:[%s206 + $0x4c] sm:$0xf]
        %v1806 = vld [vmem:[%s206 + $0x50] sm:$0xf]
        %v1807 = vld [vmem:[%s206 + $0x54] sm:$0xf]
        %v1808 = vld [vmem:[%s206 + $0x58] sm:$0xf]
        %v1809 = vld [vmem:[%s206 + $0x5c] sm:$0xf]
        %v1810 = vld [vmem:[%s206 + $0x60] sm:$0xf]
        %v1811 = vld [vmem:[%s206 + $0x64] sm:$0xf]
        %v1812 = vld [vmem:[%s206 + $0x68] sm:$0xf]
        %v1813 = vld [vmem:[%s206 + $0x6c] sm:$0xf]
        %v1814 = vld [vmem:[%s206 + $0x70] sm:$0xf]
        %v1815 = vld [vmem:[%s206 + $0x74] sm:$0xf]
        %v1816 = vld [vmem:[%s206 + $0x78] sm:$0xf]
        %v1817 = vld [vmem:[%s206 + $0x7c] sm:$0xf]
        %v1818 = vld [vmem:[%s206 + $0x80] sm:$0xf]
        %v1819 = vld [vmem:[%s206 + $0x84] sm:$0xf]
        %v1820 = vld [vmem:[%s206 + $0x88] sm:$0xf]
        %v1821 = vld [vmem:[%s206 + $0x8c] sm:$0xf]
        %v1822 = vld [vmem:[%s206 + $0x90] sm:$0xf]
        %v1823 = vld [vmem:[%s206 + $0x94] sm:$0xf]
        %v1824 = vld [vmem:[%s206 + $0x98] sm:$0xf]
        %v1825 = vld [vmem:[%s206 + $0x9c] sm:$0xf]
        %v1826 = vld [vmem:[%s206 + $0xa0] sm:$0xf]
        %v1827 = vld [vmem:[%s206 + $0xa4] sm:$0xf]
        %v1828 = vld [vmem:[%s206 + $0xa8] sm:$0xf]
        %v1829 = vld [vmem:[%s206 + $0xac] sm:$0xf]
        %v1830 = vld [vmem:[%s206 + $0xb0] sm:$0xf]
        %v1831 = vld [vmem:[%s206 + $0xb4] sm:$0xf]
        %v1832 = vld [vmem:[%s206 + $0xb8] sm:$0xf]
        %v1833 = vld [vmem:[%s206 + $0xbc] sm:$0xf]
        %v1834 = vld [vmem:[%s206 + $0xc0] sm:$0xf]
        %v1835 = vld [vmem:[%s206 + $0xc4] sm:$0xf]
        %v1836 = vld [vmem:[%s206 + $0xc8] sm:$0xf]
        %v1837 = vld [vmem:[%s206 + $0xcc] sm:$0xf]
        %v1838 = vld [vmem:[%s206 + $0xd0] sm:$0xf]
        %v1839 = vld [vmem:[%s206 + $0xd4] sm:$0xf]
        %v1840 = vld [vmem:[%s206 + $0xd8] sm:$0xf]
        %v1841 = vld [vmem:[%s206 + $0xdc] sm:$0xf]
        %v1842 = vld [vmem:[%s206 + $0xe0] sm:$0xf]
        %v1843 = vld [vmem:[%s206 + $0xe4] sm:$0x7]
        %s1844 = scalar_lea.vmem %s1, 48
        %v1845 = vld [vmem:[%s1844] sm:$0xf]
        %v1846 = vld [vmem:[%s1844 + $0x4] sm:$0xf]
        %v1847 = vld [vmem:[%s1844 + $0x8] sm:$0xf]
        %v1848 = vld [vmem:[%s1844 + $0xc] sm:$0xf]
        %v1905 = vunpack.c.l.b16 %v1788
        %v1906 = vunpack.c.l.b16 %v1789
        %v1907 = vunpack.c.l.b16 %v1790
        %v1908 = vunpack.c.l.b16 %v1791
        %v1909 = vunpack.c.l.b16 %v1792
        %v1910 = vunpack.c.l.b16 %v1793
        %v1911 = vunpack.c.l.b16 %v1794
        %v1912 = vunpack.c.l.b16 %v1795
        %v1913 = vunpack.c.l.b16 %v1796
        %v1914 = vunpack.c.l.b16 %v1797
        %v1915 = vunpack.c.l.b16 %v1798
        %v1916 = vunpack.c.l.b16 %v1799
        %v1917 = vunpack.c.l.b16 %v1800
        %v1918 = vunpack.c.l.b16 %v1801
        %v1919 = vunpack.c.l.b16 %v1802
        %v1920 = vunpack.c.l.b16 %v1803
        %v1921 = vunpack.c.l.b16 %v1804
        %v1922 = vunpack.c.l.b16 %v1805
        %v1923 = vunpack.c.l.b16 %v1806
        %v1924 = vunpack.c.l.b16 %v1807
        %v1925 = vunpack.c.l.b16 %v1808
        %v1926 = vunpack.c.l.b16 %v1809
        %v1927 = vunpack.c.l.b16 %v1810
        %v1928 = vunpack.c.l.b16 %v1811
        %v1929 = vunpack.c.l.b16 %v1812
        %v1930 = vunpack.c.l.b16 %v1813
        %v1931 = vunpack.c.l.b16 %v1814
        %v1932 = vunpack.c.l.b16 %v1815
        %v1933 = vunpack.c.l.b16 %v1816
        %v1934 = vunpack.c.l.b16 %v1817
        %v1935 = vunpack.c.l.b16 %v1818
        %v1936 = vunpack.c.l.b16 %v1819
        %v1937 = vunpack.c.l.b16 %v1820
        %v1938 = vunpack.c.l.b16 %v1821
        %v1939 = vunpack.c.l.b16 %v1822
        %v1940 = vunpack.c.l.b16 %v1823
        %v1941 = vunpack.c.l.b16 %v1824
        %v1942 = vunpack.c.l.b16 %v1825
        %v1943 = vunpack.c.l.b16 %v1826
        %v1944 = vunpack.c.l.b16 %v1827
        %v1945 = vunpack.c.l.b16 %v1828
        %v1946 = vunpack.c.l.b16 %v1829
        %v1947 = vunpack.c.l.b16 %v1830
        %v1948 = vunpack.c.l.b16 %v1831
        %v1949 = vunpack.c.l.b16 %v1832
        %v1950 = vunpack.c.l.b16 %v1833
        %v1951 = vunpack.c.l.b16 %v1834
        %v1952 = vunpack.c.l.b16 %v1835
        %v1953 = vunpack.c.l.b16 %v1836
        %v1954 = vunpack.c.l.b16 %v1837
        %v1955 = vunpack.c.l.b16 %v1838
        %v1956 = vunpack.c.l.b16 %v1839
        %v1957 = vunpack.c.l.b16 %v1840
        %v1958 = vunpack.c.l.b16 %v1841
        %v1959 = vunpack.c.l.b16 %v1842
        %v1960 = vunpack.c.l.b16 %v1843
        %v1961 = vpack.c.b16 %v1906, %v1905
        %v1962 = vpack.c.b16 %v1908, %v1907
        %v1963 = vpack.c.b16 %v1910, %v1909
        %v1964 = vpack.c.b16 %v1912, %v1911
        %v1965 = vpack.c.b16 %v1914, %v1913
        %v1966 = vpack.c.b16 %v1916, %v1915
        %v1967 = vpack.c.b16 %v1918, %v1917
        %v1968 = vpack.c.b16 %v1920, %v1919
        %v1969 = vpack.c.b16 %v1922, %v1921
        %v1970 = vpack.c.b16 %v1924, %v1923
        %v1971 = vpack.c.b16 %v1926, %v1925
        %v1972 = vpack.c.b16 %v1928, %v1927
        %v1973 = vpack.c.b16 %v1930, %v1929
        %v1974 = vpack.c.b16 %v1932, %v1931
        %v1975 = vpack.c.b16 %v1934, %v1933
        %v1976 = vpack.c.b16 %v1936, %v1935
        %v1977 = vpack.c.b16 %v1938, %v1937
        %v1978 = vpack.c.b16 %v1940, %v1939
        %v1979 = vpack.c.b16 %v1942, %v1941
        %v1980 = vpack.c.b16 %v1944, %v1943
        %v1981 = vpack.c.b16 %v1946, %v1945
        %v1982 = vpack.c.b16 %v1948, %v1947
        %v1983 = vpack.c.b16 %v1950, %v1949
        %v1984 = vpack.c.b16 %v1952, %v1951
        %v1985 = vpack.c.b16 %v1954, %v1953
        %v1986 = vpack.c.b16 %v1956, %v1955
        %v1987 = vpack.c.b16 %v1958, %v1957
        %v1988 = vpack.c.b16 %v1960, %v1959
        %vm1989 = vcmask 1044480
        %v1990 = vrot.slane %v1961, 3
        %v1991 = vrot.slane %v1962, 3
        %v1992 = vsel %vm1989, %v1990, %v1991
        %v1993 = vrot.slane %v1963, 3
        %v1994 = vsel %vm1989, %v1991, %v1993
        %v1995 = vrot.slane %v1964, 3
        %v1996 = vsel %vm1989, %v1993, %v1995
        %v1997 = vrot.slane %v1965, 3
        %v1998 = vsel %vm1989, %v1995, %v1997
        %v1999 = vrot.slane %v1966, 3
        %v2000 = vsel %vm1989, %v1997, %v1999
        %v2001 = vrot.slane %v1967, 3
        %v2002 = vsel %vm1989, %v1999, %v2001
        %v2003 = vrot.slane %v1968, 3
        %v2004 = vsel %vm1989, %v2001, %v2003
        %v2005 = vrot.slane %v1969, 3
        %v2006 = vsel %vm1989, %v2003, %v2005
        %v2007 = vrot.slane %v1970, 3
        %v2008 = vsel %vm1989, %v2005, %v2007
        %v2009 = vrot.slane %v1971, 3
        %v2010 = vsel %vm1989, %v2007, %v2009
        %v2011 = vrot.slane %v1972, 3
        %v2012 = vsel %vm1989, %v2009, %v2011
        %v2013 = vrot.slane %v1973, 3
        %v2014 = vsel %vm1989, %v2011, %v2013
        %v2015 = vrot.slane %v1974, 3
        %v2016 = vsel %vm1989, %v2013, %v2015
        %v2017 = vrot.slane %v1975, 3
        %v2018 = vsel %vm1989, %v2015, %v2017
        %v2019 = vrot.slane %v1976, 3
        %v2020 = vsel %vm1989, %v2017, %v2019
        %v2021 = vrot.slane %v1977, 3
        %v2022 = vsel %vm1989, %v2019, %v2021
        %v2023 = vrot.slane %v1978, 3
        %v2024 = vsel %vm1989, %v2021, %v2023
        %v2025 = vrot.slane %v1979, 3
        %v2026 = vsel %vm1989, %v2023, %v2025
        %v2027 = vrot.slane %v1980, 3
        %v2028 = vsel %vm1989, %v2025, %v2027
        %v2029 = vrot.slane %v1981, 3
        %v2030 = vsel %vm1989, %v2027, %v2029
        %v2031 = vrot.slane %v1982, 3
        %v2032 = vsel %vm1989, %v2029, %v2031
        %v2033 = vrot.slane %v1983, 3
        %v2034 = vsel %vm1989, %v2031, %v2033
        %v2035 = vrot.slane %v1984, 3
        %v2036 = vsel %vm1989, %v2033, %v2035
        %v2037 = vrot.slane %v1985, 3
        %v2038 = vsel %vm1989, %v2035, %v2037
        %v2039 = vrot.slane %v1986, 3
        %v2040 = vsel %vm1989, %v2037, %v2039
        %v2041 = vrot.slane %v1987, 3
        %v2042 = vsel %vm1989, %v2039, %v2041
        %v2043 = vrot.slane %v1988, 3
        %v2044 = vsel %vm1989, %v2041, %v2043
        %v2049 = vunpack.c.l.b16 %v1845
        %v2050 = vunpack.c.l.b16 %v1846
        %v2051 = vunpack.c.l.b16 %v1847
        %v2052 = vunpack.c.l.b16 %v1848
        %v2053 = vpack.c.b16 %v2050, %v2049
        %v2054 = vpack.c.b16 %v2052, %v2051
        %v2058 = vsel %vm649, %v1992, 0
        %v2061 = vsel %vm649, %v1994, 0
        %v2064 = vsel %vm649, %v1996, 0
        %v2067 = vsel %vm649, %v1998, 0
        %v2070 = vsel %vm649, %v2000, 0
        %v2073 = vsel %vm649, %v2002, 0
        %v2076 = vsel %vm649, %v2004, 0
        %v2079 = vsel %vm649, %v2006, 0
        %v2082 = vsel %vm649, %v2008, 0
        %v2085 = vsel %vm649, %v2010, 0
        %v2088 = vsel %vm649, %v2012, 0
        %v2091 = vsel %vm649, %v2014, 0
        %v2094 = vsel %vm649, %v2016, 0
        %v2097 = vsel %vm649, %v2018, 0
        %v2100 = vsel %vm649, %v2020, 0
        %v2103 = vsel %vm649, %v2022, 0
        %v2106 = vsel %vm649, %v2024, 0
        %v2109 = vsel %vm649, %v2026, 0
        %v2112 = vsel %vm649, %v2028, 0
        %v2115 = vsel %vm649, %v2030, 0
        %v2118 = vsel %vm649, %v2032, 0
        %v2121 = vsel %vm649, %v2034, 0
        %v2124 = vsel %vm649, %v2036, 0
        %v2127 = vsel %vm649, %v2038, 0
        %v2130 = vsel %vm649, %v2040, 0
        %v2133 = vsel %vm649, %v2042, 0
        %v2136 = vsel %vm649, %v2044, 0
        %v2139 = vsel %vm649, %v2043, 0
        %2141 = vmatprep.subr.bf16.mxu0 0
        %2142 = vmatpush1.bf16.msra.mxu0 0
        %2143 = vmatprep.subr.bf16.mxu0 0
        %2144 = vmatpush1.bf16.msra.mxu0 0
        %2145 = vmatprep.subr.bf16.mxu0 0
        %2146 = vmatpush1.bf16.msra.mxu0 0
        %2147 = vmatprep.subr.bf16.mxu0 0
        %2148 = vmatpush1.bf16.msra.mxu0 0
        %2149 = vmatprep.subr.bf16.mxu0 0
        %2150 = vmatpush1.bf16.msra.mxu0 0
        %2151 = vmatprep.subr.bf16.mxu0 0
        %2152 = vmatpush1.bf16.msra.mxu0 0
        %2153 = vmatprep.subr.bf16.mxu0 0
        %2154 = vmatpush1.bf16.msra.mxu0 %v2054
        %2155 = vmatprep.subr.bf16.mxu0 0
        %2156 = vmatpush1.bf16.msra.mxu0 %v2053
        %2157 = vmatprep.subr.bf16.mxu0 0
        %2158 = vmatpush2.bf16.msra.mxu0 0
        %2159 = vmatprep.subr.bf16.mxu0 0
        %2160 = vmatpush2.bf16.msra.mxu0 0
        %2161 = vmatprep.subr.bf16.mxu0 0
        %2162 = vmatpush2.bf16.msra.mxu0 0
        %2163 = vmatprep.subr.bf16.mxu0 0
        %2164 = vmatpush2.bf16.msra.mxu0 0
        %2165 = vmatprep.subr.bf16.mxu0 0
        %2166 = vmatpush2.bf16.msra.mxu0 0
        %2167 = vmatprep.subr.bf16.mxu0 0
        %2168 = vmatpush2.bf16.msra.mxu0 0
        %2169 = vmatprep.subr.bf16.mxu0 0
        %2170 = vmatpush2.bf16.msra.mxu0 0
        %2171 = vmatprep.subr.bf16.mxu0 0
        %2172 = vmatpush2.bf16.msra.mxu0 0
        %2173 = vmatprep.mubr.bf16.mxu0 0
        %2174 = vmatmul.mubr.bf16.gmra.mxu0 %v2058
        %v2175 = vpop.f32.mrf.mxu0
        %v2176 = vadd.f32 0.0, %v2175
        %v2177 = vpop.f32.mrf.mxu0
        %v2178 = vpop.f32.mrf.mxu0
        %v2179 = vadd.f32 0.0, %v2178
        %v2180 = vpop.f32.mrf.mxu0
        %2181 = vmatprep.mubr.bf16.mxu0 0
        %2182 = vmatmul.mubr.bf16.gmra.mxu0 %v2061
        %v2183 = vpop.f32.mrf.mxu0
        %v2184 = vadd.f32 0.0, %v2183
        %v2185 = vpop.f32.mrf.mxu0
        %v2186 = vpop.f32.mrf.mxu0
        %v2187 = vadd.f32 0.0, %v2186
        %v2188 = vpop.f32.mrf.mxu0
        %2189 = vmatprep.mubr.bf16.mxu0 0
        %2190 = vmatmul.mubr.bf16.gmra.mxu0 %v2064
        %v2191 = vpop.f32.mrf.mxu0
        %v2192 = vadd.f32 0.0, %v2191
        %v2193 = vpop.f32.mrf.mxu0
        %v2194 = vpop.f32.mrf.mxu0
        %v2195 = vadd.f32 0.0, %v2194
        %v2196 = vpop.f32.mrf.mxu0
        %2197 = vmatprep.mubr.bf16.mxu0 0
        %2198 = vmatmul.mubr.bf16.gmra.mxu0 %v2067
        %v2199 = vpop.f32.mrf.mxu0
        %v2200 = vadd.f32 0.0, %v2199
        %v2201 = vpop.f32.mrf.mxu0
        %v2202 = vpop.f32.mrf.mxu0
        %v2203 = vadd.f32 0.0, %v2202
        %v2204 = vpop.f32.mrf.mxu0
        %2205 = vmatprep.mubr.bf16.mxu0 0
        %2206 = vmatmul.mubr.bf16.gmra.mxu0 %v2070
        %v2207 = vpop.f32.mrf.mxu0
        %v2208 = vadd.f32 0.0, %v2207
        %v2209 = vpop.f32.mrf.mxu0
        %v2210 = vpop.f32.mrf.mxu0
        %v2211 = vadd.f32 0.0, %v2210
        %v2212 = vpop.f32.mrf.mxu0
        %2213 = vmatprep.mubr.bf16.mxu0 0
        %2214 = vmatmul.mubr.bf16.gmra.mxu0 %v2073
        %v2215 = vpop.f32.mrf.mxu0
        %v2216 = vadd.f32 0.0, %v2215
        %v2217 = vpop.f32.mrf.mxu0
        %v2218 = vpop.f32.mrf.mxu0
        %v2219 = vadd.f32 0.0, %v2218
        %v2220 = vpop.f32.mrf.mxu0
        %2221 = vmatprep.mubr.bf16.mxu0 0
        %2222 = vmatmul.mubr.bf16.gmra.mxu0 %v2076
        %v2223 = vpop.f32.mrf.mxu0
        %v2224 = vadd.f32 0.0, %v2223
        %v2225 = vpop.f32.mrf.mxu0
        %v2226 = vpop.f32.mrf.mxu0
        %v2227 = vadd.f32 0.0, %v2226
        %v2228 = vpop.f32.mrf.mxu0
        %2229 = vmatprep.mubr.bf16.mxu0 0
        %2230 = vmatmul.mubr.bf16.gmra.mxu0 %v2079
        %v2231 = vpop.f32.mrf.mxu0
        %v2232 = vadd.f32 0.0, %v2231
        %v2233 = vpop.f32.mrf.mxu0
        %v2234 = vpop.f32.mrf.mxu0
        %v2235 = vadd.f32 0.0, %v2234
        %v2236 = vpop.f32.mrf.mxu0
        %2237 = vmatprep.mubr.bf16.mxu0 0
        %2238 = vmatmul.mubr.bf16.gmra.mxu0 %v2082
        %v2239 = vpop.f32.mrf.mxu0
        %v2240 = vadd.f32 0.0, %v2239
        %v2241 = vpop.f32.mrf.mxu0
        %v2242 = vpop.f32.mrf.mxu0
        %v2243 = vadd.f32 0.0, %v2242
        %v2244 = vpop.f32.mrf.mxu0
        %2245 = vmatprep.mubr.bf16.mxu0 0
        %2246 = vmatmul.mubr.bf16.gmra.mxu0 %v2085
        %v2247 = vpop.f32.mrf.mxu0
        %v2248 = vadd.f32 0.0, %v2247
        %v2249 = vpop.f32.mrf.mxu0
        %v2250 = vpop.f32.mrf.mxu0
        %v2251 = vadd.f32 0.0, %v2250
        %v2252 = vpop.f32.mrf.mxu0
        %2253 = vmatprep.mubr.bf16.mxu0 0
        %2254 = vmatmul.mubr.bf16.gmra.mxu0 %v2088
        %v2255 = vpop.f32.mrf.mxu0
        %v2256 = vadd.f32 0.0, %v2255
        %v2257 = vpop.f32.mrf.mxu0
        %v2258 = vpop.f32.mrf.mxu0
        %v2259 = vadd.f32 0.0, %v2258
        %v2260 = vpop.f32.mrf.mxu0
        %2261 = vmatprep.mubr.bf16.mxu0 0
        %2262 = vmatmul.mubr.bf16.gmra.mxu0 %v2091
        %v2263 = vpop.f32.mrf.mxu0
        %v2264 = vadd.f32 0.0, %v2263
        %v2265 = vpop.f32.mrf.mxu0
        %v2266 = vpop.f32.mrf.mxu0
        %v2267 = vadd.f32 0.0, %v2266
        %v2268 = vpop.f32.mrf.mxu0
        %2269 = vmatprep.mubr.bf16.mxu0 0
        %2270 = vmatmul.mubr.bf16.gmra.mxu0 %v2094
        %v2271 = vpop.f32.mrf.mxu0
        %v2272 = vadd.f32 0.0, %v2271
        %v2273 = vpop.f32.mrf.mxu0
        %v2274 = vpop.f32.mrf.mxu0
        %v2275 = vadd.f32 0.0, %v2274
        %v2276 = vpop.f32.mrf.mxu0
        %2277 = vmatprep.mubr.bf16.mxu0 0
        %2278 = vmatmul.mubr.bf16.gmra.mxu0 %v2097
        %v2279 = vpop.f32.mrf.mxu0
        %v2280 = vadd.f32 0.0, %v2279
        %v2281 = vpop.f32.mrf.mxu0
        %v2282 = vpop.f32.mrf.mxu0
        %v2283 = vadd.f32 0.0, %v2282
        %v2284 = vpop.f32.mrf.mxu0
        %2285 = vmatprep.mubr.bf16.mxu0 0
        %2286 = vmatmul.mubr.bf16.gmra.mxu0 %v2100
        %v2287 = vpop.f32.mrf.mxu0
        %v2288 = vadd.f32 0.0, %v2287
        %v2289 = vpop.f32.mrf.mxu0
        %v2290 = vpop.f32.mrf.mxu0
        %v2291 = vadd.f32 0.0, %v2290
        %v2292 = vpop.f32.mrf.mxu0
        %2293 = vmatprep.mubr.bf16.mxu0 0
        %2294 = vmatmul.mubr.bf16.gmra.mxu0 %v2103
        %v2295 = vpop.f32.mrf.mxu0
        %v2296 = vadd.f32 0.0, %v2295
        %v2297 = vpop.f32.mrf.mxu0
        %v2298 = vpop.f32.mrf.mxu0
        %v2299 = vadd.f32 0.0, %v2298
        %v2300 = vpop.f32.mrf.mxu0
        %2301 = vmatprep.mubr.bf16.mxu0 0
        %2302 = vmatmul.mubr.bf16.gmra.mxu0 %v2106
        %v2303 = vpop.f32.mrf.mxu0
        %v2304 = vadd.f32 0.0, %v2303
        %v2305 = vpop.f32.mrf.mxu0
        %v2306 = vpop.f32.mrf.mxu0
        %v2307 = vadd.f32 0.0, %v2306
        %v2308 = vpop.f32.mrf.mxu0
        %2309 = vmatprep.mubr.bf16.mxu0 0
        %2310 = vmatmul.mubr.bf16.gmra.mxu0 %v2109
        %v2311 = vpop.f32.mrf.mxu0
        %v2312 = vadd.f32 0.0, %v2311
        %v2313 = vpop.f32.mrf.mxu0
        %v2314 = vpop.f32.mrf.mxu0
        %v2315 = vadd.f32 0.0, %v2314
        %v2316 = vpop.f32.mrf.mxu0
        %2317 = vmatprep.mubr.bf16.mxu0 0
        %2318 = vmatmul.mubr.bf16.gmra.mxu0 %v2112
        %v2319 = vpop.f32.mrf.mxu0
        %v2320 = vadd.f32 0.0, %v2319
        %v2321 = vpop.f32.mrf.mxu0
        %v2322 = vpop.f32.mrf.mxu0
        %v2323 = vadd.f32 0.0, %v2322
        %v2324 = vpop.f32.mrf.mxu0
        %2325 = vmatprep.mubr.bf16.mxu0 0
        %2326 = vmatmul.mubr.bf16.gmra.mxu0 %v2115
        %v2327 = vpop.f32.mrf.mxu0
        %v2328 = vadd.f32 0.0, %v2327
        %v2329 = vpop.f32.mrf.mxu0
        %v2330 = vpop.f32.mrf.mxu0
        %v2331 = vadd.f32 0.0, %v2330
        %v2332 = vpop.f32.mrf.mxu0
        %2333 = vmatprep.mubr.bf16.mxu0 0
        %2334 = vmatmul.mubr.bf16.gmra.mxu0 %v2118
        %v2335 = vpop.f32.mrf.mxu0
        %v2336 = vadd.f32 0.0, %v2335
        %v2337 = vpop.f32.mrf.mxu0
        %v2338 = vpop.f32.mrf.mxu0
        %v2339 = vadd.f32 0.0, %v2338
        %v2340 = vpop.f32.mrf.mxu0
        %2341 = vmatprep.mubr.bf16.mxu0 0
        %2342 = vmatmul.mubr.bf16.gmra.mxu0 %v2121
        %v2343 = vpop.f32.mrf.mxu0
        %v2344 = vadd.f32 0.0, %v2343
        %v2345 = vpop.f32.mrf.mxu0
        %v2346 = vpop.f32.mrf.mxu0
        %v2347 = vadd.f32 0.0, %v2346
        %v2348 = vpop.f32.mrf.mxu0
        %2349 = vmatprep.mubr.bf16.mxu0 0
        %2350 = vmatmul.mubr.bf16.gmra.mxu0 %v2124
        %v2351 = vpop.f32.mrf.mxu0
        %v2352 = vadd.f32 0.0, %v2351
        %v2353 = vpop.f32.mrf.mxu0
        %v2354 = vpop.f32.mrf.mxu0
        %v2355 = vadd.f32 0.0, %v2354
        %v2356 = vpop.f32.mrf.mxu0
        %2357 = vmatprep.mubr.bf16.mxu0 0
        %2358 = vmatmul.mubr.bf16.gmra.mxu0 %v2127
        %v2359 = vpop.f32.mrf.mxu0
        %v2360 = vadd.f32 0.0, %v2359
        %v2361 = vpop.f32.mrf.mxu0
        %v2362 = vpop.f32.mrf.mxu0
        %v2363 = vadd.f32 0.0, %v2362
        %v2364 = vpop.f32.mrf.mxu0
        %2365 = vmatprep.mubr.bf16.mxu0 0
        %2366 = vmatmul.mubr.bf16.gmra.mxu0 %v2130
        %v2367 = vpop.f32.mrf.mxu0
        %v2368 = vadd.f32 0.0, %v2367
        %v2369 = vpop.f32.mrf.mxu0
        %v2370 = vpop.f32.mrf.mxu0
        %v2371 = vadd.f32 0.0, %v2370
        %v2372 = vpop.f32.mrf.mxu0
        %2373 = vmatprep.mubr.bf16.mxu0 0
        %2374 = vmatmul.mubr.bf16.gmra.mxu0 %v2133
        %v2375 = vpop.f32.mrf.mxu0
        %v2376 = vadd.f32 0.0, %v2375
        %v2377 = vpop.f32.mrf.mxu0
        %v2378 = vpop.f32.mrf.mxu0
        %v2379 = vadd.f32 0.0, %v2378
        %v2380 = vpop.f32.mrf.mxu0
        %2381 = vmatprep.mubr.bf16.mxu0 0
        %2382 = vmatmul.mubr.bf16.gmra.mxu0 %v2136
        %v2383 = vpop.f32.mrf.mxu0
        %v2384 = vadd.f32 0.0, %v2383
        %v2385 = vpop.f32.mrf.mxu0
        %v2386 = vpop.f32.mrf.mxu0
        %v2387 = vadd.f32 0.0, %v2386
        %v2388 = vpop.f32.mrf.mxu0
        %2389 = vmatprep.mubr.bf16.mxu0 0
        %2390 = vmatmul.mubr.bf16.gmra.mxu0 %v2139
        %v2391 = vpop.f32.mrf.mxu0
        %v2392 = vadd.f32 0.0, %v2391
        %v2393 = vpop.f32.mrf.mxu0
        %v2394 = vpop.f32.mrf.mxu0
        %v2395 = vpop.f32.mrf.mxu0
        %2396 = vdwg.mxu0
        %v2397 = vadd.f32 %v1733, %v2176
        %v2398 = vadd.f32 %v1734, %v2179
        %v2399 = vadd.f32 %v1735, %v2184
        %v2400 = vadd.f32 %v1736, %v2187
        %v2401 = vadd.f32 %v1737, %v2192
        %v2402 = vadd.f32 %v1738, %v2195
        %v2403 = vadd.f32 %v1739, %v2200
        %v2404 = vadd.f32 %v1740, %v2203
        %v2405 = vadd.f32 %v1741, %v2208
        %v2406 = vadd.f32 %v1742, %v2211
        %v2407 = vadd.f32 %v1743, %v2216
        %v2408 = vadd.f32 %v1744, %v2219
        %v2409 = vadd.f32 %v1745, %v2224
        %v2410 = vadd.f32 %v1746, %v2227
        %v2411 = vadd.f32 %v1747, %v2232
        %v2412 = vadd.f32 %v1748, %v2235
        %v2413 = vadd.f32 %v1749, %v2240
        %v2414 = vadd.f32 %v1750, %v2243
        %v2415 = vadd.f32 %v1751, %v2248
        %v2416 = vadd.f32 %v1752, %v2251
        %v2417 = vadd.f32 %v1753, %v2256
        %v2418 = vadd.f32 %v1754, %v2259
        %v2419 = vadd.f32 %v1755, %v2264
        %v2420 = vadd.f32 %v1756, %v2267
        %v2421 = vadd.f32 %v1757, %v2272
        %v2422 = vadd.f32 %v1758, %v2275
        %v2423 = vadd.f32 %v1759, %v2280
        %v2424 = vadd.f32 %v1760, %v2283
        %v2425 = vadd.f32 %v1761, %v2288
        %v2426 = vadd.f32 %v1762, %v2291
        %v2427 = vadd.f32 %v1763, %v2296
        %v2428 = vadd.f32 %v1764, %v2299
        %v2429 = vadd.f32 %v1765, %v2304
        %v2430 = vadd.f32 %v1766, %v2307
        %v2431 = vadd.f32 %v1767, %v2312
        %v2432 = vadd.f32 %v1768, %v2315
        %v2433 = vadd.f32 %v1769, %v2320
        %v2434 = vadd.f32 %v1770, %v2323
        %v2435 = vadd.f32 %v1771, %v2328
        %v2436 = vadd.f32 %v1772, %v2331
        %v2437 = vadd.f32 %v1773, %v2336
        %v2438 = vadd.f32 %v1774, %v2339
        %v2439 = vadd.f32 %v1775, %v2344
        %v2440 = vadd.f32 %v1776, %v2347
        %v2441 = vadd.f32 %v1777, %v2352
        %v2442 = vadd.f32 %v1778, %v2355
        %v2443 = vadd.f32 %v1779, %v2360
        %v2444 = vadd.f32 %v1780, %v2363
        %v2445 = vadd.f32 %v1781, %v2368
        %v2446 = vadd.f32 %v1782, %v2371
        %v2447 = vadd.f32 %v1783, %v2376
        %v2448 = vadd.f32 %v1784, %v2379
        %v2449 = vadd.f32 %v1785, %v2384
        %v2450 = vadd.f32 %v1786, %v2387
        %v2451 = vadd.f32 %v1787, %v2392
        %v2452 = vld [vmem:[%s206 + $0xe4] sm:$0xf]
        %s2453 = scalar_lea.vmem %s1, 64
        %v2454 = vld [vmem:[%s2453] sm:$0xf]
        %v2455 = vld [vmem:[%s2453 + $0x4] sm:$0xf]
        %v2456 = vld [vmem:[%s2453 + $0x8] sm:$0xf]
        %v2457 = vld [vmem:[%s2453 + $0xc] sm:$0xf]
        %v2459 = vunpack.c.l.b16 %v2452
        %v2460 = vpack.c.b16 %v2459, %v1959
        %vm2461 = vsmask.f32 4352
        %v2463 = vshrl.u32 %v1961, 16
        %v2465 = vrot.slane %v2463, 3
        %v2466 = vshll.u32 %v1961, 16
        %v2468 = vrot.slane %v2466, 4
        %v2469 = vor.u32 %v2465, %v2468
        %v2471 = vshrl.u32 %v1962, 16
        %v2473 = vrot.slane %v2471, 3
        %v2474 = vshll.u32 %v1962, 16
        %v2476 = vrot.slane %v2474, 4
        %v2477 = vor.u32 %v2473, %v2476
        %v2478 = vsel %vm2461, %v2469, %v2477
        %v2480 = vshrl.u32 %v1963, 16
        %v2482 = vrot.slane %v2480, 3
        %v2483 = vshll.u32 %v1963, 16
        %v2485 = vrot.slane %v2483, 4
        %v2486 = vor.u32 %v2482, %v2485
        %v2487 = vsel %vm2461, %v2477, %v2486
        %v2489 = vshrl.u32 %v1964, 16
        %v2491 = vrot.slane %v2489, 3
        %v2492 = vshll.u32 %v1964, 16
        %v2494 = vrot.slane %v2492, 4
        %v2495 = vor.u32 %v2491, %v2494
        %v2496 = vsel %vm2461, %v2486, %v2495
        %v2498 = vshrl.u32 %v1965, 16
        %v2500 = vrot.slane %v2498, 3
        %v2501 = vshll.u32 %v1965, 16
        %v2503 = vrot.slane %v2501, 4
        %v2504 = vor.u32 %v2500, %v2503
        %v2505 = vsel %vm2461, %v2495, %v2504
        %v2507 = vshrl.u32 %v1966, 16
        %v2509 = vrot.slane %v2507, 3
        %v2510 = vshll.u32 %v1966, 16
        %v2512 = vrot.slane %v2510, 4
        %v2513 = vor.u32 %v2509, %v2512
        %v2514 = vsel %vm2461, %v2504, %v2513
        %v2516 = vshrl.u32 %v1967, 16
        %v2518 = vrot.slane %v2516, 3
        %v2519 = vshll.u32 %v1967, 16
        %v2521 = vrot.slane %v2519, 4
        %v2522 = vor.u32 %v2518, %v2521
        %v2523 = vsel %vm2461, %v2513, %v2522
        %v2525 = vshrl.u32 %v1968, 16
        %v2527 = vrot.slane %v2525, 3
        %v2528 = vshll.u32 %v1968, 16
        %v2530 = vrot.slane %v2528, 4
        %v2531 = vor.u32 %v2527, %v2530
        %v2532 = vsel %vm2461, %v2522, %v2531
        %v2534 = vshrl.u32 %v1969, 16
        %v2536 = vrot.slane %v2534, 3
        %v2537 = vshll.u32 %v1969, 16
        %v2539 = vrot.slane %v2537, 4
        %v2540 = vor.u32 %v2536, %v2539
        %v2541 = vsel %vm2461, %v2531, %v2540
        %v2543 = vshrl.u32 %v1970, 16
        %v2545 = vrot.slane %v2543, 3
        %v2546 = vshll.u32 %v1970, 16
        %v2548 = vrot.slane %v2546, 4
        %v2549 = vor.u32 %v2545, %v2548
        %v2550 = vsel %vm2461, %v2540, %v2549
        %v2552 = vshrl.u32 %v1971, 16
        %v2554 = vrot.slane %v2552, 3
        %v2555 = vshll.u32 %v1971, 16
        %v2557 = vrot.slane %v2555, 4
        %v2558 = vor.u32 %v2554, %v2557
        %v2559 = vsel %vm2461, %v2549, %v2558
        %v2561 = vshrl.u32 %v1972, 16
        %v2563 = vrot.slane %v2561, 3
        %v2564 = vshll.u32 %v1972, 16
        %v2566 = vrot.slane %v2564, 4
        %v2567 = vor.u32 %v2563, %v2566
        %v2568 = vsel %vm2461, %v2558, %v2567
        %v2570 = vshrl.u32 %v1973, 16
        %v2572 = vrot.slane %v2570, 3
        %v2573 = vshll.u32 %v1973, 16
        %v2575 = vrot.slane %v2573, 4
        %v2576 = vor.u32 %v2572, %v2575
        %v2577 = vsel %vm2461, %v2567, %v2576
        %v2579 = vshrl.u32 %v1974, 16
        %v2581 = vrot.slane %v2579, 3
        %v2582 = vshll.u32 %v1974, 16
        %v2584 = vrot.slane %v2582, 4
        %v2585 = vor.u32 %v2581, %v2584
        %v2586 = vsel %vm2461, %v2576, %v2585
        %v2588 = vshrl.u32 %v1975, 16
        %v2590 = vrot.slane %v2588, 3
        %v2591 = vshll.u32 %v1975, 16
        %v2593 = vrot.slane %v2591, 4
        %v2594 = vor.u32 %v2590, %v2593
        %v2595 = vsel %vm2461, %v2585, %v2594
        %v2597 = vshrl.u32 %v1976, 16
        %v2599 = vrot.slane %v2597, 3
        %v2600 = vshll.u32 %v1976, 16
        %v2602 = vrot.slane %v2600, 4
        %v2603 = vor.u32 %v2599, %v2602
        %v2604 = vsel %vm2461, %v2594, %v2603
        %v2606 = vshrl.u32 %v1977, 16
        %v2608 = vrot.slane %v2606, 3
        %v2609 = vshll.u32 %v1977, 16
        %v2611 = vrot.slane %v2609, 4
        %v2612 = vor.u32 %v2608, %v2611
        %v2613 = vsel %vm2461, %v2603, %v2612
        %v2615 = vshrl.u32 %v1978, 16
        %v2617 = vrot.slane %v2615, 3
        %v2618 = vshll.u32 %v1978, 16
        %v2620 = vrot.slane %v2618, 4
        %v2621 = vor.u32 %v2617, %v2620
        %v2622 = vsel %vm2461, %v2612, %v2621
        %v2624 = vshrl.u32 %v1979, 16
        %v2626 = vrot.slane %v2624, 3
        %v2627 = vshll.u32 %v1979, 16
        %v2629 = vrot.slane %v2627, 4
        %v2630 = vor.u32 %v2626, %v2629
        %v2631 = vsel %vm2461, %v2621, %v2630
        %v2633 = vshrl.u32 %v1980, 16
        %v2635 = vrot.slane %v2633, 3
        %v2636 = vshll.u32 %v1980, 16
        %v2638 = vrot.slane %v2636, 4
        %v2639 = vor.u32 %v2635, %v2638
        %v2640 = vsel %vm2461, %v2630, %v2639
        %v2642 = vshrl.u32 %v1981, 16
        %v2644 = vrot.slane %v2642, 3
        %v2645 = vshll.u32 %v1981, 16
        %v2647 = vrot.slane %v2645, 4
        %v2648 = vor.u32 %v2644, %v2647
        %v2649 = vsel %vm2461, %v2639, %v2648
        %v2651 = vshrl.u32 %v1982, 16
        %v2653 = vrot.slane %v2651, 3
        %v2654 = vshll.u32 %v1982, 16
        %v2656 = vrot.slane %v2654, 4
        %v2657 = vor.u32 %v2653, %v2656
        %v2658 = vsel %vm2461, %v2648, %v2657
        %v2660 = vshrl.u32 %v1983, 16
        %v2662 = vrot.slane %v2660, 3
        %v2663 = vshll.u32 %v1983, 16
        %v2665 = vrot.slane %v2663, 4
        %v2666 = vor.u32 %v2662, %v2665
        %v2667 = vsel %vm2461, %v2657, %v2666
        %v2669 = vshrl.u32 %v1984, 16
        %v2671 = vrot.slane %v2669, 3
        %v2672 = vshll.u32 %v1984, 16
        %v2674 = vrot.slane %v2672, 4
        %v2675 = vor.u32 %v2671, %v2674
        %v2676 = vsel %vm2461, %v2666, %v2675
        %v2678 = vshrl.u32 %v1985, 16
        %v2680 = vrot.slane %v2678, 3
        %v2681 = vshll.u32 %v1985, 16
        %v2683 = vrot.slane %v2681, 4
        %v2684 = vor.u32 %v2680, %v2683
        %v2685 = vsel %vm2461, %v2675, %v2684
        %v2687 = vshrl.u32 %v1986, 16
        %v2689 = vrot.slane %v2687, 3
        %v2690 = vshll.u32 %v1986, 16
        %v2692 = vrot.slane %v2690, 4
        %v2693 = vor.u32 %v2689, %v2692
        %v2694 = vsel %vm2461, %v2684, %v2693
        %v2696 = vshrl.u32 %v1987, 16
        %v2698 = vrot.slane %v2696, 3
        %v2699 = vshll.u32 %v1987, 16
        %v2701 = vrot.slane %v2699, 4
        %v2702 = vor.u32 %v2698, %v2701
        %v2703 = vsel %vm2461, %v2693, %v2702
        %v2705 = vshrl.u32 %v2460, 16
        %v2707 = vrot.slane %v2705, 3
        %v2708 = vshll.u32 %v2460, 16
        %v2710 = vrot.slane %v2708, 4
        %v2711 = vor.u32 %v2707, %v2710
        %v2712 = vsel %vm2461, %v2702, %v2711
        %v2717 = vunpack.c.l.b16 %v2454
        %v2718 = vunpack.c.l.b16 %v2455
        %v2719 = vunpack.c.l.b16 %v2456
        %v2720 = vunpack.c.l.b16 %v2457
        %v2721 = vpack.c.b16 %v2718, %v2717
        %v2722 = vpack.c.b16 %v2720, %v2719
        %v2726 = vsel %vm649, %v2478, 0
        %v2729 = vsel %vm649, %v2487, 0
        %v2732 = vsel %vm649, %v2496, 0
        %v2735 = vsel %vm649, %v2505, 0
        %v2738 = vsel %vm649, %v2514, 0
        %v2741 = vsel %vm649, %v2523, 0
        %v2744 = vsel %vm649, %v2532, 0
        %v2747 = vsel %vm649, %v2541, 0
        %v2750 = vsel %vm649, %v2550, 0
        %v2753 = vsel %vm649, %v2559, 0
        %v2756 = vsel %vm649, %v2568, 0
        %v2759 = vsel %vm649, %v2577, 0
        %v2762 = vsel %vm649, %v2586, 0
        %v2765 = vsel %vm649, %v2595, 0
        %v2768 = vsel %vm649, %v2604, 0
        %v2771 = vsel %vm649, %v2613, 0
        %v2774 = vsel %vm649, %v2622, 0
        %v2777 = vsel %vm649, %v2631, 0
        %v2780 = vsel %vm649, %v2640, 0
        %v2783 = vsel %vm649, %v2649, 0
        %v2786 = vsel %vm649, %v2658, 0
        %v2789 = vsel %vm649, %v2667, 0
        %v2792 = vsel %vm649, %v2676, 0
        %v2795 = vsel %vm649, %v2685, 0
        %v2798 = vsel %vm649, %v2694, 0
        %v2801 = vsel %vm649, %v2703, 0
        %v2804 = vsel %vm649, %v2712, 0
        %v2807 = vsel %vm649, %v2711, 0
        %2809 = vmatprep.subr.bf16.mxu0 0
        %2810 = vmatpush1.bf16.msra.mxu0 0
        %2811 = vmatprep.subr.bf16.mxu0 0
        %2812 = vmatpush1.bf16.msra.mxu0 0
        %2813 = vmatprep.subr.bf16.mxu0 0
        %2814 = vmatpush1.bf16.msra.mxu0 0
        %2815 = vmatprep.subr.bf16.mxu0 0
        %2816 = vmatpush1.bf16.msra.mxu0 0
        %2817 = vmatprep.subr.bf16.mxu0 0
        %2818 = vmatpush1.bf16.msra.mxu0 0
        %2819 = vmatprep.subr.bf16.mxu0 0
        %2820 = vmatpush1.bf16.msra.mxu0 0
        %2821 = vmatprep.subr.bf16.mxu0 0
        %2822 = vmatpush1.bf16.msra.mxu0 %v2722
        %2823 = vmatprep.subr.bf16.mxu0 0
        %2824 = vmatpush1.bf16.msra.mxu0 %v2721
        %2825 = vmatprep.subr.bf16.mxu0 0
        %2826 = vmatpush2.bf16.msra.mxu0 0
        %2827 = vmatprep.subr.bf16.mxu0 0
        %2828 = vmatpush2.bf16.msra.mxu0 0
        %2829 = vmatprep.subr.bf16.mxu0 0
        %2830 = vmatpush2.bf16.msra.mxu0 0
        %2831 = vmatprep.subr.bf16.mxu0 0
        %2832 = vmatpush2.bf16.msra.mxu0 0
        %2833 = vmatprep.subr.bf16.mxu0 0
        %2834 = vmatpush2.bf16.msra.mxu0 0
        %2835 = vmatprep.subr.bf16.mxu0 0
        %2836 = vmatpush2.bf16.msra.mxu0 0
        %2837 = vmatprep.subr.bf16.mxu0 0
        %2838 = vmatpush2.bf16.msra.mxu0 0
        %2839 = vmatprep.subr.bf16.mxu0 0
        %2840 = vmatpush2.bf16.msra.mxu0 0
        %2841 = vmatprep.mubr.bf16.mxu0 0
        %2842 = vmatmul.mubr.bf16.gmra.mxu0 %v2726
        %v2843 = vpop.f32.mrf.mxu0
        %v2844 = vadd.f32 0.0, %v2843
        %v2845 = vpop.f32.mrf.mxu0
        %v2846 = vpop.f32.mrf.mxu0
        %v2847 = vadd.f32 0.0, %v2846
        %v2848 = vpop.f32.mrf.mxu0
        %2849 = vmatprep.mubr.bf16.mxu0 0
        %2850 = vmatmul.mubr.bf16.gmra.mxu0 %v2729
        %v2851 = vpop.f32.mrf.mxu0
        %v2852 = vadd.f32 0.0, %v2851
        %v2853 = vpop.f32.mrf.mxu0
        %v2854 = vpop.f32.mrf.mxu0
        %v2855 = vadd.f32 0.0, %v2854
        %v2856 = vpop.f32.mrf.mxu0
        %2857 = vmatprep.mubr.bf16.mxu0 0
        %2858 = vmatmul.mubr.bf16.gmra.mxu0 %v2732
        %v2859 = vpop.f32.mrf.mxu0
        %v2860 = vadd.f32 0.0, %v2859
        %v2861 = vpop.f32.mrf.mxu0
        %v2862 = vpop.f32.mrf.mxu0
        %v2863 = vadd.f32 0.0, %v2862
        %v2864 = vpop.f32.mrf.mxu0
        %2865 = vmatprep.mubr.bf16.mxu0 0
        %2866 = vmatmul.mubr.bf16.gmra.mxu0 %v2735
        %v2867 = vpop.f32.mrf.mxu0
        %v2868 = vadd.f32 0.0, %v2867
        %v2869 = vpop.f32.mrf.mxu0
        %v2870 = vpop.f32.mrf.mxu0
        %v2871 = vadd.f32 0.0, %v2870
        %v2872 = vpop.f32.mrf.mxu0
        %2873 = vmatprep.mubr.bf16.mxu0 0
        %2874 = vmatmul.mubr.bf16.gmra.mxu0 %v2738
        %v2875 = vpop.f32.mrf.mxu0
        %v2876 = vadd.f32 0.0, %v2875
        %v2877 = vpop.f32.mrf.mxu0
        %v2878 = vpop.f32.mrf.mxu0
        %v2879 = vadd.f32 0.0, %v2878
        %v2880 = vpop.f32.mrf.mxu0
        %2881 = vmatprep.mubr.bf16.mxu0 0
        %2882 = vmatmul.mubr.bf16.gmra.mxu0 %v2741
        %v2883 = vpop.f32.mrf.mxu0
        %v2884 = vadd.f32 0.0, %v2883
        %v2885 = vpop.f32.mrf.mxu0
        %v2886 = vpop.f32.mrf.mxu0
        %v2887 = vadd.f32 0.0, %v2886
        %v2888 = vpop.f32.mrf.mxu0
        %2889 = vmatprep.mubr.bf16.mxu0 0
        %2890 = vmatmul.mubr.bf16.gmra.mxu0 %v2744
        %v2891 = vpop.f32.mrf.mxu0
        %v2892 = vadd.f32 0.0, %v2891
        %v2893 = vpop.f32.mrf.mxu0
        %v2894 = vpop.f32.mrf.mxu0
        %v2895 = vadd.f32 0.0, %v2894
        %v2896 = vpop.f32.mrf.mxu0
        %2897 = vmatprep.mubr.bf16.mxu0 0
        %2898 = vmatmul.mubr.bf16.gmra.mxu0 %v2747
        %v2899 = vpop.f32.mrf.mxu0
        %v2900 = vadd.f32 0.0, %v2899
        %v2901 = vpop.f32.mrf.mxu0
        %v2902 = vpop.f32.mrf.mxu0
        %v2903 = vadd.f32 0.0, %v2902
        %v2904 = vpop.f32.mrf.mxu0
        %2905 = vmatprep.mubr.bf16.mxu0 0
        %2906 = vmatmul.mubr.bf16.gmra.mxu0 %v2750
        %v2907 = vpop.f32.mrf.mxu0
        %v2908 = vadd.f32 0.0, %v2907
        %v2909 = vpop.f32.mrf.mxu0
        %v2910 = vpop.f32.mrf.mxu0
        %v2911 = vadd.f32 0.0, %v2910
        %v2912 = vpop.f32.mrf.mxu0
        %2913 = vmatprep.mubr.bf16.mxu0 0
        %2914 = vmatmul.mubr.bf16.gmra.mxu0 %v2753
        %v2915 = vpop.f32.mrf.mxu0
        %v2916 = vadd.f32 0.0, %v2915
        %v2917 = vpop.f32.mrf.mxu0
        %v2918 = vpop.f32.mrf.mxu0
        %v2919 = vadd.f32 0.0, %v2918
        %v2920 = vpop.f32.mrf.mxu0
        %2921 = vmatprep.mubr.bf16.mxu0 0
        %2922 = vmatmul.mubr.bf16.gmra.mxu0 %v2756
        %v2923 = vpop.f32.mrf.mxu0
        %v2924 = vadd.f32 0.0, %v2923
        %v2925 = vpop.f32.mrf.mxu0
        %v2926 = vpop.f32.mrf.mxu0
        %v2927 = vadd.f32 0.0, %v2926
        %v2928 = vpop.f32.mrf.mxu0
        %2929 = vmatprep.mubr.bf16.mxu0 0
        %2930 = vmatmul.mubr.bf16.gmra.mxu0 %v2759
        %v2931 = vpop.f32.mrf.mxu0
        %v2932 = vadd.f32 0.0, %v2931
        %v2933 = vpop.f32.mrf.mxu0
        %v2934 = vpop.f32.mrf.mxu0
        %v2935 = vadd.f32 0.0, %v2934
        %v2936 = vpop.f32.mrf.mxu0
        %2937 = vmatprep.mubr.bf16.mxu0 0
        %2938 = vmatmul.mubr.bf16.gmra.mxu0 %v2762
        %v2939 = vpop.f32.mrf.mxu0
        %v2940 = vadd.f32 0.0, %v2939
        %v2941 = vpop.f32.mrf.mxu0
        %v2942 = vpop.f32.mrf.mxu0
        %v2943 = vadd.f32 0.0, %v2942
        %v2944 = vpop.f32.mrf.mxu0
        %2945 = vmatprep.mubr.bf16.mxu0 0
        %2946 = vmatmul.mubr.bf16.gmra.mxu0 %v2765
        %v2947 = vpop.f32.mrf.mxu0
        %v2948 = vadd.f32 0.0, %v2947
        %v2949 = vpop.f32.mrf.mxu0
        %v2950 = vpop.f32.mrf.mxu0
        %v2951 = vadd.f32 0.0, %v2950
        %v2952 = vpop.f32.mrf.mxu0
        %2953 = vmatprep.mubr.bf16.mxu0 0
        %2954 = vmatmul.mubr.bf16.gmra.mxu0 %v2768
        %v2955 = vpop.f32.mrf.mxu0
        %v2956 = vadd.f32 0.0, %v2955
        %v2957 = vpop.f32.mrf.mxu0
        %v2958 = vpop.f32.mrf.mxu0
        %v2959 = vadd.f32 0.0, %v2958
        %v2960 = vpop.f32.mrf.mxu0
        %2961 = vmatprep.mubr.bf16.mxu0 0
        %2962 = vmatmul.mubr.bf16.gmra.mxu0 %v2771
        %v2963 = vpop.f32.mrf.mxu0
        %v2964 = vadd.f32 0.0, %v2963
        %v2965 = vpop.f32.mrf.mxu0
        %v2966 = vpop.f32.mrf.mxu0
        %v2967 = vadd.f32 0.0, %v2966
        %v2968 = vpop.f32.mrf.mxu0
        %2969 = vmatprep.mubr.bf16.mxu0 0
        %2970 = vmatmul.mubr.bf16.gmra.mxu0 %v2774
        %v2971 = vpop.f32.mrf.mxu0
        %v2972 = vadd.f32 0.0, %v2971
        %v2973 = vpop.f32.mrf.mxu0
        %v2974 = vpop.f32.mrf.mxu0
        %v2975 = vadd.f32 0.0, %v2974
        %v2976 = vpop.f32.mrf.mxu0
        %2977 = vmatprep.mubr.bf16.mxu0 0
        %2978 = vmatmul.mubr.bf16.gmra.mxu0 %v2777
        %v2979 = vpop.f32.mrf.mxu0
        %v2980 = vadd.f32 0.0, %v2979
        %v2981 = vpop.f32.mrf.mxu0
        %v2982 = vpop.f32.mrf.mxu0
        %v2983 = vadd.f32 0.0, %v2982
        %v2984 = vpop.f32.mrf.mxu0
        %2985 = vmatprep.mubr.bf16.mxu0 0
        %2986 = vmatmul.mubr.bf16.gmra.mxu0 %v2780
        %v2987 = vpop.f32.mrf.mxu0
        %v2988 = vadd.f32 0.0, %v2987
        %v2989 = vpop.f32.mrf.mxu0
        %v2990 = vpop.f32.mrf.mxu0
        %v2991 = vadd.f32 0.0, %v2990
        %v2992 = vpop.f32.mrf.mxu0
        %2993 = vmatprep.mubr.bf16.mxu0 0
        %2994 = vmatmul.mubr.bf16.gmra.mxu0 %v2783
        %v2995 = vpop.f32.mrf.mxu0
        %v2996 = vadd.f32 0.0, %v2995
        %v2997 = vpop.f32.mrf.mxu0
        %v2998 = vpop.f32.mrf.mxu0
        %v2999 = vadd.f32 0.0, %v2998
        %v3000 = vpop.f32.mrf.mxu0
        %3001 = vmatprep.mubr.bf16.mxu0 0
        %3002 = vmatmul.mubr.bf16.gmra.mxu0 %v2786
        %v3003 = vpop.f32.mrf.mxu0
        %v3004 = vadd.f32 0.0, %v3003
        %v3005 = vpop.f32.mrf.mxu0
        %v3006 = vpop.f32.mrf.mxu0
        %v3007 = vadd.f32 0.0, %v3006
        %v3008 = vpop.f32.mrf.mxu0
        %3009 = vmatprep.mubr.bf16.mxu0 0
        %3010 = vmatmul.mubr.bf16.gmra.mxu0 %v2789
        %v3011 = vpop.f32.mrf.mxu0
        %v3012 = vadd.f32 0.0, %v3011
        %v3013 = vpop.f32.mrf.mxu0
        %v3014 = vpop.f32.mrf.mxu0
        %v3015 = vadd.f32 0.0, %v3014
        %v3016 = vpop.f32.mrf.mxu0
        %3017 = vmatprep.mubr.bf16.mxu0 0
        %3018 = vmatmul.mubr.bf16.gmra.mxu0 %v2792
        %v3019 = vpop.f32.mrf.mxu0
        %v3020 = vadd.f32 0.0, %v3019
        %v3021 = vpop.f32.mrf.mxu0
        %v3022 = vpop.f32.mrf.mxu0
        %v3023 = vadd.f32 0.0, %v3022
        %v3024 = vpop.f32.mrf.mxu0
        %3025 = vmatprep.mubr.bf16.mxu0 0
        %3026 = vmatmul.mubr.bf16.gmra.mxu0 %v2795
        %v3027 = vpop.f32.mrf.mxu0
        %v3028 = vadd.f32 0.0, %v3027
        %v3029 = vpop.f32.mrf.mxu0
        %v3030 = vpop.f32.mrf.mxu0
        %v3031 = vadd.f32 0.0, %v3030
        %v3032 = vpop.f32.mrf.mxu0
        %3033 = vmatprep.mubr.bf16.mxu0 0
        %3034 = vmatmul.mubr.bf16.gmra.mxu0 %v2798
        %v3035 = vpop.f32.mrf.mxu0
        %v3036 = vadd.f32 0.0, %v3035
        %v3037 = vpop.f32.mrf.mxu0
        %v3038 = vpop.f32.mrf.mxu0
        %v3039 = vadd.f32 0.0, %v3038
        %v3040 = vpop.f32.mrf.mxu0
        %3041 = vmatprep.mubr.bf16.mxu0 0
        %3042 = vmatmul.mubr.bf16.gmra.mxu0 %v2801
        %v3043 = vpop.f32.mrf.mxu0
        %v3044 = vadd.f32 0.0, %v3043
        %v3045 = vpop.f32.mrf.mxu0
        %v3046 = vpop.f32.mrf.mxu0
        %v3047 = vadd.f32 0.0, %v3046
        %v3048 = vpop.f32.mrf.mxu0
        %3049 = vmatprep.mubr.bf16.mxu0 0
        %3050 = vmatmul.mubr.bf16.gmra.mxu0 %v2804
        %v3051 = vpop.f32.mrf.mxu0
        %v3052 = vadd.f32 0.0, %v3051
        %v3053 = vpop.f32.mrf.mxu0
        %v3054 = vpop.f32.mrf.mxu0
        %v3055 = vadd.f32 0.0, %v3054
        %v3056 = vpop.f32.mrf.mxu0
        %3057 = vmatprep.mubr.bf16.mxu0 0
        %3058 = vmatmul.mubr.bf16.gmra.mxu0 %v2807
        %v3059 = vpop.f32.mrf.mxu0
        %v3060 = vadd.f32 0.0, %v3059
        %v3061 = vpop.f32.mrf.mxu0
        %v3062 = vpop.f32.mrf.mxu0
        %v3063 = vpop.f32.mrf.mxu0
        %3064 = vdwg.mxu0
        %v3065 = vadd.f32 %v2397, %v2844
        %v3066 = vadd.f32 %v2398, %v2847
        %v3067 = vadd.f32 %v2399, %v2852
        %v3068 = vadd.f32 %v2400, %v2855
        %v3069 = vadd.f32 %v2401, %v2860
        %v3070 = vadd.f32 %v2402, %v2863
        %v3071 = vadd.f32 %v2403, %v2868
        %v3072 = vadd.f32 %v2404, %v2871
        %v3073 = vadd.f32 %v2405, %v2876
        %v3074 = vadd.f32 %v2406, %v2879
        %v3075 = vadd.f32 %v2407, %v2884
        %v3076 = vadd.f32 %v2408, %v2887
        %v3077 = vadd.f32 %v2409, %v2892
        %v3078 = vadd.f32 %v2410, %v2895
        %v3079 = vadd.f32 %v2411, %v2900
        %v3080 = vadd.f32 %v2412, %v2903
        %v3081 = vadd.f32 %v2413, %v2908
        %v3082 = vadd.f32 %v2414, %v2911
        %v3083 = vadd.f32 %v2415, %v2916
        %v3084 = vadd.f32 %v2416, %v2919
        %v3085 = vadd.f32 %v2417, %v2924
        %v3086 = vadd.f32 %v2418, %v2927
        %v3087 = vadd.f32 %v2419, %v2932
        %v3088 = vadd.f32 %v2420, %v2935
        %v3089 = vadd.f32 %v2421, %v2940
        %v3090 = vadd.f32 %v2422, %v2943
        %v3091 = vadd.f32 %v2423, %v2948
        %v3092 = vadd.f32 %v2424, %v2951
        %v3093 = vadd.f32 %v2425, %v2956
        %v3094 = vadd.f32 %v2426, %v2959
        %v3095 = vadd.f32 %v2427, %v2964
        %v3096 = vadd.f32 %v2428, %v2967
        %v3097 = vadd.f32 %v2429, %v2972
        %v3098 = vadd.f32 %v2430, %v2975
        %v3099 = vadd.f32 %v2431, %v2980
        %v3100 = vadd.f32 %v2432, %v2983
        %v3101 = vadd.f32 %v2433, %v2988
        %v3102 = vadd.f32 %v2434, %v2991
        %v3103 = vadd.f32 %v2435, %v2996
        %v3104 = vadd.f32 %v2436, %v2999
        %v3105 = vadd.f32 %v2437, %v3004
        %v3106 = vadd.f32 %v2438, %v3007
        %v3107 = vadd.f32 %v2439, %v3012
        %v3108 = vadd.f32 %v2440, %v3015
        %v3109 = vadd.f32 %v2441, %v3020
        %v3110 = vadd.f32 %v2442, %v3023
        %v3111 = vadd.f32 %v2443, %v3028
        %v3112 = vadd.f32 %v2444, %v3031
        %v3113 = vadd.f32 %v2445, %v3036
        %v3114 = vadd.f32 %v2446, %v3039
        %v3115 = vadd.f32 %v2447, %v3044
        %v3116 = vadd.f32 %v2448, %v3047
        %v3117 = vadd.f32 %v2449, %v3052
        %v3118 = vadd.f32 %v2450, %v3055
        %v3119 = vadd.f32 %v2451, %v3060
        %s3120 = scalar_lea.vmem %s1, 80
        %v3121 = vld [vmem:[%s3120] sm:$0xf]
        %v3122 = vld [vmem:[%s3120 + $0x4] sm:$0xf]
        %v3123 = vld [vmem:[%s3120 + $0x8] sm:$0xf]
        %v3124 = vld [vmem:[%s3120 + $0xc] sm:$0xf]
        %v3125 = vpack.c.b16 %v1907, %v1906
        %v3126 = vpack.c.b16 %v1909, %v1908
        %v3127 = vpack.c.b16 %v1911, %v1910
        %v3128 = vpack.c.b16 %v1913, %v1912
        %v3129 = vpack.c.b16 %v1915, %v1914
        %v3130 = vpack.c.b16 %v1917, %v1916
        %v3131 = vpack.c.b16 %v1919, %v1918
        %v3132 = vpack.c.b16 %v1921, %v1920
        %v3133 = vpack.c.b16 %v1923, %v1922
        %v3134 = vpack.c.b16 %v1925, %v1924
        %v3135 = vpack.c.b16 %v1927, %v1926
        %v3136 = vpack.c.b16 %v1929, %v1928
        %v3137 = vpack.c.b16 %v1931, %v1930
        %v3138 = vpack.c.b16 %v1933, %v1932
        %v3139 = vpack.c.b16 %v1935, %v1934
        %v3140 = vpack.c.b16 %v1937, %v1936
        %v3141 = vpack.c.b16 %v1939, %v1938
        %v3142 = vpack.c.b16 %v1941, %v1940
        %v3143 = vpack.c.b16 %v1943, %v1942
        %v3144 = vpack.c.b16 %v1945, %v1944
        %v3145 = vpack.c.b16 %v1947, %v1946
        %v3146 = vpack.c.b16 %v1949, %v1948
        %v3147 = vpack.c.b16 %v1951, %v1950
        %v3148 = vpack.c.b16 %v1953, %v1952
        %v3149 = vpack.c.b16 %v1955, %v1954
        %v3150 = vpack.c.b16 %v1957, %v1956
        %v3151 = vpack.c.b16 %v1959, %v1958
        %v3152 = vpack.c.b16 %v2459, %v2459
        %v3157 = vunpack.c.l.b16 %v3121
        %v3158 = vunpack.c.l.b16 %v3122
        %v3159 = vunpack.c.l.b16 %v3123
        %v3160 = vunpack.c.l.b16 %v3124
        %v3161 = vpack.c.b16 %v3158, %v3157
        %v3162 = vpack.c.b16 %v3160, %v3159
        %v3166 = vsel %vm649, %v3125, 0
        %v3169 = vsel %vm649, %v3126, 0
        %v3172 = vsel %vm649, %v3127, 0
        %v3175 = vsel %vm649, %v3128, 0
        %v3178 = vsel %vm649, %v3129, 0
        %v3181 = vsel %vm649, %v3130, 0
        %v3184 = vsel %vm649, %v3131, 0
        %v3187 = vsel %vm649, %v3132, 0
        %v3190 = vsel %vm649, %v3133, 0
        %v3193 = vsel %vm649, %v3134, 0
        %v3196 = vsel %vm649, %v3135, 0
        %v3199 = vsel %vm649, %v3136, 0
        %v3202 = vsel %vm649, %v3137, 0
        %v3205 = vsel %vm649, %v3138, 0
        %v3208 = vsel %vm649, %v3139, 0
        %v3211 = vsel %vm649, %v3140, 0
        %v3214 = vsel %vm649, %v3141, 0
        %v3217 = vsel %vm649, %v3142, 0
        %v3220 = vsel %vm649, %v3143, 0
        %v3223 = vsel %vm649, %v3144, 0
        %v3226 = vsel %vm649, %v3145, 0
        %v3229 = vsel %vm649, %v3146, 0
        %v3232 = vsel %vm649, %v3147, 0
        %v3235 = vsel %vm649, %v3148, 0
        %v3238 = vsel %vm649, %v3149, 0
        %v3241 = vsel %vm649, %v3150, 0
        %v3244 = vsel %vm649, %v3151, 0
        %v3247 = vsel %vm649, %v3152, 0
        %3249 = vmatprep.subr.bf16.mxu0 0
        %3250 = vmatpush1.bf16.msra.mxu0 0
        %3251 = vmatprep.subr.bf16.mxu0 0
        %3252 = vmatpush1.bf16.msra.mxu0 0
        %3253 = vmatprep.subr.bf16.mxu0 0
        %3254 = vmatpush1.bf16.msra.mxu0 0
        %3255 = vmatprep.subr.bf16.mxu0 0
        %3256 = vmatpush1.bf16.msra.mxu0 0
        %3257 = vmatprep.subr.bf16.mxu0 0
        %3258 = vmatpush1.bf16.msra.mxu0 0
        %3259 = vmatprep.subr.bf16.mxu0 0
        %3260 = vmatpush1.bf16.msra.mxu0 0
        %3261 = vmatprep.subr.bf16.mxu0 0
        %3262 = vmatpush1.bf16.msra.mxu0 %v3162
        %3263 = vmatprep.subr.bf16.mxu0 0
        %3264 = vmatpush1.bf16.msra.mxu0 %v3161
        %3265 = vmatprep.subr.bf16.mxu0 0
        %3266 = vmatpush2.bf16.msra.mxu0 0
        %3267 = vmatprep.subr.bf16.mxu0 0
        %3268 = vmatpush2.bf16.msra.mxu0 0
        %3269 = vmatprep.subr.bf16.mxu0 0
        %3270 = vmatpush2.bf16.msra.mxu0 0
        %3271 = vmatprep.subr.bf16.mxu0 0
        %3272 = vmatpush2.bf16.msra.mxu0 0
        %3273 = vmatprep.subr.bf16.mxu0 0
        %3274 = vmatpush2.bf16.msra.mxu0 0
        %3275 = vmatprep.subr.bf16.mxu0 0
        %3276 = vmatpush2.bf16.msra.mxu0 0
        %3277 = vmatprep.subr.bf16.mxu0 0
        %3278 = vmatpush2.bf16.msra.mxu0 0
        %3279 = vmatprep.subr.bf16.mxu0 0
        %3280 = vmatpush2.bf16.msra.mxu0 0
        %3281 = vmatprep.mubr.bf16.mxu0 0
        %3282 = vmatmul.mubr.bf16.gmra.mxu0 %v3166
        %v3283 = vpop.f32.mrf.mxu0
        %v3284 = vadd.f32 0.0, %v3283
        %v3285 = vpop.f32.mrf.mxu0
        %v3286 = vpop.f32.mrf.mxu0
        %v3287 = vadd.f32 0.0, %v3286
        %v3288 = vpop.f32.mrf.mxu0
        %3289 = vmatprep.mubr.bf16.mxu0 0
        %3290 = vmatmul.mubr.bf16.gmra.mxu0 %v3169
        %v3291 = vpop.f32.mrf.mxu0
        %v3292 = vadd.f32 0.0, %v3291
        %v3293 = vpop.f32.mrf.mxu0
        %v3294 = vpop.f32.mrf.mxu0
        %v3295 = vadd.f32 0.0, %v3294
        %v3296 = vpop.f32.mrf.mxu0
        %3297 = vmatprep.mubr.bf16.mxu0 0
        %3298 = vmatmul.mubr.bf16.gmra.mxu0 %v3172
        %v3299 = vpop.f32.mrf.mxu0
        %v3300 = vadd.f32 0.0, %v3299
        %v3301 = vpop.f32.mrf.mxu0
        %v3302 = vpop.f32.mrf.mxu0
        %v3303 = vadd.f32 0.0, %v3302
        %v3304 = vpop.f32.mrf.mxu0
        %3305 = vmatprep.mubr.bf16.mxu0 0
        %3306 = vmatmul.mubr.bf16.gmra.mxu0 %v3175
        %v3307 = vpop.f32.mrf.mxu0
        %v3308 = vadd.f32 0.0, %v3307
        %v3309 = vpop.f32.mrf.mxu0
        %v3310 = vpop.f32.mrf.mxu0
        %v3311 = vadd.f32 0.0, %v3310
        %v3312 = vpop.f32.mrf.mxu0
        %3313 = vmatprep.mubr.bf16.mxu0 0
        %3314 = vmatmul.mubr.bf16.gmra.mxu0 %v3178
        %v3315 = vpop.f32.mrf.mxu0
        %v3316 = vadd.f32 0.0, %v3315
        %v3317 = vpop.f32.mrf.mxu0
        %v3318 = vpop.f32.mrf.mxu0
        %v3319 = vadd.f32 0.0, %v3318
        %v3320 = vpop.f32.mrf.mxu0
        %3321 = vmatprep.mubr.bf16.mxu0 0
        %3322 = vmatmul.mubr.bf16.gmra.mxu0 %v3181
        %v3323 = vpop.f32.mrf.mxu0
        %v3324 = vadd.f32 0.0, %v3323
        %v3325 = vpop.f32.mrf.mxu0
        %v3326 = vpop.f32.mrf.mxu0
        %v3327 = vadd.f32 0.0, %v3326
        %v3328 = vpop.f32.mrf.mxu0
        %3329 = vmatprep.mubr.bf16.mxu0 0
        %3330 = vmatmul.mubr.bf16.gmra.mxu0 %v3184
        %v3331 = vpop.f32.mrf.mxu0
        %v3332 = vadd.f32 0.0, %v3331
        %v3333 = vpop.f32.mrf.mxu0
        %v3334 = vpop.f32.mrf.mxu0
        %v3335 = vadd.f32 0.0, %v3334
        %v3336 = vpop.f32.mrf.mxu0
        %3337 = vmatprep.mubr.bf16.mxu0 0
        %3338 = vmatmul.mubr.bf16.gmra.mxu0 %v3187
        %v3339 = vpop.f32.mrf.mxu0
        %v3340 = vadd.f32 0.0, %v3339
        %v3341 = vpop.f32.mrf.mxu0
        %v3342 = vpop.f32.mrf.mxu0
        %v3343 = vadd.f32 0.0, %v3342
        %v3344 = vpop.f32.mrf.mxu0
        %3345 = vmatprep.mubr.bf16.mxu0 0
        %3346 = vmatmul.mubr.bf16.gmra.mxu0 %v3190
        %v3347 = vpop.f32.mrf.mxu0
        %v3348 = vadd.f32 0.0, %v3347
        %v3349 = vpop.f32.mrf.mxu0
        %v3350 = vpop.f32.mrf.mxu0
        %v3351 = vadd.f32 0.0, %v3350
        %v3352 = vpop.f32.mrf.mxu0
        %3353 = vmatprep.mubr.bf16.mxu0 0
        %3354 = vmatmul.mubr.bf16.gmra.mxu0 %v3193
        %v3355 = vpop.f32.mrf.mxu0
        %v3356 = vadd.f32 0.0, %v3355
        %v3357 = vpop.f32.mrf.mxu0
        %v3358 = vpop.f32.mrf.mxu0
        %v3359 = vadd.f32 0.0, %v3358
        %v3360 = vpop.f32.mrf.mxu0
        %3361 = vmatprep.mubr.bf16.mxu0 0
        %3362 = vmatmul.mubr.bf16.gmra.mxu0 %v3196
        %v3363 = vpop.f32.mrf.mxu0
        %v3364 = vadd.f32 0.0, %v3363
        %v3365 = vpop.f32.mrf.mxu0
        %v3366 = vpop.f32.mrf.mxu0
        %v3367 = vadd.f32 0.0, %v3366
        %v3368 = vpop.f32.mrf.mxu0
        %3369 = vmatprep.mubr.bf16.mxu0 0
        %3370 = vmatmul.mubr.bf16.gmra.mxu0 %v3199
        %v3371 = vpop.f32.mrf.mxu0
        %v3372 = vadd.f32 0.0, %v3371
        %v3373 = vpop.f32.mrf.mxu0
        %v3374 = vpop.f32.mrf.mxu0
        %v3375 = vadd.f32 0.0, %v3374
        %v3376 = vpop.f32.mrf.mxu0
        %3377 = vmatprep.mubr.bf16.mxu0 0
        %3378 = vmatmul.mubr.bf16.gmra.mxu0 %v3202
        %v3379 = vpop.f32.mrf.mxu0
        %v3380 = vadd.f32 0.0, %v3379
        %v3381 = vpop.f32.mrf.mxu0
        %v3382 = vpop.f32.mrf.mxu0
        %v3383 = vadd.f32 0.0, %v3382
        %v3384 = vpop.f32.mrf.mxu0
        %3385 = vmatprep.mubr.bf16.mxu0 0
        %3386 = vmatmul.mubr.bf16.gmra.mxu0 %v3205
        %v3387 = vpop.f32.mrf.mxu0
        %v3388 = vadd.f32 0.0, %v3387
        %v3389 = vpop.f32.mrf.mxu0
        %v3390 = vpop.f32.mrf.mxu0
        %v3391 = vadd.f32 0.0, %v3390
        %v3392 = vpop.f32.mrf.mxu0
        %3393 = vmatprep.mubr.bf16.mxu0 0
        %3394 = vmatmul.mubr.bf16.gmra.mxu0 %v3208
        %v3395 = vpop.f32.mrf.mxu0
        %v3396 = vadd.f32 0.0, %v3395
        %v3397 = vpop.f32.mrf.mxu0
        %v3398 = vpop.f32.mrf.mxu0
        %v3399 = vadd.f32 0.0, %v3398
        %v3400 = vpop.f32.mrf.mxu0
        %3401 = vmatprep.mubr.bf16.mxu0 0
        %3402 = vmatmul.mubr.bf16.gmra.mxu0 %v3211
        %v3403 = vpop.f32.mrf.mxu0
        %v3404 = vadd.f32 0.0, %v3403
        %v3405 = vpop.f32.mrf.mxu0
        %v3406 = vpop.f32.mrf.mxu0
        %v3407 = vadd.f32 0.0, %v3406
        %v3408 = vpop.f32.mrf.mxu0
        %3409 = vmatprep.mubr.bf16.mxu0 0
        %3410 = vmatmul.mubr.bf16.gmra.mxu0 %v3214
        %v3411 = vpop.f32.mrf.mxu0
        %v3412 = vadd.f32 0.0, %v3411
        %v3413 = vpop.f32.mrf.mxu0
        %v3414 = vpop.f32.mrf.mxu0
        %v3415 = vadd.f32 0.0, %v3414
        %v3416 = vpop.f32.mrf.mxu0
        %3417 = vmatprep.mubr.bf16.mxu0 0
        %3418 = vmatmul.mubr.bf16.gmra.mxu0 %v3217
        %v3419 = vpop.f32.mrf.mxu0
        %v3420 = vadd.f32 0.0, %v3419
        %v3421 = vpop.f32.mrf.mxu0
        %v3422 = vpop.f32.mrf.mxu0
        %v3423 = vadd.f32 0.0, %v3422
        %v3424 = vpop.f32.mrf.mxu0
        %3425 = vmatprep.mubr.bf16.mxu0 0
        %3426 = vmatmul.mubr.bf16.gmra.mxu0 %v3220
        %v3427 = vpop.f32.mrf.mxu0
        %v3428 = vadd.f32 0.0, %v3427
        %v3429 = vpop.f32.mrf.mxu0
        %v3430 = vpop.f32.mrf.mxu0
        %v3431 = vadd.f32 0.0, %v3430
        %v3432 = vpop.f32.mrf.mxu0
        %3433 = vmatprep.mubr.bf16.mxu0 0
        %3434 = vmatmul.mubr.bf16.gmra.mxu0 %v3223
        %v3435 = vpop.f32.mrf.mxu0
        %v3436 = vadd.f32 0.0, %v3435
        %v3437 = vpop.f32.mrf.mxu0
        %v3438 = vpop.f32.mrf.mxu0
        %v3439 = vadd.f32 0.0, %v3438
        %v3440 = vpop.f32.mrf.mxu0
        %3441 = vmatprep.mubr.bf16.mxu0 0
        %3442 = vmatmul.mubr.bf16.gmra.mxu0 %v3226
        %v3443 = vpop.f32.mrf.mxu0
        %v3444 = vadd.f32 0.0, %v3443
        %v3445 = vpop.f32.mrf.mxu0
        %v3446 = vpop.f32.mrf.mxu0
        %v3447 = vadd.f32 0.0, %v3446
        %v3448 = vpop.f32.mrf.mxu0
        %3449 = vmatprep.mubr.bf16.mxu0 0
        %3450 = vmatmul.mubr.bf16.gmra.mxu0 %v3229
        %v3451 = vpop.f32.mrf.mxu0
        %v3452 = vadd.f32 0.0, %v3451
        %v3453 = vpop.f32.mrf.mxu0
        %v3454 = vpop.f32.mrf.mxu0
        %v3455 = vadd.f32 0.0, %v3454
        %v3456 = vpop.f32.mrf.mxu0
        %3457 = vmatprep.mubr.bf16.mxu0 0
        %3458 = vmatmul.mubr.bf16.gmra.mxu0 %v3232
        %v3459 = vpop.f32.mrf.mxu0
        %v3460 = vadd.f32 0.0, %v3459
        %v3461 = vpop.f32.mrf.mxu0
        %v3462 = vpop.f32.mrf.mxu0
        %v3463 = vadd.f32 0.0, %v3462
        %v3464 = vpop.f32.mrf.mxu0
        %3465 = vmatprep.mubr.bf16.mxu0 0
        %3466 = vmatmul.mubr.bf16.gmra.mxu0 %v3235
        %v3467 = vpop.f32.mrf.mxu0
        %v3468 = vadd.f32 0.0, %v3467
        %v3469 = vpop.f32.mrf.mxu0
        %v3470 = vpop.f32.mrf.mxu0
        %v3471 = vadd.f32 0.0, %v3470
        %v3472 = vpop.f32.mrf.mxu0
        %3473 = vmatprep.mubr.bf16.mxu0 0
        %3474 = vmatmul.mubr.bf16.gmra.mxu0 %v3238
        %v3475 = vpop.f32.mrf.mxu0
        %v3476 = vadd.f32 0.0, %v3475
        %v3477 = vpop.f32.mrf.mxu0
        %v3478 = vpop.f32.mrf.mxu0
        %v3479 = vadd.f32 0.0, %v3478
        %v3480 = vpop.f32.mrf.mxu0
        %3481 = vmatprep.mubr.bf16.mxu0 0
        %3482 = vmatmul.mubr.bf16.gmra.mxu0 %v3241
        %v3483 = vpop.f32.mrf.mxu0
        %v3484 = vadd.f32 0.0, %v3483
        %v3485 = vpop.f32.mrf.mxu0
        %v3486 = vpop.f32.mrf.mxu0
        %v3487 = vadd.f32 0.0, %v3486
        %v3488 = vpop.f32.mrf.mxu0
        %3489 = vmatprep.mubr.bf16.mxu0 0
        %3490 = vmatmul.mubr.bf16.gmra.mxu0 %v3244
        %v3491 = vpop.f32.mrf.mxu0
        %v3492 = vadd.f32 0.0, %v3491
        %v3493 = vpop.f32.mrf.mxu0
        %v3494 = vpop.f32.mrf.mxu0
        %v3495 = vadd.f32 0.0, %v3494
        %v3496 = vpop.f32.mrf.mxu0
        %3497 = vmatprep.mubr.bf16.mxu0 0
        %3498 = vmatmul.mubr.bf16.gmra.mxu0 %v3247
        %v3499 = vpop.f32.mrf.mxu0
        %v3500 = vadd.f32 0.0, %v3499
        %v3501 = vpop.f32.mrf.mxu0
        %v3502 = vpop.f32.mrf.mxu0
        %v3503 = vpop.f32.mrf.mxu0
        %3504 = vdwg.mxu0
        %v3505 = vadd.f32 %v3065, %v3284
        %v3506 = vadd.f32 %v3066, %v3287
        %v3507 = vadd.f32 %v3067, %v3292
        %v3508 = vadd.f32 %v3068, %v3295
        %v3509 = vadd.f32 %v3069, %v3300
        %v3510 = vadd.f32 %v3070, %v3303
        %v3511 = vadd.f32 %v3071, %v3308
        %v3512 = vadd.f32 %v3072, %v3311
        %v3513 = vadd.f32 %v3073, %v3316
        %v3514 = vadd.f32 %v3074, %v3319
        %v3515 = vadd.f32 %v3075, %v3324
        %v3516 = vadd.f32 %v3076, %v3327
        %v3517 = vadd.f32 %v3077, %v3332
        %v3518 = vadd.f32 %v3078, %v3335
        %v3519 = vadd.f32 %v3079, %v3340
        %v3520 = vadd.f32 %v3080, %v3343
        %v3521 = vadd.f32 %v3081, %v3348
        %v3522 = vadd.f32 %v3082, %v3351
        %v3523 = vadd.f32 %v3083, %v3356
        %v3524 = vadd.f32 %v3084, %v3359
        %v3525 = vadd.f32 %v3085, %v3364
        %v3526 = vadd.f32 %v3086, %v3367
        %v3527 = vadd.f32 %v3087, %v3372
        %v3528 = vadd.f32 %v3088, %v3375
        %v3529 = vadd.f32 %v3089, %v3380
        %v3530 = vadd.f32 %v3090, %v3383
        %v3531 = vadd.f32 %v3091, %v3388
        %v3532 = vadd.f32 %v3092, %v3391
        %v3533 = vadd.f32 %v3093, %v3396
        %v3534 = vadd.f32 %v3094, %v3399
        %v3535 = vadd.f32 %v3095, %v3404
        %v3536 = vadd.f32 %v3096, %v3407
        %v3537 = vadd.f32 %v3097, %v3412
        %v3538 = vadd.f32 %v3098, %v3415
        %v3539 = vadd.f32 %v3099, %v3420
        %v3540 = vadd.f32 %v3100, %v3423
        %v3541 = vadd.f32 %v3101, %v3428
        %v3542 = vadd.f32 %v3102, %v3431
        %v3543 = vadd.f32 %v3103, %v3436
        %v3544 = vadd.f32 %v3104, %v3439
        %v3545 = vadd.f32 %v3105, %v3444
        %v3546 = vadd.f32 %v3106, %v3447
        %v3547 = vadd.f32 %v3107, %v3452
        %v3548 = vadd.f32 %v3108, %v3455
        %v3549 = vadd.f32 %v3109, %v3460
        %v3550 = vadd.f32 %v3110, %v3463
        %v3551 = vadd.f32 %v3111, %v3468
        %v3552 = vadd.f32 %v3112, %v3471
        %v3553 = vadd.f32 %v3113, %v3476
        %v3554 = vadd.f32 %v3114, %v3479
        %v3555 = vadd.f32 %v3115, %v3484
        %v3556 = vadd.f32 %v3116, %v3487
        %v3557 = vadd.f32 %v3117, %v3492
        %v3558 = vadd.f32 %v3118, %v3495
        %v3559 = vadd.f32 %v3119, %v3500
        %v3560 = vld [vmem:[%s206 + $0x14] sm:$0xc]
        %v3561 = vld [vmem:[%s206 + $0x18] sm:$0xf]
        %v3562 = vld [vmem:[%s206 + $0x1c] sm:$0xf]
        %v3563 = vld [vmem:[%s206 + $0x20] sm:$0xf]
        %v3564 = vld [vmem:[%s206 + $0x24] sm:$0xf]
        %v3565 = vld [vmem:[%s206 + $0x28] sm:$0xf]
        %v3566 = vld [vmem:[%s206 + $0x2c] sm:$0xf]
        %v3567 = vld [vmem:[%s206 + $0x30] sm:$0xf]
        %v3568 = vld [vmem:[%s206 + $0x34] sm:$0xf]
        %v3569 = vld [vmem:[%s206 + $0x38] sm:$0xf]
        %v3570 = vld [vmem:[%s206 + $0x3c] sm:$0xf]
        %v3571 = vld [vmem:[%s206 + $0x40] sm:$0xf]
        %v3572 = vld [vmem:[%s206 + $0x44] sm:$0xf]
        %v3573 = vld [vmem:[%s206 + $0x48] sm:$0xf]
        %v3574 = vld [vmem:[%s206 + $0x4c] sm:$0xf]
        %v3575 = vld [vmem:[%s206 + $0x50] sm:$0xf]
        %v3576 = vld [vmem:[%s206 + $0x54] sm:$0xf]
        %v3577 = vld [vmem:[%s206 + $0x58] sm:$0xf]
        %v3578 = vld [vmem:[%s206 + $0x5c] sm:$0xf]
        %v3579 = vld [vmem:[%s206 + $0x60] sm:$0xf]
        %v3580 = vld [vmem:[%s206 + $0x64] sm:$0xf]
        %v3581 = vld [vmem:[%s206 + $0x68] sm:$0xf]
        %v3582 = vld [vmem:[%s206 + $0x6c] sm:$0xf]
        %v3583 = vld [vmem:[%s206 + $0x70] sm:$0xf]
        %v3584 = vld [vmem:[%s206 + $0x74] sm:$0xf]
        %v3585 = vld [vmem:[%s206 + $0x78] sm:$0xf]
        %v3586 = vld [vmem:[%s206 + $0x7c] sm:$0xf]
        %v3587 = vld [vmem:[%s206 + $0x80] sm:$0xf]
        %v3588 = vld [vmem:[%s206 + $0x84] sm:$0xf]
        %v3589 = vld [vmem:[%s206 + $0x88] sm:$0xf]
        %v3590 = vld [vmem:[%s206 + $0x8c] sm:$0xf]
        %v3591 = vld [vmem:[%s206 + $0x90] sm:$0xf]
        %v3592 = vld [vmem:[%s206 + $0x94] sm:$0xf]
        %v3593 = vld [vmem:[%s206 + $0x98] sm:$0xf]
        %v3594 = vld [vmem:[%s206 + $0x9c] sm:$0xf]
        %v3595 = vld [vmem:[%s206 + $0xa0] sm:$0xf]
        %v3596 = vld [vmem:[%s206 + $0xa4] sm:$0xf]
        %v3597 = vld [vmem:[%s206 + $0xa8] sm:$0xf]
        %v3598 = vld [vmem:[%s206 + $0xac] sm:$0xf]
        %v3599 = vld [vmem:[%s206 + $0xb0] sm:$0xf]
        %v3600 = vld [vmem:[%s206 + $0xb4] sm:$0xf]
        %v3601 = vld [vmem:[%s206 + $0xb8] sm:$0xf]
        %v3602 = vld [vmem:[%s206 + $0xbc] sm:$0xf]
        %v3603 = vld [vmem:[%s206 + $0xc0] sm:$0xf]
        %v3604 = vld [vmem:[%s206 + $0xc4] sm:$0xf]
        %v3605 = vld [vmem:[%s206 + $0xc8] sm:$0xf]
        %v3606 = vld [vmem:[%s206 + $0xcc] sm:$0xf]
        %v3607 = vld [vmem:[%s206 + $0xd0] sm:$0xf]
        %v3608 = vld [vmem:[%s206 + $0xd4] sm:$0xf]
        %v3609 = vld [vmem:[%s206 + $0xd8] sm:$0xf]
        %v3610 = vld [vmem:[%s206 + $0xdc] sm:$0xf]
        %v3611 = vld [vmem:[%s206 + $0xe0] sm:$0xf]
        %v3612 = vld [vmem:[%s206 + $0xe4] sm:$0xf]
        %v3613 = vld [vmem:[%s206 + $0xe8] sm:$0xf]
        %v3614 = vld [vmem:[%s206 + $0xec] sm:$0xf]
        %v3615 = vld [vmem:[%s206 + $0xf0] sm:$0x3]
        %s3616 = scalar_lea.vmem %s1, 96
        %v3617 = vld [vmem:[%s3616] sm:$0xf]
        %v3618 = vld [vmem:[%s3616 + $0x4] sm:$0xf]
        %v3619 = vld [vmem:[%s3616 + $0x8] sm:$0xf]
        %v3620 = vld [vmem:[%s3616 + $0xc] sm:$0xf]
        %v3677 = vunpack.c.l.b16 %v3560
        %v3678 = vunpack.c.l.b16 %v3561
        %v3679 = vunpack.c.l.b16 %v3562
        %v3680 = vunpack.c.l.b16 %v3563
        %v3681 = vunpack.c.l.b16 %v3564
        %v3682 = vunpack.c.l.b16 %v3565
        %v3683 = vunpack.c.l.b16 %v3566
        %v3684 = vunpack.c.l.b16 %v3567
        %v3685 = vunpack.c.l.b16 %v3568
        %v3686 = vunpack.c.l.b16 %v3569
        %v3687 = vunpack.c.l.b16 %v3570
        %v3688 = vunpack.c.l.b16 %v3571
        %v3689 = vunpack.c.l.b16 %v3572
        %v3690 = vunpack.c.l.b16 %v3573
        %v3691 = vunpack.c.l.b16 %v3574
        %v3692 = vunpack.c.l.b16 %v3575
        %v3693 = vunpack.c.l.b16 %v3576
        %v3694 = vunpack.c.l.b16 %v3577
        %v3695 = vunpack.c.l.b16 %v3578
        %v3696 = vunpack.c.l.b16 %v3579
        %v3697 = vunpack.c.l.b16 %v3580
        %v3698 = vunpack.c.l.b16 %v3581
        %v3699 = vunpack.c.l.b16 %v3582
        %v3700 = vunpack.c.l.b16 %v3583
        %v3701 = vunpack.c.l.b16 %v3584
        %v3702 = vunpack.c.l.b16 %v3585
        %v3703 = vunpack.c.l.b16 %v3586
        %v3704 = vunpack.c.l.b16 %v3587
        %v3705 = vunpack.c.l.b16 %v3588
        %v3706 = vunpack.c.l.b16 %v3589
        %v3707 = vunpack.c.l.b16 %v3590
        %v3708 = vunpack.c.l.b16 %v3591
        %v3709 = vunpack.c.l.b16 %v3592
        %v3710 = vunpack.c.l.b16 %v3593
        %v3711 = vunpack.c.l.b16 %v3594
        %v3712 = vunpack.c.l.b16 %v3595
        %v3713 = vunpack.c.l.b16 %v3596
        %v3714 = vunpack.c.l.b16 %v3597
        %v3715 = vunpack.c.l.b16 %v3598
        %v3716 = vunpack.c.l.b16 %v3599
        %v3717 = vunpack.c.l.b16 %v3600
        %v3718 = vunpack.c.l.b16 %v3601
        %v3719 = vunpack.c.l.b16 %v3602
        %v3720 = vunpack.c.l.b16 %v3603
        %v3721 = vunpack.c.l.b16 %v3604
        %v3722 = vunpack.c.l.b16 %v3605
        %v3723 = vunpack.c.l.b16 %v3606
        %v3724 = vunpack.c.l.b16 %v3607
        %v3725 = vunpack.c.l.b16 %v3608
        %v3726 = vunpack.c.l.b16 %v3609
        %v3727 = vunpack.c.l.b16 %v3610
        %v3728 = vunpack.c.l.b16 %v3611
        %v3729 = vunpack.c.l.b16 %v3612
        %v3730 = vunpack.c.l.b16 %v3613
        %v3731 = vunpack.c.l.b16 %v3614
        %v3732 = vunpack.c.l.b16 %v3615
        %v3733 = vpack.c.b16 %v3678, %v3677
        %v3734 = vpack.c.b16 %v3680, %v3679
        %v3735 = vpack.c.b16 %v3682, %v3681
        %v3736 = vpack.c.b16 %v3684, %v3683
        %v3737 = vpack.c.b16 %v3686, %v3685
        %v3738 = vpack.c.b16 %v3688, %v3687
        %v3739 = vpack.c.b16 %v3690, %v3689
        %v3740 = vpack.c.b16 %v3692, %v3691
        %v3741 = vpack.c.b16 %v3694, %v3693
        %v3742 = vpack.c.b16 %v3696, %v3695
        %v3743 = vpack.c.b16 %v3698, %v3697
        %v3744 = vpack.c.b16 %v3700, %v3699
        %v3745 = vpack.c.b16 %v3702, %v3701
        %v3746 = vpack.c.b16 %v3704, %v3703
        %v3747 = vpack.c.b16 %v3706, %v3705
        %v3748 = vpack.c.b16 %v3708, %v3707
        %v3749 = vpack.c.b16 %v3710, %v3709
        %v3750 = vpack.c.b16 %v3712, %v3711
        %v3751 = vpack.c.b16 %v3714, %v3713
        %v3752 = vpack.c.b16 %v3716, %v3715
        %v3753 = vpack.c.b16 %v3718, %v3717
        %v3754 = vpack.c.b16 %v3720, %v3719
        %v3755 = vpack.c.b16 %v3722, %v3721
        %v3756 = vpack.c.b16 %v3724, %v3723
        %v3757 = vpack.c.b16 %v3726, %v3725
        %v3758 = vpack.c.b16 %v3728, %v3727
        %v3759 = vpack.c.b16 %v3730, %v3729
        %v3760 = vpack.c.b16 %v3732, %v3731
        %vm3761 = vcmask 1045504
        %v3762 = vrot.slane %v3733, 2
        %v3763 = vrot.slane %v3734, 2
        %v3764 = vsel %vm3761, %v3762, %v3763
        %v3765 = vrot.slane %v3735, 2
        %v3766 = vsel %vm3761, %v3763, %v3765
        %v3767 = vrot.slane %v3736, 2
        %v3768 = vsel %vm3761, %v3765, %v3767
        %v3769 = vrot.slane %v3737, 2
        %v3770 = vsel %vm3761, %v3767, %v3769
        %v3771 = vrot.slane %v3738, 2
        %v3772 = vsel %vm3761, %v3769, %v3771
        %v3773 = vrot.slane %v3739, 2
        %v3774 = vsel %vm3761, %v3771, %v3773
        %v3775 = vrot.slane %v3740, 2
        %v3776 = vsel %vm3761, %v3773, %v3775
        %v3777 = vrot.slane %v3741, 2
        %v3778 = vsel %vm3761, %v3775, %v3777
        %v3779 = vrot.slane %v3742, 2
        %v3780 = vsel %vm3761, %v3777, %v3779
        %v3781 = vrot.slane %v3743, 2
        %v3782 = vsel %vm3761, %v3779, %v3781
        %v3783 = vrot.slane %v3744, 2
        %v3784 = vsel %vm3761, %v3781, %v3783
        %v3785 = vrot.slane %v3745, 2
        %v3786 = vsel %vm3761, %v3783, %v3785
        %v3787 = vrot.slane %v3746, 2
        %v3788 = vsel %vm3761, %v3785, %v3787
        %v3789 = vrot.slane %v3747, 2
        %v3790 = vsel %vm3761, %v3787, %v3789
        %v3791 = vrot.slane %v3748, 2
        %v3792 = vsel %vm3761, %v3789, %v3791
        %v3793 = vrot.slane %v3749, 2
        %v3794 = vsel %vm3761, %v3791, %v3793
        %v3795 = vrot.slane %v3750, 2
        %v3796 = vsel %vm3761, %v3793, %v3795
        %v3797 = vrot.slane %v3751, 2
        %v3798 = vsel %vm3761, %v3795, %v3797
        %v3799 = vrot.slane %v3752, 2
        %v3800 = vsel %vm3761, %v3797, %v3799
        %v3801 = vrot.slane %v3753, 2
        %v3802 = vsel %vm3761, %v3799, %v3801
        %v3803 = vrot.slane %v3754, 2
        %v3804 = vsel %vm3761, %v3801, %v3803
        %v3805 = vrot.slane %v3755, 2
        %v3806 = vsel %vm3761, %v3803, %v3805
        %v3807 = vrot.slane %v3756, 2
        %v3808 = vsel %vm3761, %v3805, %v3807
        %v3809 = vrot.slane %v3757, 2
        %v3810 = vsel %vm3761, %v3807, %v3809
        %v3811 = vrot.slane %v3758, 2
        %v3812 = vsel %vm3761, %v3809, %v3811
        %v3813 = vrot.slane %v3759, 2
        %v3814 = vsel %vm3761, %v3811, %v3813
        %v3815 = vrot.slane %v3760, 2
        %v3816 = vsel %vm3761, %v3813, %v3815
        %v3821 = vunpack.c.l.b16 %v3617
        %v3822 = vunpack.c.l.b16 %v3618
        %v3823 = vunpack.c.l.b16 %v3619
        %v3824 = vunpack.c.l.b16 %v3620
        %v3825 = vpack.c.b16 %v3822, %v3821
        %v3826 = vpack.c.b16 %v3824, %v3823
        %v3830 = vsel %vm649, %v3764, 0
        %v3833 = vsel %vm649, %v3766, 0
        %v3836 = vsel %vm649, %v3768, 0
        %v3839 = vsel %vm649, %v3770, 0
        %v3842 = vsel %vm649, %v3772, 0
        %v3845 = vsel %vm649, %v3774, 0
        %v3848 = vsel %vm649, %v3776, 0
        %v3851 = vsel %vm649, %v3778, 0
        %v3854 = vsel %vm649, %v3780, 0
        %v3857 = vsel %vm649, %v3782, 0
        %v3860 = vsel %vm649, %v3784, 0
        %v3863 = vsel %vm649, %v3786, 0
        %v3866 = vsel %vm649, %v3788, 0
        %v3869 = vsel %vm649, %v3790, 0
        %v3872 = vsel %vm649, %v3792, 0
        %v3875 = vsel %vm649, %v3794, 0
        %v3878 = vsel %vm649, %v3796, 0
        %v3881 = vsel %vm649, %v3798, 0
        %v3884 = vsel %vm649, %v3800, 0
        %v3887 = vsel %vm649, %v3802, 0
        %v3890 = vsel %vm649, %v3804, 0
        %v3893 = vsel %vm649, %v3806, 0
        %v3896 = vsel %vm649, %v3808, 0
        %v3899 = vsel %vm649, %v3810, 0
        %v3902 = vsel %vm649, %v3812, 0
        %v3905 = vsel %vm649, %v3814, 0
        %v3908 = vsel %vm649, %v3816, 0
        %v3911 = vsel %vm649, %v3815, 0
        %3913 = vmatprep.subr.bf16.mxu0 0
        %3914 = vmatpush1.bf16.msra.mxu0 0
        %3915 = vmatprep.subr.bf16.mxu0 0
        %3916 = vmatpush1.bf16.msra.mxu0 0
        %3917 = vmatprep.subr.bf16.mxu0 0
        %3918 = vmatpush1.bf16.msra.mxu0 0
        %3919 = vmatprep.subr.bf16.mxu0 0
        %3920 = vmatpush1.bf16.msra.mxu0 0
        %3921 = vmatprep.subr.bf16.mxu0 0
        %3922 = vmatpush1.bf16.msra.mxu0 0
        %3923 = vmatprep.subr.bf16.mxu0 0
        %3924 = vmatpush1.bf16.msra.mxu0 0
        %3925 = vmatprep.subr.bf16.mxu0 0
        %3926 = vmatpush1.bf16.msra.mxu0 %v3826
        %3927 = vmatprep.subr.bf16.mxu0 0
        %3928 = vmatpush1.bf16.msra.mxu0 %v3825
        %3929 = vmatprep.subr.bf16.mxu0 0
        %3930 = vmatpush2.bf16.msra.mxu0 0
        %3931 = vmatprep.subr.bf16.mxu0 0
        %3932 = vmatpush2.bf16.msra.mxu0 0
        %3933 = vmatprep.subr.bf16.mxu0 0
        %3934 = vmatpush2.bf16.msra.mxu0 0
        %3935 = vmatprep.subr.bf16.mxu0 0
        %3936 = vmatpush2.bf16.msra.mxu0 0
        %3937 = vmatprep.subr.bf16.mxu0 0
        %3938 = vmatpush2.bf16.msra.mxu0 0
        %3939 = vmatprep.subr.bf16.mxu0 0
        %3940 = vmatpush2.bf16.msra.mxu0 0
        %3941 = vmatprep.subr.bf16.mxu0 0
        %3942 = vmatpush2.bf16.msra.mxu0 0
        %3943 = vmatprep.subr.bf16.mxu0 0
        %3944 = vmatpush2.bf16.msra.mxu0 0
        %3945 = vmatprep.mubr.bf16.mxu0 0
        %3946 = vmatmul.mubr.bf16.gmra.mxu0 %v3830
        %v3947 = vpop.f32.mrf.mxu0
        %v3948 = vadd.f32 0.0, %v3947
        %v3949 = vpop.f32.mrf.mxu0
        %v3950 = vpop.f32.mrf.mxu0
        %v3951 = vadd.f32 0.0, %v3950
        %v3952 = vpop.f32.mrf.mxu0
        %3953 = vmatprep.mubr.bf16.mxu0 0
        %3954 = vmatmul.mubr.bf16.gmra.mxu0 %v3833
        %v3955 = vpop.f32.mrf.mxu0
        %v3956 = vadd.f32 0.0, %v3955
        %v3957 = vpop.f32.mrf.mxu0
        %v3958 = vpop.f32.mrf.mxu0
        %v3959 = vadd.f32 0.0, %v3958
        %v3960 = vpop.f32.mrf.mxu0
        %3961 = vmatprep.mubr.bf16.mxu0 0
        %3962 = vmatmul.mubr.bf16.gmra.mxu0 %v3836
        %v3963 = vpop.f32.mrf.mxu0
        %v3964 = vadd.f32 0.0, %v3963
        %v3965 = vpop.f32.mrf.mxu0
        %v3966 = vpop.f32.mrf.mxu0
        %v3967 = vadd.f32 0.0, %v3966
        %v3968 = vpop.f32.mrf.mxu0
        %3969 = vmatprep.mubr.bf16.mxu0 0
        %3970 = vmatmul.mubr.bf16.gmra.mxu0 %v3839
        %v3971 = vpop.f32.mrf.mxu0
        %v3972 = vadd.f32 0.0, %v3971
        %v3973 = vpop.f32.mrf.mxu0
        %v3974 = vpop.f32.mrf.mxu0
        %v3975 = vadd.f32 0.0, %v3974
        %v3976 = vpop.f32.mrf.mxu0
        %3977 = vmatprep.mubr.bf16.mxu0 0
        %3978 = vmatmul.mubr.bf16.gmra.mxu0 %v3842
        %v3979 = vpop.f32.mrf.mxu0
        %v3980 = vadd.f32 0.0, %v3979
        %v3981 = vpop.f32.mrf.mxu0
        %v3982 = vpop.f32.mrf.mxu0
        %v3983 = vadd.f32 0.0, %v3982
        %v3984 = vpop.f32.mrf.mxu0
        %3985 = vmatprep.mubr.bf16.mxu0 0
        %3986 = vmatmul.mubr.bf16.gmra.mxu0 %v3845
        %v3987 = vpop.f32.mrf.mxu0
        %v3988 = vadd.f32 0.0, %v3987
        %v3989 = vpop.f32.mrf.mxu0
        %v3990 = vpop.f32.mrf.mxu0
        %v3991 = vadd.f32 0.0, %v3990
        %v3992 = vpop.f32.mrf.mxu0
        %3993 = vmatprep.mubr.bf16.mxu0 0
        %3994 = vmatmul.mubr.bf16.gmra.mxu0 %v3848
        %v3995 = vpop.f32.mrf.mxu0
        %v3996 = vadd.f32 0.0, %v3995
        %v3997 = vpop.f32.mrf.mxu0
        %v3998 = vpop.f32.mrf.mxu0
        %v3999 = vadd.f32 0.0, %v3998
        %v4000 = vpop.f32.mrf.mxu0
        %4001 = vmatprep.mubr.bf16.mxu0 0
        %4002 = vmatmul.mubr.bf16.gmra.mxu0 %v3851
        %v4003 = vpop.f32.mrf.mxu0
        %v4004 = vadd.f32 0.0, %v4003
        %v4005 = vpop.f32.mrf.mxu0
        %v4006 = vpop.f32.mrf.mxu0
        %v4007 = vadd.f32 0.0, %v4006
        %v4008 = vpop.f32.mrf.mxu0
        %4009 = vmatprep.mubr.bf16.mxu0 0
        %4010 = vmatmul.mubr.bf16.gmra.mxu0 %v3854
        %v4011 = vpop.f32.mrf.mxu0
        %v4012 = vadd.f32 0.0, %v4011
        %v4013 = vpop.f32.mrf.mxu0
        %v4014 = vpop.f32.mrf.mxu0
        %v4015 = vadd.f32 0.0, %v4014
        %v4016 = vpop.f32.mrf.mxu0
        %4017 = vmatprep.mubr.bf16.mxu0 0
        %4018 = vmatmul.mubr.bf16.gmra.mxu0 %v3857
        %v4019 = vpop.f32.mrf.mxu0
        %v4020 = vadd.f32 0.0, %v4019
        %v4021 = vpop.f32.mrf.mxu0
        %v4022 = vpop.f32.mrf.mxu0
        %v4023 = vadd.f32 0.0, %v4022
        %v4024 = vpop.f32.mrf.mxu0
        %4025 = vmatprep.mubr.bf16.mxu0 0
        %4026 = vmatmul.mubr.bf16.gmra.mxu0 %v3860
        %v4027 = vpop.f32.mrf.mxu0
        %v4028 = vadd.f32 0.0, %v4027
        %v4029 = vpop.f32.mrf.mxu0
        %v4030 = vpop.f32.mrf.mxu0
        %v4031 = vadd.f32 0.0, %v4030
        %v4032 = vpop.f32.mrf.mxu0
        %4033 = vmatprep.mubr.bf16.mxu0 0
        %4034 = vmatmul.mubr.bf16.gmra.mxu0 %v3863
        %v4035 = vpop.f32.mrf.mxu0
        %v4036 = vadd.f32 0.0, %v4035
        %v4037 = vpop.f32.mrf.mxu0
        %v4038 = vpop.f32.mrf.mxu0
        %v4039 = vadd.f32 0.0, %v4038
        %v4040 = vpop.f32.mrf.mxu0
        %4041 = vmatprep.mubr.bf16.mxu0 0
        %4042 = vmatmul.mubr.bf16.gmra.mxu0 %v3866
        %v4043 = vpop.f32.mrf.mxu0
        %v4044 = vadd.f32 0.0, %v4043
        %v4045 = vpop.f32.mrf.mxu0
        %v4046 = vpop.f32.mrf.mxu0
        %v4047 = vadd.f32 0.0, %v4046
        %v4048 = vpop.f32.mrf.mxu0
        %4049 = vmatprep.mubr.bf16.mxu0 0
        %4050 = vmatmul.mubr.bf16.gmra.mxu0 %v3869
        %v4051 = vpop.f32.mrf.mxu0
        %v4052 = vadd.f32 0.0, %v4051
        %v4053 = vpop.f32.mrf.mxu0
        %v4054 = vpop.f32.mrf.mxu0
        %v4055 = vadd.f32 0.0, %v4054
        %v4056 = vpop.f32.mrf.mxu0
        %4057 = vmatprep.mubr.bf16.mxu0 0
        %4058 = vmatmul.mubr.bf16.gmra.mxu0 %v3872
        %v4059 = vpop.f32.mrf.mxu0
        %v4060 = vadd.f32 0.0, %v4059
        %v4061 = vpop.f32.mrf.mxu0
        %v4062 = vpop.f32.mrf.mxu0
        %v4063 = vadd.f32 0.0, %v4062
        %v4064 = vpop.f32.mrf.mxu0
        %4065 = vmatprep.mubr.bf16.mxu0 0
        %4066 = vmatmul.mubr.bf16.gmra.mxu0 %v3875
        %v4067 = vpop.f32.mrf.mxu0
        %v4068 = vadd.f32 0.0, %v4067
        %v4069 = vpop.f32.mrf.mxu0
        %v4070 = vpop.f32.mrf.mxu0
        %v4071 = vadd.f32 0.0, %v4070
        %v4072 = vpop.f32.mrf.mxu0
        %4073 = vmatprep.mubr.bf16.mxu0 0
        %4074 = vmatmul.mubr.bf16.gmra.mxu0 %v3878
        %v4075 = vpop.f32.mrf.mxu0
        %v4076 = vadd.f32 0.0, %v4075
        %v4077 = vpop.f32.mrf.mxu0
        %v4078 = vpop.f32.mrf.mxu0
        %v4079 = vadd.f32 0.0, %v4078
        %v4080 = vpop.f32.mrf.mxu0
        %4081 = vmatprep.mubr.bf16.mxu0 0
        %4082 = vmatmul.mubr.bf16.gmra.mxu0 %v3881
        %v4083 = vpop.f32.mrf.mxu0
        %v4084 = vadd.f32 0.0, %v4083
        %v4085 = vpop.f32.mrf.mxu0
        %v4086 = vpop.f32.mrf.mxu0
        %v4087 = vadd.f32 0.0, %v4086
        %v4088 = vpop.f32.mrf.mxu0
        %4089 = vmatprep.mubr.bf16.mxu0 0
        %4090 = vmatmul.mubr.bf16.gmra.mxu0 %v3884
        %v4091 = vpop.f32.mrf.mxu0
        %v4092 = vadd.f32 0.0, %v4091
        %v4093 = vpop.f32.mrf.mxu0
        %v4094 = vpop.f32.mrf.mxu0
        %v4095 = vadd.f32 0.0, %v4094
        %v4096 = vpop.f32.mrf.mxu0
        %4097 = vmatprep.mubr.bf16.mxu0 0
        %4098 = vmatmul.mubr.bf16.gmra.mxu0 %v3887
        %v4099 = vpop.f32.mrf.mxu0
        %v4100 = vadd.f32 0.0, %v4099
        %v4101 = vpop.f32.mrf.mxu0
        %v4102 = vpop.f32.mrf.mxu0
        %v4103 = vadd.f32 0.0, %v4102
        %v4104 = vpop.f32.mrf.mxu0
        %4105 = vmatprep.mubr.bf16.mxu0 0
        %4106 = vmatmul.mubr.bf16.gmra.mxu0 %v3890
        %v4107 = vpop.f32.mrf.mxu0
        %v4108 = vadd.f32 0.0, %v4107
        %v4109 = vpop.f32.mrf.mxu0
        %v4110 = vpop.f32.mrf.mxu0
        %v4111 = vadd.f32 0.0, %v4110
        %v4112 = vpop.f32.mrf.mxu0
        %4113 = vmatprep.mubr.bf16.mxu0 0
        %4114 = vmatmul.mubr.bf16.gmra.mxu0 %v3893
        %v4115 = vpop.f32.mrf.mxu0
        %v4116 = vadd.f32 0.0, %v4115
        %v4117 = vpop.f32.mrf.mxu0
        %v4118 = vpop.f32.mrf.mxu0
        %v4119 = vadd.f32 0.0, %v4118
        %v4120 = vpop.f32.mrf.mxu0
        %4121 = vmatprep.mubr.bf16.mxu0 0
        %4122 = vmatmul.mubr.bf16.gmra.mxu0 %v3896
        %v4123 = vpop.f32.mrf.mxu0
        %v4124 = vadd.f32 0.0, %v4123
        %v4125 = vpop.f32.mrf.mxu0
        %v4126 = vpop.f32.mrf.mxu0
        %v4127 = vadd.f32 0.0, %v4126
        %v4128 = vpop.f32.mrf.mxu0
        %4129 = vmatprep.mubr.bf16.mxu0 0
        %4130 = vmatmul.mubr.bf16.gmra.mxu0 %v3899
        %v4131 = vpop.f32.mrf.mxu0
        %v4132 = vadd.f32 0.0, %v4131
        %v4133 = vpop.f32.mrf.mxu0
        %v4134 = vpop.f32.mrf.mxu0
        %v4135 = vadd.f32 0.0, %v4134
        %v4136 = vpop.f32.mrf.mxu0
        %4137 = vmatprep.mubr.bf16.mxu0 0
        %4138 = vmatmul.mubr.bf16.gmra.mxu0 %v3902
        %v4139 = vpop.f32.mrf.mxu0
        %v4140 = vadd.f32 0.0, %v4139
        %v4141 = vpop.f32.mrf.mxu0
        %v4142 = vpop.f32.mrf.mxu0
        %v4143 = vadd.f32 0.0, %v4142
        %v4144 = vpop.f32.mrf.mxu0
        %4145 = vmatprep.mubr.bf16.mxu0 0
        %4146 = vmatmul.mubr.bf16.gmra.mxu0 %v3905
        %v4147 = vpop.f32.mrf.mxu0
        %v4148 = vadd.f32 0.0, %v4147
        %v4149 = vpop.f32.mrf.mxu0
        %v4150 = vpop.f32.mrf.mxu0
        %v4151 = vadd.f32 0.0, %v4150
        %v4152 = vpop.f32.mrf.mxu0
        %4153 = vmatprep.mubr.bf16.mxu0 0
        %4154 = vmatmul.mubr.bf16.gmra.mxu0 %v3908
        %v4155 = vpop.f32.mrf.mxu0
        %v4156 = vadd.f32 0.0, %v4155
        %v4157 = vpop.f32.mrf.mxu0
        %v4158 = vpop.f32.mrf.mxu0
        %v4159 = vadd.f32 0.0, %v4158
        %v4160 = vpop.f32.mrf.mxu0
        %4161 = vmatprep.mubr.bf16.mxu0 0
        %4162 = vmatmul.mubr.bf16.gmra.mxu0 %v3911
        %v4163 = vpop.f32.mrf.mxu0
        %v4164 = vadd.f32 0.0, %v4163
        %v4165 = vpop.f32.mrf.mxu0
        %v4166 = vpop.f32.mrf.mxu0
        %v4167 = vpop.f32.mrf.mxu0
        %4168 = vdwg.mxu0
        %v4169 = vadd.f32 %v3505, %v3948
        %v4170 = vadd.f32 %v3506, %v3951
        %v4171 = vadd.f32 %v3507, %v3956
        %v4172 = vadd.f32 %v3508, %v3959
        %v4173 = vadd.f32 %v3509, %v3964
        %v4174 = vadd.f32 %v3510, %v3967
        %v4175 = vadd.f32 %v3511, %v3972
        %v4176 = vadd.f32 %v3512, %v3975
        %v4177 = vadd.f32 %v3513, %v3980
        %v4178 = vadd.f32 %v3514, %v3983
        %v4179 = vadd.f32 %v3515, %v3988
        %v4180 = vadd.f32 %v3516, %v3991
        %v4181 = vadd.f32 %v3517, %v3996
        %v4182 = vadd.f32 %v3518, %v3999
        %v4183 = vadd.f32 %v3519, %v4004
        %v4184 = vadd.f32 %v3520, %v4007
        %v4185 = vadd.f32 %v3521, %v4012
        %v4186 = vadd.f32 %v3522, %v4015
        %v4187 = vadd.f32 %v3523, %v4020
        %v4188 = vadd.f32 %v3524, %v4023
        %v4189 = vadd.f32 %v3525, %v4028
        %v4190 = vadd.f32 %v3526, %v4031
        %v4191 = vadd.f32 %v3527, %v4036
        %v4192 = vadd.f32 %v3528, %v4039
        %v4193 = vadd.f32 %v3529, %v4044
        %v4194 = vadd.f32 %v3530, %v4047
        %v4195 = vadd.f32 %v3531, %v4052
        %v4196 = vadd.f32 %v3532, %v4055
        %v4197 = vadd.f32 %v3533, %v4060
        %v4198 = vadd.f32 %v3534, %v4063
        %v4199 = vadd.f32 %v3535, %v4068
        %v4200 = vadd.f32 %v3536, %v4071
        %v4201 = vadd.f32 %v3537, %v4076
        %v4202 = vadd.f32 %v3538, %v4079
        %v4203 = vadd.f32 %v3539, %v4084
        %v4204 = vadd.f32 %v3540, %v4087
        %v4205 = vadd.f32 %v3541, %v4092
        %v4206 = vadd.f32 %v3542, %v4095
        %v4207 = vadd.f32 %v3543, %v4100
        %v4208 = vadd.f32 %v3544, %v4103
        %v4209 = vadd.f32 %v3545, %v4108
        %v4210 = vadd.f32 %v3546, %v4111
        %v4211 = vadd.f32 %v3547, %v4116
        %v4212 = vadd.f32 %v3548, %v4119
        %v4213 = vadd.f32 %v3549, %v4124
        %v4214 = vadd.f32 %v3550, %v4127
        %v4215 = vadd.f32 %v3551, %v4132
        %v4216 = vadd.f32 %v3552, %v4135
        %v4217 = vadd.f32 %v3553, %v4140
        %v4218 = vadd.f32 %v3554, %v4143
        %v4219 = vadd.f32 %v3555, %v4148
        %v4220 = vadd.f32 %v3556, %v4151
        %v4221 = vadd.f32 %v3557, %v4156
        %v4222 = vadd.f32 %v3558, %v4159
        %v4223 = vadd.f32 %v3559, %v4164
        %v4224 = vld [vmem:[%s206 + $0xf0] sm:$0x7]
        %s4225 = scalar_lea.vmem %s1, 112
        %v4226 = vld [vmem:[%s4225] sm:$0xf]
        %v4227 = vld [vmem:[%s4225 + $0x4] sm:$0xf]
        %v4228 = vld [vmem:[%s4225 + $0x8] sm:$0xf]
        %v4229 = vld [vmem:[%s4225 + $0xc] sm:$0xf]
        %v4231 = vunpack.c.l.b16 %v4224
        %v4232 = vpack.c.b16 %v4231, %v3731
        %vm4233 = vsmask.f32 5376
        %v4235 = vshrl.u32 %v3733, 16
        %v4237 = vrot.slane %v4235, 2
        %v4238 = vshll.u32 %v3733, 16
        %v4240 = vrot.slane %v4238, 3
        %v4241 = vor.u32 %v4237, %v4240
        %v4243 = vshrl.u32 %v3734, 16
        %v4245 = vrot.slane %v4243, 2
        %v4246 = vshll.u32 %v3734, 16
        %v4248 = vrot.slane %v4246, 3
        %v4249 = vor.u32 %v4245, %v4248
        %v4250 = vsel %vm4233, %v4241, %v4249
        %v4252 = vshrl.u32 %v3735, 16
        %v4254 = vrot.slane %v4252, 2
        %v4255 = vshll.u32 %v3735, 16
        %v4257 = vrot.slane %v4255, 3
        %v4258 = vor.u32 %v4254, %v4257
        %v4259 = vsel %vm4233, %v4249, %v4258
        %v4261 = vshrl.u32 %v3736, 16
        %v4263 = vrot.slane %v4261, 2
        %v4264 = vshll.u32 %v3736, 16
        %v4266 = vrot.slane %v4264, 3
        %v4267 = vor.u32 %v4263, %v4266
        %v4268 = vsel %vm4233, %v4258, %v4267
        %v4270 = vshrl.u32 %v3737, 16
        %v4272 = vrot.slane %v4270, 2
        %v4273 = vshll.u32 %v3737, 16
        %v4275 = vrot.slane %v4273, 3
        %v4276 = vor.u32 %v4272, %v4275
        %v4277 = vsel %vm4233, %v4267, %v4276
        %v4279 = vshrl.u32 %v3738, 16
        %v4281 = vrot.slane %v4279, 2
        %v4282 = vshll.u32 %v3738, 16
        %v4284 = vrot.slane %v4282, 3
        %v4285 = vor.u32 %v4281, %v4284
        %v4286 = vsel %vm4233, %v4276, %v4285
        %v4288 = vshrl.u32 %v3739, 16
        %v4290 = vrot.slane %v4288, 2
        %v4291 = vshll.u32 %v3739, 16
        %v4293 = vrot.slane %v4291, 3
        %v4294 = vor.u32 %v4290, %v4293
        %v4295 = vsel %vm4233, %v4285, %v4294
        %v4297 = vshrl.u32 %v3740, 16
        %v4299 = vrot.slane %v4297, 2
        %v4300 = vshll.u32 %v3740, 16
        %v4302 = vrot.slane %v4300, 3
        %v4303 = vor.u32 %v4299, %v4302
        %v4304 = vsel %vm4233, %v4294, %v4303
        %v4306 = vshrl.u32 %v3741, 16
        %v4308 = vrot.slane %v4306, 2
        %v4309 = vshll.u32 %v3741, 16
        %v4311 = vrot.slane %v4309, 3
        %v4312 = vor.u32 %v4308, %v4311
        %v4313 = vsel %vm4233, %v4303, %v4312
        %v4315 = vshrl.u32 %v3742, 16
        %v4317 = vrot.slane %v4315, 2
        %v4318 = vshll.u32 %v3742, 16
        %v4320 = vrot.slane %v4318, 3
        %v4321 = vor.u32 %v4317, %v4320
        %v4322 = vsel %vm4233, %v4312, %v4321
        %v4324 = vshrl.u32 %v3743, 16
        %v4326 = vrot.slane %v4324, 2
        %v4327 = vshll.u32 %v3743, 16
        %v4329 = vrot.slane %v4327, 3
        %v4330 = vor.u32 %v4326, %v4329
        %v4331 = vsel %vm4233, %v4321, %v4330
        %v4333 = vshrl.u32 %v3744, 16
        %v4335 = vrot.slane %v4333, 2
        %v4336 = vshll.u32 %v3744, 16
        %v4338 = vrot.slane %v4336, 3
        %v4339 = vor.u32 %v4335, %v4338
        %v4340 = vsel %vm4233, %v4330, %v4339
        %v4342 = vshrl.u32 %v3745, 16
        %v4344 = vrot.slane %v4342, 2
        %v4345 = vshll.u32 %v3745, 16
        %v4347 = vrot.slane %v4345, 3
        %v4348 = vor.u32 %v4344, %v4347
        %v4349 = vsel %vm4233, %v4339, %v4348
        %v4351 = vshrl.u32 %v3746, 16
        %v4353 = vrot.slane %v4351, 2
        %v4354 = vshll.u32 %v3746, 16
        %v4356 = vrot.slane %v4354, 3
        %v4357 = vor.u32 %v4353, %v4356
        %v4358 = vsel %vm4233, %v4348, %v4357
        %v4360 = vshrl.u32 %v3747, 16
        %v4362 = vrot.slane %v4360, 2
        %v4363 = vshll.u32 %v3747, 16
        %v4365 = vrot.slane %v4363, 3
        %v4366 = vor.u32 %v4362, %v4365
        %v4367 = vsel %vm4233, %v4357, %v4366
        %v4369 = vshrl.u32 %v3748, 16
        %v4371 = vrot.slane %v4369, 2
        %v4372 = vshll.u32 %v3748, 16
        %v4374 = vrot.slane %v4372, 3
        %v4375 = vor.u32 %v4371, %v4374
        %v4376 = vsel %vm4233, %v4366, %v4375
        %v4378 = vshrl.u32 %v3749, 16
        %v4380 = vrot.slane %v4378, 2
        %v4381 = vshll.u32 %v3749, 16
        %v4383 = vrot.slane %v4381, 3
        %v4384 = vor.u32 %v4380, %v4383
        %v4385 = vsel %vm4233, %v4375, %v4384
        %v4387 = vshrl.u32 %v3750, 16
        %v4389 = vrot.slane %v4387, 2
        %v4390 = vshll.u32 %v3750, 16
        %v4392 = vrot.slane %v4390, 3
        %v4393 = vor.u32 %v4389, %v4392
        %v4394 = vsel %vm4233, %v4384, %v4393
        %v4396 = vshrl.u32 %v3751, 16
        %v4398 = vrot.slane %v4396, 2
        %v4399 = vshll.u32 %v3751, 16
        %v4401 = vrot.slane %v4399, 3
        %v4402 = vor.u32 %v4398, %v4401
        %v4403 = vsel %vm4233, %v4393, %v4402
        %v4405 = vshrl.u32 %v3752, 16
        %v4407 = vrot.slane %v4405, 2
        %v4408 = vshll.u32 %v3752, 16
        %v4410 = vrot.slane %v4408, 3
        %v4411 = vor.u32 %v4407, %v4410
        %v4412 = vsel %vm4233, %v4402, %v4411
        %v4414 = vshrl.u32 %v3753, 16
        %v4416 = vrot.slane %v4414, 2
        %v4417 = vshll.u32 %v3753, 16
        %v4419 = vrot.slane %v4417, 3
        %v4420 = vor.u32 %v4416, %v4419
        %v4421 = vsel %vm4233, %v4411, %v4420
        %v4423 = vshrl.u32 %v3754, 16
        %v4425 = vrot.slane %v4423, 2
        %v4426 = vshll.u32 %v3754, 16
        %v4428 = vrot.slane %v4426, 3
        %v4429 = vor.u32 %v4425, %v4428
        %v4430 = vsel %vm4233, %v4420, %v4429
        %v4432 = vshrl.u32 %v3755, 16
        %v4434 = vrot.slane %v4432, 2
        %v4435 = vshll.u32 %v3755, 16
        %v4437 = vrot.slane %v4435, 3
        %v4438 = vor.u32 %v4434, %v4437
        %v4439 = vsel %vm4233, %v4429, %v4438
        %v4441 = vshrl.u32 %v3756, 16
        %v4443 = vrot.slane %v4441, 2
        %v4444 = vshll.u32 %v3756, 16
        %v4446 = vrot.slane %v4444, 3
        %v4447 = vor.u32 %v4443, %v4446
        %v4448 = vsel %vm4233, %v4438, %v4447
        %v4450 = vshrl.u32 %v3757, 16
        %v4452 = vrot.slane %v4450, 2
        %v4453 = vshll.u32 %v3757, 16
        %v4455 = vrot.slane %v4453, 3
        %v4456 = vor.u32 %v4452, %v4455
        %v4457 = vsel %vm4233, %v4447, %v4456
        %v4459 = vshrl.u32 %v3758, 16
        %v4461 = vrot.slane %v4459, 2
        %v4462 = vshll.u32 %v3758, 16
        %v4464 = vrot.slane %v4462, 3
        %v4465 = vor.u32 %v4461, %v4464
        %v4466 = vsel %vm4233, %v4456, %v4465
        %v4468 = vshrl.u32 %v3759, 16
        %v4470 = vrot.slane %v4468, 2
        %v4471 = vshll.u32 %v3759, 16
        %v4473 = vrot.slane %v4471, 3
        %v4474 = vor.u32 %v4470, %v4473
        %v4475 = vsel %vm4233, %v4465, %v4474
        %v4477 = vshrl.u32 %v4232, 16
        %v4479 = vrot.slane %v4477, 2
        %v4480 = vshll.u32 %v4232, 16
        %v4482 = vrot.slane %v4480, 3
        %v4483 = vor.u32 %v4479, %v4482
        %v4484 = vsel %vm4233, %v4474, %v4483
        %v4489 = vunpack.c.l.b16 %v4226
        %v4490 = vunpack.c.l.b16 %v4227
        %v4491 = vunpack.c.l.b16 %v4228
        %v4492 = vunpack.c.l.b16 %v4229
        %v4493 = vpack.c.b16 %v4490, %v4489
        %v4494 = vpack.c.b16 %v4492, %v4491
        %v4498 = vsel %vm649, %v4250, 0
        %v4501 = vsel %vm649, %v4259, 0
        %v4504 = vsel %vm649, %v4268, 0
        %v4507 = vsel %vm649, %v4277, 0
        %v4510 = vsel %vm649, %v4286, 0
        %v4513 = vsel %vm649, %v4295, 0
        %v4516 = vsel %vm649, %v4304, 0
        %v4519 = vsel %vm649, %v4313, 0
        %v4522 = vsel %vm649, %v4322, 0
        %v4525 = vsel %vm649, %v4331, 0
        %v4528 = vsel %vm649, %v4340, 0
        %v4531 = vsel %vm649, %v4349, 0
        %v4534 = vsel %vm649, %v4358, 0
        %v4537 = vsel %vm649, %v4367, 0
        %v4540 = vsel %vm649, %v4376, 0
        %v4543 = vsel %vm649, %v4385, 0
        %v4546 = vsel %vm649, %v4394, 0
        %v4549 = vsel %vm649, %v4403, 0
        %v4552 = vsel %vm649, %v4412, 0
        %v4555 = vsel %vm649, %v4421, 0
        %v4558 = vsel %vm649, %v4430, 0
        %v4561 = vsel %vm649, %v4439, 0
        %v4564 = vsel %vm649, %v4448, 0
        %v4567 = vsel %vm649, %v4457, 0
        %v4570 = vsel %vm649, %v4466, 0
        %v4573 = vsel %vm649, %v4475, 0
        %v4576 = vsel %vm649, %v4484, 0
        %v4579 = vsel %vm649, %v4483, 0
        %4581 = vmatprep.subr.bf16.mxu0 0
        %4582 = vmatpush1.bf16.msra.mxu0 0
        %4583 = vmatprep.subr.bf16.mxu0 0
        %4584 = vmatpush1.bf16.msra.mxu0 0
        %4585 = vmatprep.subr.bf16.mxu0 0
        %4586 = vmatpush1.bf16.msra.mxu0 0
        %4587 = vmatprep.subr.bf16.mxu0 0
        %4588 = vmatpush1.bf16.msra.mxu0 0
        %4589 = vmatprep.subr.bf16.mxu0 0
        %4590 = vmatpush1.bf16.msra.mxu0 0
        %4591 = vmatprep.subr.bf16.mxu0 0
        %4592 = vmatpush1.bf16.msra.mxu0 0
        %4593 = vmatprep.subr.bf16.mxu0 0
        %4594 = vmatpush1.bf16.msra.mxu0 %v4494
        %4595 = vmatprep.subr.bf16.mxu0 0
        %4596 = vmatpush1.bf16.msra.mxu0 %v4493
        %4597 = vmatprep.subr.bf16.mxu0 0
        %4598 = vmatpush2.bf16.msra.mxu0 0
        %4599 = vmatprep.subr.bf16.mxu0 0
        %4600 = vmatpush2.bf16.msra.mxu0 0
        %4601 = vmatprep.subr.bf16.mxu0 0
        %4602 = vmatpush2.bf16.msra.mxu0 0
        %4603 = vmatprep.subr.bf16.mxu0 0
        %4604 = vmatpush2.bf16.msra.mxu0 0
        %4605 = vmatprep.subr.bf16.mxu0 0
        %4606 = vmatpush2.bf16.msra.mxu0 0
        %4607 = vmatprep.subr.bf16.mxu0 0
        %4608 = vmatpush2.bf16.msra.mxu0 0
        %4609 = vmatprep.subr.bf16.mxu0 0
        %4610 = vmatpush2.bf16.msra.mxu0 0
        %4611 = vmatprep.subr.bf16.mxu0 0
        %4612 = vmatpush2.bf16.msra.mxu0 0
        %4613 = vmatprep.mubr.bf16.mxu0 0
        %4614 = vmatmul.mubr.bf16.gmra.mxu0 %v4498
        %v4615 = vpop.f32.mrf.mxu0
        %v4616 = vadd.f32 0.0, %v4615
        %v4617 = vpop.f32.mrf.mxu0
        %v4618 = vpop.f32.mrf.mxu0
        %v4619 = vadd.f32 0.0, %v4618
        %v4620 = vpop.f32.mrf.mxu0
        %4621 = vmatprep.mubr.bf16.mxu0 0
        %4622 = vmatmul.mubr.bf16.gmra.mxu0 %v4501
        %v4623 = vpop.f32.mrf.mxu0
        %v4624 = vadd.f32 0.0, %v4623
        %v4625 = vpop.f32.mrf.mxu0
        %v4626 = vpop.f32.mrf.mxu0
        %v4627 = vadd.f32 0.0, %v4626
        %v4628 = vpop.f32.mrf.mxu0
        %4629 = vmatprep.mubr.bf16.mxu0 0
        %4630 = vmatmul.mubr.bf16.gmra.mxu0 %v4504
        %v4631 = vpop.f32.mrf.mxu0
        %v4632 = vadd.f32 0.0, %v4631
        %v4633 = vpop.f32.mrf.mxu0
        %v4634 = vpop.f32.mrf.mxu0
        %v4635 = vadd.f32 0.0, %v4634
        %v4636 = vpop.f32.mrf.mxu0
        %4637 = vmatprep.mubr.bf16.mxu0 0
        %4638 = vmatmul.mubr.bf16.gmra.mxu0 %v4507
        %v4639 = vpop.f32.mrf.mxu0
        %v4640 = vadd.f32 0.0, %v4639
        %v4641 = vpop.f32.mrf.mxu0
        %v4642 = vpop.f32.mrf.mxu0
        %v4643 = vadd.f32 0.0, %v4642
        %v4644 = vpop.f32.mrf.mxu0
        %4645 = vmatprep.mubr.bf16.mxu0 0
        %4646 = vmatmul.mubr.bf16.gmra.mxu0 %v4510
        %v4647 = vpop.f32.mrf.mxu0
        %v4648 = vadd.f32 0.0, %v4647
        %v4649 = vpop.f32.mrf.mxu0
        %v4650 = vpop.f32.mrf.mxu0
        %v4651 = vadd.f32 0.0, %v4650
        %v4652 = vpop.f32.mrf.mxu0
        %4653 = vmatprep.mubr.bf16.mxu0 0
        %4654 = vmatmul.mubr.bf16.gmra.mxu0 %v4513
        %v4655 = vpop.f32.mrf.mxu0
        %v4656 = vadd.f32 0.0, %v4655
        %v4657 = vpop.f32.mrf.mxu0
        %v4658 = vpop.f32.mrf.mxu0
        %v4659 = vadd.f32 0.0, %v4658
        %v4660 = vpop.f32.mrf.mxu0
        %4661 = vmatprep.mubr.bf16.mxu0 0
        %4662 = vmatmul.mubr.bf16.gmra.mxu0 %v4516
        %v4663 = vpop.f32.mrf.mxu0
        %v4664 = vadd.f32 0.0, %v4663
        %v4665 = vpop.f32.mrf.mxu0
        %v4666 = vpop.f32.mrf.mxu0
        %v4667 = vadd.f32 0.0, %v4666
        %v4668 = vpop.f32.mrf.mxu0
        %4669 = vmatprep.mubr.bf16.mxu0 0
        %4670 = vmatmul.mubr.bf16.gmra.mxu0 %v4519
        %v4671 = vpop.f32.mrf.mxu0
        %v4672 = vadd.f32 0.0, %v4671
        %v4673 = vpop.f32.mrf.mxu0
        %v4674 = vpop.f32.mrf.mxu0
        %v4675 = vadd.f32 0.0, %v4674
        %v4676 = vpop.f32.mrf.mxu0
        %4677 = vmatprep.mubr.bf16.mxu0 0
        %4678 = vmatmul.mubr.bf16.gmra.mxu0 %v4522
        %v4679 = vpop.f32.mrf.mxu0
        %v4680 = vadd.f32 0.0, %v4679
        %v4681 = vpop.f32.mrf.mxu0
        %v4682 = vpop.f32.mrf.mxu0
        %v4683 = vadd.f32 0.0, %v4682
        %v4684 = vpop.f32.mrf.mxu0
        %4685 = vmatprep.mubr.bf16.mxu0 0
        %4686 = vmatmul.mubr.bf16.gmra.mxu0 %v4525
        %v4687 = vpop.f32.mrf.mxu0
        %v4688 = vadd.f32 0.0, %v4687
        %v4689 = vpop.f32.mrf.mxu0
        %v4690 = vpop.f32.mrf.mxu0
        %v4691 = vadd.f32 0.0, %v4690
        %v4692 = vpop.f32.mrf.mxu0
        %4693 = vmatprep.mubr.bf16.mxu0 0
        %4694 = vmatmul.mubr.bf16.gmra.mxu0 %v4528
        %v4695 = vpop.f32.mrf.mxu0
        %v4696 = vadd.f32 0.0, %v4695
        %v4697 = vpop.f32.mrf.mxu0
        %v4698 = vpop.f32.mrf.mxu0
        %v4699 = vadd.f32 0.0, %v4698
        %v4700 = vpop.f32.mrf.mxu0
        %4701 = vmatprep.mubr.bf16.mxu0 0
        %4702 = vmatmul.mubr.bf16.gmra.mxu0 %v4531
        %v4703 = vpop.f32.mrf.mxu0
        %v4704 = vadd.f32 0.0, %v4703
        %v4705 = vpop.f32.mrf.mxu0
        %v4706 = vpop.f32.mrf.mxu0
        %v4707 = vadd.f32 0.0, %v4706
        %v4708 = vpop.f32.mrf.mxu0
        %4709 = vmatprep.mubr.bf16.mxu0 0
        %4710 = vmatmul.mubr.bf16.gmra.mxu0 %v4534
        %v4711 = vpop.f32.mrf.mxu0
        %v4712 = vadd.f32 0.0, %v4711
        %v4713 = vpop.f32.mrf.mxu0
        %v4714 = vpop.f32.mrf.mxu0
        %v4715 = vadd.f32 0.0, %v4714
        %v4716 = vpop.f32.mrf.mxu0
        %4717 = vmatprep.mubr.bf16.mxu0 0
        %4718 = vmatmul.mubr.bf16.gmra.mxu0 %v4537
        %v4719 = vpop.f32.mrf.mxu0
        %v4720 = vadd.f32 0.0, %v4719
        %v4721 = vpop.f32.mrf.mxu0
        %v4722 = vpop.f32.mrf.mxu0
        %v4723 = vadd.f32 0.0, %v4722
        %v4724 = vpop.f32.mrf.mxu0
        %4725 = vmatprep.mubr.bf16.mxu0 0
        %4726 = vmatmul.mubr.bf16.gmra.mxu0 %v4540
        %v4727 = vpop.f32.mrf.mxu0
        %v4728 = vadd.f32 0.0, %v4727
        %v4729 = vpop.f32.mrf.mxu0
        %v4730 = vpop.f32.mrf.mxu0
        %v4731 = vadd.f32 0.0, %v4730
        %v4732 = vpop.f32.mrf.mxu0
        %4733 = vmatprep.mubr.bf16.mxu0 0
        %4734 = vmatmul.mubr.bf16.gmra.mxu0 %v4543
        %v4735 = vpop.f32.mrf.mxu0
        %v4736 = vadd.f32 0.0, %v4735
        %v4737 = vpop.f32.mrf.mxu0
        %v4738 = vpop.f32.mrf.mxu0
        %v4739 = vadd.f32 0.0, %v4738
        %v4740 = vpop.f32.mrf.mxu0
        %4741 = vmatprep.mubr.bf16.mxu0 0
        %4742 = vmatmul.mubr.bf16.gmra.mxu0 %v4546
        %v4743 = vpop.f32.mrf.mxu0
        %v4744 = vadd.f32 0.0, %v4743
        %v4745 = vpop.f32.mrf.mxu0
        %v4746 = vpop.f32.mrf.mxu0
        %v4747 = vadd.f32 0.0, %v4746
        %v4748 = vpop.f32.mrf.mxu0
        %4749 = vmatprep.mubr.bf16.mxu0 0
        %4750 = vmatmul.mubr.bf16.gmra.mxu0 %v4549
        %v4751 = vpop.f32.mrf.mxu0
        %v4752 = vadd.f32 0.0, %v4751
        %v4753 = vpop.f32.mrf.mxu0
        %v4754 = vpop.f32.mrf.mxu0
        %v4755 = vadd.f32 0.0, %v4754
        %v4756 = vpop.f32.mrf.mxu0
        %4757 = vmatprep.mubr.bf16.mxu0 0
        %4758 = vmatmul.mubr.bf16.gmra.mxu0 %v4552
        %v4759 = vpop.f32.mrf.mxu0
        %v4760 = vadd.f32 0.0, %v4759
        %v4761 = vpop.f32.mrf.mxu0
        %v4762 = vpop.f32.mrf.mxu0
        %v4763 = vadd.f32 0.0, %v4762
        %v4764 = vpop.f32.mrf.mxu0
        %4765 = vmatprep.mubr.bf16.mxu0 0
        %4766 = vmatmul.mubr.bf16.gmra.mxu0 %v4555
        %v4767 = vpop.f32.mrf.mxu0
        %v4768 = vadd.f32 0.0, %v4767
        %v4769 = vpop.f32.mrf.mxu0
        %v4770 = vpop.f32.mrf.mxu0
        %v4771 = vadd.f32 0.0, %v4770
        %v4772 = vpop.f32.mrf.mxu0
        %4773 = vmatprep.mubr.bf16.mxu0 0
        %4774 = vmatmul.mubr.bf16.gmra.mxu0 %v4558
        %v4775 = vpop.f32.mrf.mxu0
        %v4776 = vadd.f32 0.0, %v4775
        %v4777 = vpop.f32.mrf.mxu0
        %v4778 = vpop.f32.mrf.mxu0
        %v4779 = vadd.f32 0.0, %v4778
        %v4780 = vpop.f32.mrf.mxu0
        %4781 = vmatprep.mubr.bf16.mxu0 0
        %4782 = vmatmul.mubr.bf16.gmra.mxu0 %v4561
        %v4783 = vpop.f32.mrf.mxu0
        %v4784 = vadd.f32 0.0, %v4783
        %v4785 = vpop.f32.mrf.mxu0
        %v4786 = vpop.f32.mrf.mxu0
        %v4787 = vadd.f32 0.0, %v4786
        %v4788 = vpop.f32.mrf.mxu0
        %4789 = vmatprep.mubr.bf16.mxu0 0
        %4790 = vmatmul.mubr.bf16.gmra.mxu0 %v4564
        %v4791 = vpop.f32.mrf.mxu0
        %v4792 = vadd.f32 0.0, %v4791
        %v4793 = vpop.f32.mrf.mxu0
        %v4794 = vpop.f32.mrf.mxu0
        %v4795 = vadd.f32 0.0, %v4794
        %v4796 = vpop.f32.mrf.mxu0
        %4797 = vmatprep.mubr.bf16.mxu0 0
        %4798 = vmatmul.mubr.bf16.gmra.mxu0 %v4567
        %v4799 = vpop.f32.mrf.mxu0
        %v4800 = vadd.f32 0.0, %v4799
        %v4801 = vpop.f32.mrf.mxu0
        %v4802 = vpop.f32.mrf.mxu0
        %v4803 = vadd.f32 0.0, %v4802
        %v4804 = vpop.f32.mrf.mxu0
        %4805 = vmatprep.mubr.bf16.mxu0 0
        %4806 = vmatmul.mubr.bf16.gmra.mxu0 %v4570
        %v4807 = vpop.f32.mrf.mxu0
        %v4808 = vadd.f32 0.0, %v4807
        %v4809 = vpop.f32.mrf.mxu0
        %v4810 = vpop.f32.mrf.mxu0
        %v4811 = vadd.f32 0.0, %v4810
        %v4812 = vpop.f32.mrf.mxu0
        %4813 = vmatprep.mubr.bf16.mxu0 0
        %4814 = vmatmul.mubr.bf16.gmra.mxu0 %v4573
        %v4815 = vpop.f32.mrf.mxu0
        %v4816 = vadd.f32 0.0, %v4815
        %v4817 = vpop.f32.mrf.mxu0
        %v4818 = vpop.f32.mrf.mxu0
        %v4819 = vadd.f32 0.0, %v4818
        %v4820 = vpop.f32.mrf.mxu0
        %4821 = vmatprep.mubr.bf16.mxu0 0
        %4822 = vmatmul.mubr.bf16.gmra.mxu0 %v4576
        %v4823 = vpop.f32.mrf.mxu0
        %v4824 = vadd.f32 0.0, %v4823
        %v4825 = vpop.f32.mrf.mxu0
        %v4826 = vpop.f32.mrf.mxu0
        %v4827 = vadd.f32 0.0, %v4826
        %v4828 = vpop.f32.mrf.mxu0
        %4829 = vmatprep.mubr.bf16.mxu0 0
        %4830 = vmatmul.mubr.bf16.gmra.mxu0 %v4579
        %v4831 = vpop.f32.mrf.mxu0
        %v4832 = vadd.f32 0.0, %v4831
        %v4833 = vpop.f32.mrf.mxu0
        %v4834 = vpop.f32.mrf.mxu0
        %v4835 = vpop.f32.mrf.mxu0
        %4836 = vdwg.mxu0
        %v4837 = vadd.f32 %v4169, %v4616
        %v4838 = vadd.f32 %v4170, %v4619
        %v4839 = vadd.f32 %v4171, %v4624
        %v4840 = vadd.f32 %v4172, %v4627
        %v4841 = vadd.f32 %v4173, %v4632
        %v4842 = vadd.f32 %v4174, %v4635
        %v4843 = vadd.f32 %v4175, %v4640
        %v4844 = vadd.f32 %v4176, %v4643
        %v4845 = vadd.f32 %v4177, %v4648
        %v4846 = vadd.f32 %v4178, %v4651
        %v4847 = vadd.f32 %v4179, %v4656
        %v4848 = vadd.f32 %v4180, %v4659
        %v4849 = vadd.f32 %v4181, %v4664
        %v4850 = vadd.f32 %v4182, %v4667
        %v4851 = vadd.f32 %v4183, %v4672
        %v4852 = vadd.f32 %v4184, %v4675
        %v4853 = vadd.f32 %v4185, %v4680
        %v4854 = vadd.f32 %v4186, %v4683
        %v4855 = vadd.f32 %v4187, %v4688
        %v4856 = vadd.f32 %v4188, %v4691
        %v4857 = vadd.f32 %v4189, %v4696
        %v4858 = vadd.f32 %v4190, %v4699
        %v4859 = vadd.f32 %v4191, %v4704
        %v4860 = vadd.f32 %v4192, %v4707
        %v4861 = vadd.f32 %v4193, %v4712
        %v4862 = vadd.f32 %v4194, %v4715
        %v4863 = vadd.f32 %v4195, %v4720
        %v4864 = vadd.f32 %v4196, %v4723
        %v4865 = vadd.f32 %v4197, %v4728
        %v4866 = vadd.f32 %v4198, %v4731
        %v4867 = vadd.f32 %v4199, %v4736
        %v4868 = vadd.f32 %v4200, %v4739
        %v4869 = vadd.f32 %v4201, %v4744
        %v4870 = vadd.f32 %v4202, %v4747
        %v4871 = vadd.f32 %v4203, %v4752
        %v4872 = vadd.f32 %v4204, %v4755
        %v4873 = vadd.f32 %v4205, %v4760
        %v4874 = vadd.f32 %v4206, %v4763
        %v4875 = vadd.f32 %v4207, %v4768
        %v4876 = vadd.f32 %v4208, %v4771
        %v4877 = vadd.f32 %v4209, %v4776
        %v4878 = vadd.f32 %v4210, %v4779
        %v4879 = vadd.f32 %v4211, %v4784
        %v4880 = vadd.f32 %v4212, %v4787
        %v4881 = vadd.f32 %v4213, %v4792
        %v4882 = vadd.f32 %v4214, %v4795
        %v4883 = vadd.f32 %v4215, %v4800
        %v4884 = vadd.f32 %v4216, %v4803
        %v4885 = vadd.f32 %v4217, %v4808
        %v4886 = vadd.f32 %v4218, %v4811
        %v4887 = vadd.f32 %v4219, %v4816
        %v4888 = vadd.f32 %v4220, %v4819
        %v4889 = vadd.f32 %v4221, %v4824
        %v4890 = vadd.f32 %v4222, %v4827
        %v4891 = vadd.f32 %v4223, %v4832
        %v4892 = vld [vmem:[%s206 + $0x14] sm:$0x8]
        %s4893 = scalar_lea.vmem %s1, 128
        %v4894 = vld [vmem:[%s4893] sm:$0xf]
        %v4895 = vld [vmem:[%s4893 + $0x4] sm:$0xf]
        %v4896 = vld [vmem:[%s4893 + $0x8] sm:$0xf]
        %v4897 = vld [vmem:[%s4893 + $0xc] sm:$0xf]
        %v4899 = vunpack.c.l.b16 %v4892
        %v4900 = vpack.c.b16 %v3678, %v4899
        %v4901 = vrot.slane %v4900, 3
        %v4902 = vrot.slane %v3734, 3
        %v4903 = vsel %vm1989, %v4901, %v4902
        %v4904 = vrot.slane %v3735, 3
        %v4905 = vsel %vm1989, %v4902, %v4904
        %v4906 = vrot.slane %v3736, 3
        %v4907 = vsel %vm1989, %v4904, %v4906
        %v4908 = vrot.slane %v3737, 3
        %v4909 = vsel %vm1989, %v4906, %v4908
        %v4910 = vrot.slane %v3738, 3
        %v4911 = vsel %vm1989, %v4908, %v4910
        %v4912 = vrot.slane %v3739, 3
        %v4913 = vsel %vm1989, %v4910, %v4912
        %v4914 = vrot.slane %v3740, 3
        %v4915 = vsel %vm1989, %v4912, %v4914
        %v4916 = vrot.slane %v3741, 3
        %v4917 = vsel %vm1989, %v4914, %v4916
        %v4918 = vrot.slane %v3742, 3
        %v4919 = vsel %vm1989, %v4916, %v4918
        %v4920 = vrot.slane %v3743, 3
        %v4921 = vsel %vm1989, %v4918, %v4920
        %v4922 = vrot.slane %v3744, 3
        %v4923 = vsel %vm1989, %v4920, %v4922
        %v4924 = vrot.slane %v3745, 3
        %v4925 = vsel %vm1989, %v4922, %v4924
        %v4926 = vrot.slane %v3746, 3
        %v4927 = vsel %vm1989, %v4924, %v4926
        %v4928 = vrot.slane %v3747, 3
        %v4929 = vsel %vm1989, %v4926, %v4928
        %v4930 = vrot.slane %v3748, 3
        %v4931 = vsel %vm1989, %v4928, %v4930
        %v4932 = vrot.slane %v3749, 3
        %v4933 = vsel %vm1989, %v4930, %v4932
        %v4934 = vrot.slane %v3750, 3
        %v4935 = vsel %vm1989, %v4932, %v4934
        %v4936 = vrot.slane %v3751, 3
        %v4937 = vsel %vm1989, %v4934, %v4936
        %v4938 = vrot.slane %v3752, 3
        %v4939 = vsel %vm1989, %v4936, %v4938
        %v4940 = vrot.slane %v3753, 3
        %v4941 = vsel %vm1989, %v4938, %v4940
        %v4942 = vrot.slane %v3754, 3
        %v4943 = vsel %vm1989, %v4940, %v4942
        %v4944 = vrot.slane %v3755, 3
        %v4945 = vsel %vm1989, %v4942, %v4944
        %v4946 = vrot.slane %v3756, 3
        %v4947 = vsel %vm1989, %v4944, %v4946
        %v4948 = vrot.slane %v3757, 3
        %v4949 = vsel %vm1989, %v4946, %v4948
        %v4950 = vrot.slane %v3758, 3
        %v4951 = vsel %vm1989, %v4948, %v4950
        %v4952 = vrot.slane %v3759, 3
        %v4953 = vsel %vm1989, %v4950, %v4952
        %v4954 = vrot.slane %v4232, 3
        %v4955 = vsel %vm1989, %v4952, %v4954
        %v4960 = vunpack.c.l.b16 %v4894
        %v4961 = vunpack.c.l.b16 %v4895
        %v4962 = vunpack.c.l.b16 %v4896
        %v4963 = vunpack.c.l.b16 %v4897
        %v4964 = vpack.c.b16 %v4961, %v4960
        %v4965 = vpack.c.b16 %v4963, %v4962
        %v4969 = vsel %vm649, %v4903, 0
        %v4972 = vsel %vm649, %v4905, 0
        %v4975 = vsel %vm649, %v4907, 0
        %v4978 = vsel %vm649, %v4909, 0
        %v4981 = vsel %vm649, %v4911, 0
        %v4984 = vsel %vm649, %v4913, 0
        %v4987 = vsel %vm649, %v4915, 0
        %v4990 = vsel %vm649, %v4917, 0
        %v4993 = vsel %vm649, %v4919, 0
        %v4996 = vsel %vm649, %v4921, 0
        %v4999 = vsel %vm649, %v4923, 0
        %v5002 = vsel %vm649, %v4925, 0
        %v5005 = vsel %vm649, %v4927, 0
        %v5008 = vsel %vm649, %v4929, 0
        %v5011 = vsel %vm649, %v4931, 0
        %v5014 = vsel %vm649, %v4933, 0
        %v5017 = vsel %vm649, %v4935, 0
        %v5020 = vsel %vm649, %v4937, 0
        %v5023 = vsel %vm649, %v4939, 0
        %v5026 = vsel %vm649, %v4941, 0
        %v5029 = vsel %vm649, %v4943, 0
        %v5032 = vsel %vm649, %v4945, 0
        %v5035 = vsel %vm649, %v4947, 0
        %v5038 = vsel %vm649, %v4949, 0
        %v5041 = vsel %vm649, %v4951, 0
        %v5044 = vsel %vm649, %v4953, 0
        %v5047 = vsel %vm649, %v4955, 0
        %v5050 = vsel %vm649, %v4954, 0
        %5052 = vmatprep.subr.bf16.mxu0 0
        %5053 = vmatpush1.bf16.msra.mxu0 0
        %5054 = vmatprep.subr.bf16.mxu0 0
        %5055 = vmatpush1.bf16.msra.mxu0 0
        %5056 = vmatprep.subr.bf16.mxu0 0
        %5057 = vmatpush1.bf16.msra.mxu0 0
        %5058 = vmatprep.subr.bf16.mxu0 0
        %5059 = vmatpush1.bf16.msra.mxu0 0
        %5060 = vmatprep.subr.bf16.mxu0 0
        %5061 = vmatpush1.bf16.msra.mxu0 0
        %5062 = vmatprep.subr.bf16.mxu0 0
        %5063 = vmatpush1.bf16.msra.mxu0 0
        %5064 = vmatprep.subr.bf16.mxu0 0
        %5065 = vmatpush1.bf16.msra.mxu0 %v4965
        %5066 = vmatprep.subr.bf16.mxu0 0
        %5067 = vmatpush1.bf16.msra.mxu0 %v4964
        %5068 = vmatprep.subr.bf16.mxu0 0
        %5069 = vmatpush2.bf16.msra.mxu0 0
        %5070 = vmatprep.subr.bf16.mxu0 0
        %5071 = vmatpush2.bf16.msra.mxu0 0
        %5072 = vmatprep.subr.bf16.mxu0 0
        %5073 = vmatpush2.bf16.msra.mxu0 0
        %5074 = vmatprep.subr.bf16.mxu0 0
        %5075 = vmatpush2.bf16.msra.mxu0 0
        %5076 = vmatprep.subr.bf16.mxu0 0
        %5077 = vmatpush2.bf16.msra.mxu0 0
        %5078 = vmatprep.subr.bf16.mxu0 0
        %5079 = vmatpush2.bf16.msra.mxu0 0
        %5080 = vmatprep.subr.bf16.mxu0 0
        %5081 = vmatpush2.bf16.msra.mxu0 0
        %5082 = vmatprep.subr.bf16.mxu0 0
        %5083 = vmatpush2.bf16.msra.mxu0 0
        %5084 = vmatprep.mubr.bf16.mxu0 0
        %5085 = vmatmul.mubr.bf16.gmra.mxu0 %v4969
        %v5086 = vpop.f32.mrf.mxu0
        %v5087 = vadd.f32 0.0, %v5086
        %v5088 = vpop.f32.mrf.mxu0
        %v5089 = vpop.f32.mrf.mxu0
        %v5090 = vadd.f32 0.0, %v5089
        %v5091 = vpop.f32.mrf.mxu0
        %5092 = vmatprep.mubr.bf16.mxu0 0
        %5093 = vmatmul.mubr.bf16.gmra.mxu0 %v4972
        %v5094 = vpop.f32.mrf.mxu0
        %v5095 = vadd.f32 0.0, %v5094
        %v5096 = vpop.f32.mrf.mxu0
        %v5097 = vpop.f32.mrf.mxu0
        %v5098 = vadd.f32 0.0, %v5097
        %v5099 = vpop.f32.mrf.mxu0
        %5100 = vmatprep.mubr.bf16.mxu0 0
        %5101 = vmatmul.mubr.bf16.gmra.mxu0 %v4975
        %v5102 = vpop.f32.mrf.mxu0
        %v5103 = vadd.f32 0.0, %v5102
        %v5104 = vpop.f32.mrf.mxu0
        %v5105 = vpop.f32.mrf.mxu0
        %v5106 = vadd.f32 0.0, %v5105
        %v5107 = vpop.f32.mrf.mxu0
        %5108 = vmatprep.mubr.bf16.mxu0 0
        %5109 = vmatmul.mubr.bf16.gmra.mxu0 %v4978
        %v5110 = vpop.f32.mrf.mxu0
        %v5111 = vadd.f32 0.0, %v5110
        %v5112 = vpop.f32.mrf.mxu0
        %v5113 = vpop.f32.mrf.mxu0
        %v5114 = vadd.f32 0.0, %v5113
        %v5115 = vpop.f32.mrf.mxu0
        %5116 = vmatprep.mubr.bf16.mxu0 0
        %5117 = vmatmul.mubr.bf16.gmra.mxu0 %v4981
        %v5118 = vpop.f32.mrf.mxu0
        %v5119 = vadd.f32 0.0, %v5118
        %v5120 = vpop.f32.mrf.mxu0
        %v5121 = vpop.f32.mrf.mxu0
        %v5122 = vadd.f32 0.0, %v5121
        %v5123 = vpop.f32.mrf.mxu0
        %5124 = vmatprep.mubr.bf16.mxu0 0
        %5125 = vmatmul.mubr.bf16.gmra.mxu0 %v4984
        %v5126 = vpop.f32.mrf.mxu0
        %v5127 = vadd.f32 0.0, %v5126
        %v5128 = vpop.f32.mrf.mxu0
        %v5129 = vpop.f32.mrf.mxu0
        %v5130 = vadd.f32 0.0, %v5129
        %v5131 = vpop.f32.mrf.mxu0
        %5132 = vmatprep.mubr.bf16.mxu0 0
        %5133 = vmatmul.mubr.bf16.gmra.mxu0 %v4987
        %v5134 = vpop.f32.mrf.mxu0
        %v5135 = vadd.f32 0.0, %v5134
        %v5136 = vpop.f32.mrf.mxu0
        %v5137 = vpop.f32.mrf.mxu0
        %v5138 = vadd.f32 0.0, %v5137
        %v5139 = vpop.f32.mrf.mxu0
        %5140 = vmatprep.mubr.bf16.mxu0 0
        %5141 = vmatmul.mubr.bf16.gmra.mxu0 %v4990
        %v5142 = vpop.f32.mrf.mxu0
        %v5143 = vadd.f32 0.0, %v5142
        %v5144 = vpop.f32.mrf.mxu0
        %v5145 = vpop.f32.mrf.mxu0
        %v5146 = vadd.f32 0.0, %v5145
        %v5147 = vpop.f32.mrf.mxu0
        %5148 = vmatprep.mubr.bf16.mxu0 0
        %5149 = vmatmul.mubr.bf16.gmra.mxu0 %v4993
        %v5150 = vpop.f32.mrf.mxu0
        %v5151 = vadd.f32 0.0, %v5150
        %v5152 = vpop.f32.mrf.mxu0
        %v5153 = vpop.f32.mrf.mxu0
        %v5154 = vadd.f32 0.0, %v5153
        %v5155 = vpop.f32.mrf.mxu0
        %5156 = vmatprep.mubr.bf16.mxu0 0
        %5157 = vmatmul.mubr.bf16.gmra.mxu0 %v4996
        %v5158 = vpop.f32.mrf.mxu0
        %v5159 = vadd.f32 0.0, %v5158
        %v5160 = vpop.f32.mrf.mxu0
        %v5161 = vpop.f32.mrf.mxu0
        %v5162 = vadd.f32 0.0, %v5161
        %v5163 = vpop.f32.mrf.mxu0
        %5164 = vmatprep.mubr.bf16.mxu0 0
        %5165 = vmatmul.mubr.bf16.gmra.mxu0 %v4999
        %v5166 = vpop.f32.mrf.mxu0
        %v5167 = vadd.f32 0.0, %v5166
        %v5168 = vpop.f32.mrf.mxu0
        %v5169 = vpop.f32.mrf.mxu0
        %v5170 = vadd.f32 0.0, %v5169
        %v5171 = vpop.f32.mrf.mxu0
        %5172 = vmatprep.mubr.bf16.mxu0 0
        %5173 = vmatmul.mubr.bf16.gmra.mxu0 %v5002
        %v5174 = vpop.f32.mrf.mxu0
        %v5175 = vadd.f32 0.0, %v5174
        %v5176 = vpop.f32.mrf.mxu0
        %v5177 = vpop.f32.mrf.mxu0
        %v5178 = vadd.f32 0.0, %v5177
        %v5179 = vpop.f32.mrf.mxu0
        %5180 = vmatprep.mubr.bf16.mxu0 0
        %5181 = vmatmul.mubr.bf16.gmra.mxu0 %v5005
        %v5182 = vpop.f32.mrf.mxu0
        %v5183 = vadd.f32 0.0, %v5182
        %v5184 = vpop.f32.mrf.mxu0
        %v5185 = vpop.f32.mrf.mxu0
        %v5186 = vadd.f32 0.0, %v5185
        %v5187 = vpop.f32.mrf.mxu0
        %5188 = vmatprep.mubr.bf16.mxu0 0
        %5189 = vmatmul.mubr.bf16.gmra.mxu0 %v5008
        %v5190 = vpop.f32.mrf.mxu0
        %v5191 = vadd.f32 0.0, %v5190
        %v5192 = vpop.f32.mrf.mxu0
        %v5193 = vpop.f32.mrf.mxu0
        %v5194 = vadd.f32 0.0, %v5193
        %v5195 = vpop.f32.mrf.mxu0
        %5196 = vmatprep.mubr.bf16.mxu0 0
        %5197 = vmatmul.mubr.bf16.gmra.mxu0 %v5011
        %v5198 = vpop.f32.mrf.mxu0
        %v5199 = vadd.f32 0.0, %v5198
        %v5200 = vpop.f32.mrf.mxu0
        %v5201 = vpop.f32.mrf.mxu0
        %v5202 = vadd.f32 0.0, %v5201
        %v5203 = vpop.f32.mrf.mxu0
        %5204 = vmatprep.mubr.bf16.mxu0 0
        %5205 = vmatmul.mubr.bf16.gmra.mxu0 %v5014
        %v5206 = vpop.f32.mrf.mxu0
        %v5207 = vadd.f32 0.0, %v5206
        %v5208 = vpop.f32.mrf.mxu0
        %v5209 = vpop.f32.mrf.mxu0
        %v5210 = vadd.f32 0.0, %v5209
        %v5211 = vpop.f32.mrf.mxu0
        %5212 = vmatprep.mubr.bf16.mxu0 0
        %5213 = vmatmul.mubr.bf16.gmra.mxu0 %v5017
        %v5214 = vpop.f32.mrf.mxu0
        %v5215 = vadd.f32 0.0, %v5214
        %v5216 = vpop.f32.mrf.mxu0
        %v5217 = vpop.f32.mrf.mxu0
        %v5218 = vadd.f32 0.0, %v5217
        %v5219 = vpop.f32.mrf.mxu0
        %5220 = vmatprep.mubr.bf16.mxu0 0
        %5221 = vmatmul.mubr.bf16.gmra.mxu0 %v5020
        %v5222 = vpop.f32.mrf.mxu0
        %v5223 = vadd.f32 0.0, %v5222
        %v5224 = vpop.f32.mrf.mxu0
        %v5225 = vpop.f32.mrf.mxu0
        %v5226 = vadd.f32 0.0, %v5225
        %v5227 = vpop.f32.mrf.mxu0
        %5228 = vmatprep.mubr.bf16.mxu0 0
        %5229 = vmatmul.mubr.bf16.gmra.mxu0 %v5023
        %v5230 = vpop.f32.mrf.mxu0
        %v5231 = vadd.f32 0.0, %v5230
        %v5232 = vpop.f32.mrf.mxu0
        %v5233 = vpop.f32.mrf.mxu0
        %v5234 = vadd.f32 0.0, %v5233
        %v5235 = vpop.f32.mrf.mxu0
        %5236 = vmatprep.mubr.bf16.mxu0 0
        %5237 = vmatmul.mubr.bf16.gmra.mxu0 %v5026
        %v5238 = vpop.f32.mrf.mxu0
        %v5239 = vadd.f32 0.0, %v5238
        %v5240 = vpop.f32.mrf.mxu0
        %v5241 = vpop.f32.mrf.mxu0
        %v5242 = vadd.f32 0.0, %v5241
        %v5243 = vpop.f32.mrf.mxu0
        %5244 = vmatprep.mubr.bf16.mxu0 0
        %5245 = vmatmul.mubr.bf16.gmra.mxu0 %v5029
        %v5246 = vpop.f32.mrf.mxu0
        %v5247 = vadd.f32 0.0, %v5246
        %v5248 = vpop.f32.mrf.mxu0
        %v5249 = vpop.f32.mrf.mxu0
        %v5250 = vadd.f32 0.0, %v5249
        %v5251 = vpop.f32.mrf.mxu0
        %5252 = vmatprep.mubr.bf16.mxu0 0
        %5253 = vmatmul.mubr.bf16.gmra.mxu0 %v5032
        %v5254 = vpop.f32.mrf.mxu0
        %v5255 = vadd.f32 0.0, %v5254
        %v5256 = vpop.f32.mrf.mxu0
        %v5257 = vpop.f32.mrf.mxu0
        %v5258 = vadd.f32 0.0, %v5257
        %v5259 = vpop.f32.mrf.mxu0
        %5260 = vmatprep.mubr.bf16.mxu0 0
        %5261 = vmatmul.mubr.bf16.gmra.mxu0 %v5035
        %v5262 = vpop.f32.mrf.mxu0
        %v5263 = vadd.f32 0.0, %v5262
        %v5264 = vpop.f32.mrf.mxu0
        %v5265 = vpop.f32.mrf.mxu0
        %v5266 = vadd.f32 0.0, %v5265
        %v5267 = vpop.f32.mrf.mxu0
        %5268 = vmatprep.mubr.bf16.mxu0 0
        %5269 = vmatmul.mubr.bf16.gmra.mxu0 %v5038
        %v5270 = vpop.f32.mrf.mxu0
        %v5271 = vadd.f32 0.0, %v5270
        %v5272 = vpop.f32.mrf.mxu0
        %v5273 = vpop.f32.mrf.mxu0
        %v5274 = vadd.f32 0.0, %v5273
        %v5275 = vpop.f32.mrf.mxu0
        %5276 = vmatprep.mubr.bf16.mxu0 0
        %5277 = vmatmul.mubr.bf16.gmra.mxu0 %v5041
        %v5278 = vpop.f32.mrf.mxu0
        %v5279 = vadd.f32 0.0, %v5278
        %v5280 = vpop.f32.mrf.mxu0
        %v5281 = vpop.f32.mrf.mxu0
        %v5282 = vadd.f32 0.0, %v5281
        %v5283 = vpop.f32.mrf.mxu0
        %5284 = vmatprep.mubr.bf16.mxu0 0
        %5285 = vmatmul.mubr.bf16.gmra.mxu0 %v5044
        %v5286 = vpop.f32.mrf.mxu0
        %v5287 = vadd.f32 0.0, %v5286
        %v5288 = vpop.f32.mrf.mxu0
        %v5289 = vpop.f32.mrf.mxu0
        %v5290 = vadd.f32 0.0, %v5289
        %v5291 = vpop.f32.mrf.mxu0
        %5292 = vmatprep.mubr.bf16.mxu0 0
        %5293 = vmatmul.mubr.bf16.gmra.mxu0 %v5047
        %v5294 = vpop.f32.mrf.mxu0
        %v5295 = vadd.f32 0.0, %v5294
        %v5296 = vpop.f32.mrf.mxu0
        %v5297 = vpop.f32.mrf.mxu0
        %v5298 = vadd.f32 0.0, %v5297
        %v5299 = vpop.f32.mrf.mxu0
        %5300 = vmatprep.mubr.bf16.mxu0 0
        %5301 = vmatmul.mubr.bf16.gmra.mxu0 %v5050
        %v5302 = vpop.f32.mrf.mxu0
        %v5303 = vadd.f32 0.0, %v5302
        %v5304 = vpop.f32.mrf.mxu0
        %v5305 = vpop.f32.mrf.mxu0
        %v5306 = vpop.f32.mrf.mxu0
        %5307 = vdwg.mxu0
        %v5308 = vadd.f32 %v4837, %v5087
        %v5309 = vadd.f32 %v4838, %v5090
        %v5310 = vadd.f32 %v4839, %v5095
        %v5311 = vadd.f32 %v4840, %v5098
        %v5312 = vadd.f32 %v4841, %v5103
        %v5313 = vadd.f32 %v4842, %v5106
        %v5314 = vadd.f32 %v4843, %v5111
        %v5315 = vadd.f32 %v4844, %v5114
        %v5316 = vadd.f32 %v4845, %v5119
        %v5317 = vadd.f32 %v4846, %v5122
        %v5318 = vadd.f32 %v4847, %v5127
        %v5319 = vadd.f32 %v4848, %v5130
        %v5320 = vadd.f32 %v4849, %v5135
        %v5321 = vadd.f32 %v4850, %v5138
        %v5322 = vadd.f32 %v4851, %v5143
        %v5323 = vadd.f32 %v4852, %v5146
        %v5324 = vadd.f32 %v4853, %v5151
        %v5325 = vadd.f32 %v4854, %v5154
        %v5326 = vadd.f32 %v4855, %v5159
        %v5327 = vadd.f32 %v4856, %v5162
        %v5328 = vadd.f32 %v4857, %v5167
        %v5329 = vadd.f32 %v4858, %v5170
        %v5330 = vadd.f32 %v4859, %v5175
        %v5331 = vadd.f32 %v4860, %v5178
        %v5332 = vadd.f32 %v4861, %v5183
        %v5333 = vadd.f32 %v4862, %v5186
        %v5334 = vadd.f32 %v4863, %v5191
        %v5335 = vadd.f32 %v4864, %v5194
        %v5336 = vadd.f32 %v4865, %v5199
        %v5337 = vadd.f32 %v4866, %v5202
        %v5338 = vadd.f32 %v4867, %v5207
        %v5339 = vadd.f32 %v4868, %v5210
        %v5340 = vadd.f32 %v4869, %v5215
        %v5341 = vadd.f32 %v4870, %v5218
        %v5342 = vadd.f32 %v4871, %v5223
        %v5343 = vadd.f32 %v4872, %v5226
        %v5344 = vadd.f32 %v4873, %v5231
        %v5345 = vadd.f32 %v4874, %v5234
        %v5346 = vadd.f32 %v4875, %v5239
        %v5347 = vadd.f32 %v4876, %v5242
        %v5348 = vadd.f32 %v4877, %v5247
        %v5349 = vadd.f32 %v4878, %v5250
        %v5350 = vadd.f32 %v4879, %v5255
        %v5351 = vadd.f32 %v4880, %v5258
        %v5352 = vadd.f32 %v4881, %v5263
        %v5353 = vadd.f32 %v4882, %v5266
        %v5354 = vadd.f32 %v4883, %v5271
        %v5355 = vadd.f32 %v4884, %v5274
        %v5356 = vadd.f32 %v4885, %v5279
        %v5357 = vadd.f32 %v4886, %v5282
        %v5358 = vadd.f32 %v4887, %v5287
        %v5359 = vadd.f32 %v4888, %v5290
        %v5360 = vadd.f32 %v4889, %v5295
        %v5361 = vadd.f32 %v4890, %v5298
        %v5362 = vadd.f32 %v4891, %v5303
        %v5363 = vpack.c.bf16 %v5309, %v5308
        %v5364 = vpack.c.bf16 %v5311, %v5310
        %v5365 = vpack.c.bf16 %v5313, %v5312
        %v5366 = vpack.c.bf16 %v5315, %v5314
        %v5367 = vpack.c.bf16 %v5317, %v5316
        %v5368 = vpack.c.bf16 %v5319, %v5318
        %v5369 = vpack.c.bf16 %v5321, %v5320
        %v5370 = vpack.c.bf16 %v5323, %v5322
        %v5371 = vpack.c.bf16 %v5325, %v5324
        %v5372 = vpack.c.bf16 %v5327, %v5326
        %v5373 = vpack.c.bf16 %v5329, %v5328
        %v5374 = vpack.c.bf16 %v5331, %v5330
        %v5375 = vpack.c.bf16 %v5333, %v5332
        %v5376 = vpack.c.bf16 %v5335, %v5334
        %v5377 = vpack.c.bf16 %v5337, %v5336
        %v5378 = vpack.c.bf16 %v5339, %v5338
        %v5379 = vpack.c.bf16 %v5341, %v5340
        %v5380 = vpack.c.bf16 %v5343, %v5342
        %v5381 = vpack.c.bf16 %v5345, %v5344
        %v5382 = vpack.c.bf16 %v5347, %v5346
        %v5383 = vpack.c.bf16 %v5349, %v5348
        %v5384 = vpack.c.bf16 %v5351, %v5350
        %v5385 = vpack.c.bf16 %v5353, %v5352
        %v5386 = vpack.c.bf16 %v5355, %v5354
        %v5387 = vpack.c.bf16 %v5357, %v5356
        %v5388 = vpack.c.bf16 %v5359, %v5358
        %v5389 = vpack.c.bf16 %v5361, %v5360
        %v5390 = vpack.c.bf16 %v5362, %v5362
        %v5419 = vunpack.c.l.b16 %v5363
        %v5420 = vunpack.c.h.b16 %v5363
        %v5421 = vunpack.c.l.b16 %v5364
        %v5422 = vunpack.c.h.b16 %v5364
        %v5423 = vunpack.c.l.b16 %v5365
        %v5424 = vunpack.c.h.b16 %v5365
        %v5425 = vunpack.c.l.b16 %v5366
        %v5426 = vunpack.c.h.b16 %v5366
        %v5427 = vunpack.c.l.b16 %v5367
        %v5428 = vunpack.c.h.b16 %v5367
        %v5429 = vunpack.c.l.b16 %v5368
        %v5430 = vunpack.c.h.b16 %v5368
        %v5431 = vunpack.c.l.b16 %v5369
        %v5432 = vunpack.c.h.b16 %v5369
        %v5433 = vunpack.c.l.b16 %v5370
        %v5434 = vunpack.c.h.b16 %v5370
        %v5435 = vunpack.c.l.b16 %v5371
        %v5436 = vunpack.c.h.b16 %v5371
        %v5437 = vunpack.c.l.b16 %v5372
        %v5438 = vunpack.c.h.b16 %v5372
        %v5439 = vunpack.c.l.b16 %v5373
        %v5440 = vunpack.c.h.b16 %v5373
        %v5441 = vunpack.c.l.b16 %v5374
        %v5442 = vunpack.c.h.b16 %v5374
        %v5443 = vunpack.c.l.b16 %v5375
        %v5444 = vunpack.c.h.b16 %v5375
        %v5445 = vunpack.c.l.b16 %v5376
        %v5446 = vunpack.c.h.b16 %v5376
        %v5447 = vunpack.c.l.b16 %v5377
        %v5448 = vunpack.c.h.b16 %v5377
        %v5449 = vunpack.c.l.b16 %v5378
        %v5450 = vunpack.c.h.b16 %v5378
        %v5451 = vunpack.c.l.b16 %v5379
        %v5452 = vunpack.c.h.b16 %v5379
        %v5453 = vunpack.c.l.b16 %v5380
        %v5454 = vunpack.c.h.b16 %v5380
        %v5455 = vunpack.c.l.b16 %v5381
        %v5456 = vunpack.c.h.b16 %v5381
        %v5457 = vunpack.c.l.b16 %v5382
        %v5458 = vunpack.c.h.b16 %v5382
        %v5459 = vunpack.c.l.b16 %v5383
        %v5460 = vunpack.c.h.b16 %v5383
        %v5461 = vunpack.c.l.b16 %v5384
        %v5462 = vunpack.c.h.b16 %v5384
        %v5463 = vunpack.c.l.b16 %v5385
        %v5464 = vunpack.c.h.b16 %v5385
        %v5465 = vunpack.c.l.b16 %v5386
        %v5466 = vunpack.c.h.b16 %v5386
        %v5467 = vunpack.c.l.b16 %v5387
        %v5468 = vunpack.c.h.b16 %v5387
        %v5469 = vunpack.c.l.b16 %v5388
        %v5470 = vunpack.c.h.b16 %v5388
        %v5471 = vunpack.c.l.b16 %v5389
        %v5472 = vunpack.c.h.b16 %v5389
        %v5473 = vunpack.c.l.b16 %v5390
        %v5474 = vpack.c.b16 %v5419, %v5419
        %v5475 = vpack.c.b16 %v5420, %v5420
        %v5476 = vpack.c.b16 %v5421, %v5421
        %v5477 = vpack.c.b16 %v5422, %v5422
        %v5478 = vpack.c.b16 %v5423, %v5423
        %v5479 = vpack.c.b16 %v5424, %v5424
        %v5480 = vpack.c.b16 %v5425, %v5425
        %v5481 = vpack.c.b16 %v5426, %v5426
        %v5482 = vpack.c.b16 %v5427, %v5427
        %v5483 = vpack.c.b16 %v5428, %v5428
        %v5484 = vpack.c.b16 %v5429, %v5429
        %v5485 = vpack.c.b16 %v5430, %v5430
        %v5486 = vpack.c.b16 %v5431, %v5431
        %v5487 = vpack.c.b16 %v5432, %v5432
        %v5488 = vpack.c.b16 %v5433, %v5433
        %v5489 = vpack.c.b16 %v5434, %v5434
        %v5490 = vpack.c.b16 %v5435, %v5435
        %v5491 = vpack.c.b16 %v5436, %v5436
        %v5492 = vpack.c.b16 %v5437, %v5437
        %v5493 = vpack.c.b16 %v5438, %v5438
        %v5494 = vpack.c.b16 %v5439, %v5439
        %v5495 = vpack.c.b16 %v5440, %v5440
        %v5496 = vpack.c.b16 %v5441, %v5441
        %v5497 = vpack.c.b16 %v5442, %v5442
        %v5498 = vpack.c.b16 %v5443, %v5443
        %v5499 = vpack.c.b16 %v5444, %v5444
        %v5500 = vpack.c.b16 %v5445, %v5445
        %v5501 = vpack.c.b16 %v5446, %v5446
        %v5502 = vpack.c.b16 %v5447, %v5447
        %v5503 = vpack.c.b16 %v5448, %v5448
        %v5504 = vpack.c.b16 %v5449, %v5449
        %v5505 = vpack.c.b16 %v5450, %v5450
        %v5506 = vpack.c.b16 %v5451, %v5451
        %v5507 = vpack.c.b16 %v5452, %v5452
        %v5508 = vpack.c.b16 %v5453, %v5453
        %v5509 = vpack.c.b16 %v5454, %v5454
        %v5510 = vpack.c.b16 %v5455, %v5455
        %v5511 = vpack.c.b16 %v5456, %v5456
        %v5512 = vpack.c.b16 %v5457, %v5457
        %v5513 = vpack.c.b16 %v5458, %v5458
        %v5514 = vpack.c.b16 %v5459, %v5459
        %v5515 = vpack.c.b16 %v5460, %v5460
        %v5516 = vpack.c.b16 %v5461, %v5461
        %v5517 = vpack.c.b16 %v5462, %v5462
        %v5518 = vpack.c.b16 %v5463, %v5463
        %v5519 = vpack.c.b16 %v5464, %v5464
        %v5520 = vpack.c.b16 %v5465, %v5465
        %v5521 = vpack.c.b16 %v5466, %v5466
        %v5522 = vpack.c.b16 %v5467, %v5467
        %v5523 = vpack.c.b16 %v5468, %v5468
        %v5524 = vpack.c.b16 %v5469, %v5469
        %v5525 = vpack.c.b16 %v5470, %v5470
        %v5526 = vpack.c.b16 %v5471, %v5471
        %v5527 = vpack.c.b16 %v5472, %v5472
        %v5528 = vpack.c.b16 %v5473, %v5473
        %5584 = vst [vmem:[%s194] sm:$0xf] %v5474
        %5585 = vst [vmem:[%s194 + $0x4] sm:$0xf] %v5475
        %5586 = vst [vmem:[%s194 + $0x8] sm:$0xf] %v5476
        %5587 = vst [vmem:[%s194 + $0xc] sm:$0xf] %v5477
        %5588 = vst [vmem:[%s194 + $0x10] sm:$0xf] %v5478
        %5589 = vst [vmem:[%s194 + $0x14] sm:$0xf] %v5479
        %5590 = vst [vmem:[%s194 + $0x18] sm:$0xf] %v5480
        %5591 = vst [vmem:[%s194 + $0x1c] sm:$0xf] %v5481
        %5592 = vst [vmem:[%s194 + $0x20] sm:$0xf] %v5482
        %5593 = vst [vmem:[%s194 + $0x24] sm:$0xf] %v5483
        %5594 = vst [vmem:[%s194 + $0x28] sm:$0xf] %v5484
        %5595 = vst [vmem:[%s194 + $0x2c] sm:$0xf] %v5485
        %5596 = vst [vmem:[%s194 + $0x30] sm:$0xf] %v5486
        %5597 = vst [vmem:[%s194 + $0x34] sm:$0xf] %v5487
        %5598 = vst [vmem:[%s194 + $0x38] sm:$0xf] %v5488
        %5599 = vst [vmem:[%s194 + $0x3c] sm:$0xf] %v5489
        %5600 = vst [vmem:[%s194 + $0x40] sm:$0xf] %v5490
        %5601 = vst [vmem:[%s194 + $0x44] sm:$0xf] %v5491
        %5602 = vst [vmem:[%s194 + $0x48] sm:$0xf] %v5492
        %5603 = vst [vmem:[%s194 + $0x4c] sm:$0xf] %v5493
        %5604 = vst [vmem:[%s194 + $0x50] sm:$0xf] %v5494
        %5605 = vst [vmem:[%s194 + $0x54] sm:$0xf] %v5495
        %5606 = vst [vmem:[%s194 + $0x58] sm:$0xf] %v5496
        %5607 = vst [vmem:[%s194 + $0x5c] sm:$0xf] %v5497
        %5608 = vst [vmem:[%s194 + $0x60] sm:$0xf] %v5498
        %5609 = vst [vmem:[%s194 + $0x64] sm:$0xf] %v5499
        %5610 = vst [vmem:[%s194 + $0x68] sm:$0xf] %v5500
        %5611 = vst [vmem:[%s194 + $0x6c] sm:$0xf] %v5501
        %5612 = vst [vmem:[%s194 + $0x70] sm:$0xf] %v5502
        %5613 = vst [vmem:[%s194 + $0x74] sm:$0xf] %v5503
        %5614 = vst [vmem:[%s194 + $0x78] sm:$0xf] %v5504
        %5615 = vst [vmem:[%s194 + $0x7c] sm:$0xf] %v5505
        %5616 = vst [vmem:[%s194 + $0x80] sm:$0xf] %v5506
        %5617 = vst [vmem:[%s194 + $0x84] sm:$0xf] %v5507
        %5618 = vst [vmem:[%s194 + $0x88] sm:$0xf] %v5508
        %5619 = vst [vmem:[%s194 + $0x8c] sm:$0xf] %v5509
        %5620 = vst [vmem:[%s194 + $0x90] sm:$0xf] %v5510
        %5621 = vst [vmem:[%s194 + $0x94] sm:$0xf] %v5511
        %5622 = vst [vmem:[%s194 + $0x98] sm:$0xf] %v5512
        %5623 = vst [vmem:[%s194 + $0x9c] sm:$0xf] %v5513
        %5624 = vst [vmem:[%s194 + $0xa0] sm:$0xf] %v5514
        %5625 = vst [vmem:[%s194 + $0xa4] sm:$0xf] %v5515
        %5626 = vst [vmem:[%s194 + $0xa8] sm:$0xf] %v5516
        %5627 = vst [vmem:[%s194 + $0xac] sm:$0xf] %v5517
        %5628 = vst [vmem:[%s194 + $0xb0] sm:$0xf] %v5518
        %5629 = vst [vmem:[%s194 + $0xb4] sm:$0xf] %v5519
        %5630 = vst [vmem:[%s194 + $0xb8] sm:$0xf] %v5520
        %5631 = vst [vmem:[%s194 + $0xbc] sm:$0xf] %v5521
        %5632 = vst [vmem:[%s194 + $0xc0] sm:$0xf] %v5522
        %5633 = vst [vmem:[%s194 + $0xc4] sm:$0xf] %v5523
        %5634 = vst [vmem:[%s194 + $0xc8] sm:$0xf] %v5524
        %5635 = vst [vmem:[%s194 + $0xcc] sm:$0xf] %v5525
        %5636 = vst [vmem:[%s194 + $0xd0] sm:$0xf] %v5526
        %5637 = vst [vmem:[%s194 + $0xd4] sm:$0xf] %v5527
        %5638 = vst [vmem:[%s194 + $0xd8] sm:$0xf] %v5528
        %v5639 = vld [vmem:[%s2] sm:$0xff]
        %v5640 = vld [vmem:[%s2 + $0x8] sm:$0xff]
        %v5641 = vld [vmem:[%s2 + $0x10] sm:$0xff]
        %v5642 = vld [vmem:[%s2 + $0x18] sm:$0xff]
        %v5643 = vld [vmem:[%s2 + $0x20] sm:$0xff]
        %v5644 = vld [vmem:[%s2 + $0x28] sm:$0xff]
        %v5645 = vld [vmem:[%s2 + $0x30] sm:$0xff]
        %v5646 = vld [vmem:[%s2 + $0x38] sm:$0xff]
        %v5647 = vld [vmem:[%s2 + $0x40] sm:$0xff]
        %v5648 = vld [vmem:[%s2 + $0x48] sm:$0xff]
        %v5649 = vld [vmem:[%s2 + $0x50] sm:$0xff]
        %v5650 = vld [vmem:[%s2 + $0x58] sm:$0xff]
        %v5651 = vld [vmem:[%s2 + $0x60] sm:$0xff]
        %v5652 = vld [vmem:[%s2 + $0x68] sm:$0xff]
        %v5653 = vld [vmem:[%s2 + $0x70] sm:$0xff]
        %v5654 = vld [vmem:[%s2 + $0x78] sm:$0xff]
        %v5655 = vld [vmem:[%s2 + $0x80] sm:$0xff]
        %v5656 = vld [vmem:[%s2 + $0x88] sm:$0xff]
        %v5657 = vld [vmem:[%s2 + $0x90] sm:$0xff]
        %v5658 = vld [vmem:[%s2 + $0x98] sm:$0xff]
        %v5659 = vld [vmem:[%s2 + $0xa0] sm:$0xff]
        %v5660 = vld [vmem:[%s2 + $0xa8] sm:$0xff]
        %v5661 = vld [vmem:[%s2 + $0xb0] sm:$0xff]
        %v5662 = vld [vmem:[%s2 + $0xb8] sm:$0xff]
        %v5663 = vld [vmem:[%s2 + $0xc0] sm:$0xff]
        %v5664 = vld [vmem:[%s2 + $0xc8] sm:$0xff]
        %v5665 = vld [vmem:[%s2 + $0xd0] sm:$0xff]
        %v5666 = vld [vmem:[%s2 + $0xd8] sm:$0xff]
        %v5667 = vld [vmem:[%s2 + $0xe0] sm:$0xff]
        %v5668 = vld [vmem:[%s2 + $0xe8] sm:$0xff]
        %v5669 = vld [vmem:[%s2 + $0xf0] sm:$0xff]
        %v5670 = vld [vmem:[%s2 + $0xf8] sm:$0xff]
        %v5671 = vld [vmem:[%s2 + $0x100] sm:$0xff]
        %v5672 = vld [vmem:[%s2 + $0x108] sm:$0xff]
        %v5673 = vld [vmem:[%s2 + $0x110] sm:$0xff]
        %v5674 = vld [vmem:[%s2 + $0x118] sm:$0xff]
        %v5675 = vld [vmem:[%s2 + $0x120] sm:$0xff]
        %v5676 = vld [vmem:[%s2 + $0x128] sm:$0xff]
        %v5677 = vld [vmem:[%s2 + $0x130] sm:$0xff]
        %v5678 = vld [vmem:[%s2 + $0x138] sm:$0xff]
        %v5679 = vld [vmem:[%s2 + $0x140] sm:$0xff]
        %v5680 = vld [vmem:[%s2 + $0x148] sm:$0xff]
        %v5681 = vld [vmem:[%s2 + $0x150] sm:$0xff]
        %v5682 = vld [vmem:[%s2 + $0x158] sm:$0xff]
        %v5683 = vld [vmem:[%s2 + $0x160] sm:$0xff]
        %v5684 = vld [vmem:[%s2 + $0x168] sm:$0xff]
        %v5685 = vld [vmem:[%s2 + $0x170] sm:$0xff]
        %v5686 = vld [vmem:[%s2 + $0x178] sm:$0xff]
        %v5687 = vld [vmem:[%s2 + $0x180] sm:$0xff]
        %v5688 = vld [vmem:[%s2 + $0x188] sm:$0xff]
        %v5689 = vld [vmem:[%s2 + $0x190] sm:$0xff]
        %v5690 = vld [vmem:[%s2 + $0x198] sm:$0xff]
        %v5691 = vld [vmem:[%s2 + $0x1a0] sm:$0xff]
        %v5692 = vld [vmem:[%s2 + $0x1a8] sm:$0xff]
        %v5693 = vld [vmem:[%s2 + $0x1b0] sm:$0xff]
        %5695 = vset.pattern.permute.xlu0 0
        %5696 = vperm.xlu0 %5695, %v5639
        %v5697 = vpop.permute.xlu0 %5696
        %5700 = vset.pattern.permute.xlu0 0
        %5701 = vperm.xlu0 %5700, %v5640
        %v5702 = vpop.permute.xlu0 %5701
        %5705 = vset.pattern.permute.xlu0 0
        %5706 = vperm.xlu0 %5705, %v5641
        %v5707 = vpop.permute.xlu0 %5706
        %5710 = vset.pattern.permute.xlu0 0
        %5711 = vperm.xlu0 %5710, %v5642
        %v5712 = vpop.permute.xlu0 %5711
        %5715 = vset.pattern.permute.xlu0 0
        %5716 = vperm.xlu0 %5715, %v5643
        %v5717 = vpop.permute.xlu0 %5716
        %5720 = vset.pattern.permute.xlu0 0
        %5721 = vperm.xlu0 %5720, %v5644
        %v5722 = vpop.permute.xlu0 %5721
        %5725 = vset.pattern.permute.xlu0 0
        %5726 = vperm.xlu0 %5725, %v5645
        %v5727 = vpop.permute.xlu0 %5726
        %5730 = vset.pattern.permute.xlu0 0
        %5731 = vperm.xlu0 %5730, %v5646
        %v5732 = vpop.permute.xlu0 %5731
        %5735 = vset.pattern.permute.xlu0 0
        %5736 = vperm.xlu0 %5735, %v5647
        %v5737 = vpop.permute.xlu0 %5736
        %5740 = vset.pattern.permute.xlu0 0
        %5741 = vperm.xlu0 %5740, %v5648
        %v5742 = vpop.permute.xlu0 %5741
        %5745 = vset.pattern.permute.xlu0 0
        %5746 = vperm.xlu0 %5745, %v5649
        %v5747 = vpop.permute.xlu0 %5746
        %5750 = vset.pattern.permute.xlu0 0
        %5751 = vperm.xlu0 %5750, %v5650
        %v5752 = vpop.permute.xlu0 %5751
        %5755 = vset.pattern.permute.xlu0 0
        %5756 = vperm.xlu0 %5755, %v5651
        %v5757 = vpop.permute.xlu0 %5756
        %5760 = vset.pattern.permute.xlu0 0
        %5761 = vperm.xlu0 %5760, %v5652
        %v5762 = vpop.permute.xlu0 %5761
        %5765 = vset.pattern.permute.xlu0 0
        %5766 = vperm.xlu0 %5765, %v5653
        %v5767 = vpop.permute.xlu0 %5766
        %5770 = vset.pattern.permute.xlu0 0
        %5771 = vperm.xlu0 %5770, %v5654
        %v5772 = vpop.permute.xlu0 %5771
        %5775 = vset.pattern.permute.xlu0 0
        %5776 = vperm.xlu0 %5775, %v5655
        %v5777 = vpop.permute.xlu0 %5776
        %5780 = vset.pattern.permute.xlu0 0
        %5781 = vperm.xlu0 %5780, %v5656
        %v5782 = vpop.permute.xlu0 %5781
        %5785 = vset.pattern.permute.xlu0 0
        %5786 = vperm.xlu0 %5785, %v5657
        %v5787 = vpop.permute.xlu0 %5786
        %5790 = vset.pattern.permute.xlu0 0
        %5791 = vperm.xlu0 %5790, %v5658
        %v5792 = vpop.permute.xlu0 %5791
        %5795 = vset.pattern.permute.xlu0 0
        %5796 = vperm.xlu0 %5795, %v5659
        %v5797 = vpop.permute.xlu0 %5796
        %5800 = vset.pattern.permute.xlu0 0
        %5801 = vperm.xlu0 %5800, %v5660
        %v5802 = vpop.permute.xlu0 %5801
        %5805 = vset.pattern.permute.xlu0 0
        %5806 = vperm.xlu0 %5805, %v5661
        %v5807 = vpop.permute.xlu0 %5806
        %5810 = vset.pattern.permute.xlu0 0
        %5811 = vperm.xlu0 %5810, %v5662
        %v5812 = vpop.permute.xlu0 %5811
        %5815 = vset.pattern.permute.xlu0 0
        %5816 = vperm.xlu0 %5815, %v5663
        %v5817 = vpop.permute.xlu0 %5816
        %5820 = vset.pattern.permute.xlu0 0
        %5821 = vperm.xlu0 %5820, %v5664
        %v5822 = vpop.permute.xlu0 %5821
        %5825 = vset.pattern.permute.xlu0 0
        %5826 = vperm.xlu0 %5825, %v5665
        %v5827 = vpop.permute.xlu0 %5826
        %5830 = vset.pattern.permute.xlu0 0
        %5831 = vperm.xlu0 %5830, %v5666
        %v5832 = vpop.permute.xlu0 %5831
        %5835 = vset.pattern.permute.xlu0 0
        %5836 = vperm.xlu0 %5835, %v5667
        %v5837 = vpop.permute.xlu0 %5836
        %5840 = vset.pattern.permute.xlu0 0
        %5841 = vperm.xlu0 %5840, %v5668
        %v5842 = vpop.permute.xlu0 %5841
        %5845 = vset.pattern.permute.xlu0 0
        %5846 = vperm.xlu0 %5845, %v5669
        %v5847 = vpop.permute.xlu0 %5846
        %5850 = vset.pattern.permute.xlu0 0
        %5851 = vperm.xlu0 %5850, %v5670
        %v5852 = vpop.permute.xlu0 %5851
        %5855 = vset.pattern.permute.xlu0 0
        %5856 = vperm.xlu0 %5855, %v5671
        %v5857 = vpop.permute.xlu0 %5856
        %5860 = vset.pattern.permute.xlu0 0
        %5861 = vperm.xlu0 %5860, %v5672
        %v5862 = vpop.permute.xlu0 %5861
        %5865 = vset.pattern.permute.xlu0 0
        %5866 = vperm.xlu0 %5865, %v5673
        %v5867 = vpop.permute.xlu0 %5866
        %5870 = vset.pattern.permute.xlu0 0
        %5871 = vperm.xlu0 %5870, %v5674
        %v5872 = vpop.permute.xlu0 %5871
        %5875 = vset.pattern.permute.xlu0 0
        %5876 = vperm.xlu0 %5875, %v5675
        %v5877 = vpop.permute.xlu0 %5876
        %5880 = vset.pattern.permute.xlu0 0
        %5881 = vperm.xlu0 %5880, %v5676
        %v5882 = vpop.permute.xlu0 %5881
        %5885 = vset.pattern.permute.xlu0 0
        %5886 = vperm.xlu0 %5885, %v5677
        %v5887 = vpop.permute.xlu0 %5886
        %5890 = vset.pattern.permute.xlu0 0
        %5891 = vperm.xlu0 %5890, %v5678
        %v5892 = vpop.permute.xlu0 %5891
        %5895 = vset.pattern.permute.xlu0 0
        %5896 = vperm.xlu0 %5895, %v5679
        %v5897 = vpop.permute.xlu0 %5896
        %5900 = vset.pattern.permute.xlu0 0
        %5901 = vperm.xlu0 %5900, %v5680
        %v5902 = vpop.permute.xlu0 %5901
        %5905 = vset.pattern.permute.xlu0 0
        %5906 = vperm.xlu0 %5905, %v5681
        %v5907 = vpop.permute.xlu0 %5906
        %5910 = vset.pattern.permute.xlu0 0
        %5911 = vperm.xlu0 %5910, %v5682
        %v5912 = vpop.permute.xlu0 %5911
        %5915 = vset.pattern.permute.xlu0 0
        %5916 = vperm.xlu0 %5915, %v5683
        %v5917 = vpop.permute.xlu0 %5916
        %5920 = vset.pattern.permute.xlu0 0
        %5921 = vperm.xlu0 %5920, %v5684
        %v5922 = vpop.permute.xlu0 %5921
        %5925 = vset.pattern.permute.xlu0 0
        %5926 = vperm.xlu0 %5925, %v5685
        %v5927 = vpop.permute.xlu0 %5926
        %5930 = vset.pattern.permute.xlu0 0
        %5931 = vperm.xlu0 %5930, %v5686
        %v5932 = vpop.permute.xlu0 %5931
        %5935 = vset.pattern.permute.xlu0 0
        %5936 = vperm.xlu0 %5935, %v5687
        %v5937 = vpop.permute.xlu0 %5936
        %5940 = vset.pattern.permute.xlu0 0
        %5941 = vperm.xlu0 %5940, %v5688
        %v5942 = vpop.permute.xlu0 %5941
        %5945 = vset.pattern.permute.xlu0 0
        %5946 = vperm.xlu0 %5945, %v5689
        %v5947 = vpop.permute.xlu0 %5946
        %5950 = vset.pattern.permute.xlu0 0
        %5951 = vperm.xlu0 %5950, %v5690
        %v5952 = vpop.permute.xlu0 %5951
        %5955 = vset.pattern.permute.xlu0 0
        %5956 = vperm.xlu0 %5955, %v5691
        %v5957 = vpop.permute.xlu0 %5956
        %5960 = vset.pattern.permute.xlu0 0
        %5961 = vperm.xlu0 %5960, %v5692
        %v5962 = vpop.permute.xlu0 %5961
        %5965 = vset.pattern.permute.xlu0 0
        %5966 = vperm.xlu0 %5965, %v5693
        %v5967 = vpop.permute.xlu0 %5966
        %v5969 = vmul.f32 %v5308, %v5697
        %v5970 = vmul.f32 %v5309, %v5702
        %v5971 = vmul.f32 %v5310, %v5707
        %v5972 = vmul.f32 %v5311, %v5712
        %v5973 = vmul.f32 %v5312, %v5717
        %v5974 = vmul.f32 %v5313, %v5722
        %v5975 = vmul.f32 %v5314, %v5727
        %v5976 = vmul.f32 %v5315, %v5732
        %v5977 = vmul.f32 %v5316, %v5737
        %v5978 = vmul.f32 %v5317, %v5742
        %v5979 = vmul.f32 %v5318, %v5747
        %v5980 = vmul.f32 %v5319, %v5752
        %v5981 = vmul.f32 %v5320, %v5757
        %v5982 = vmul.f32 %v5321, %v5762
        %v5983 = vmul.f32 %v5322, %v5767
        %v5984 = vmul.f32 %v5323, %v5772
        %v5985 = vmul.f32 %v5324, %v5777
        %v5986 = vmul.f32 %v5325, %v5782
        %v5987 = vmul.f32 %v5326, %v5787
        %v5988 = vmul.f32 %v5327, %v5792
        %v5989 = vmul.f32 %v5328, %v5797
        %v5990 = vmul.f32 %v5329, %v5802
        %v5991 = vmul.f32 %v5330, %v5807
        %v5992 = vmul.f32 %v5331, %v5812
        %v5993 = vmul.f32 %v5332, %v5817
        %v5994 = vmul.f32 %v5333, %v5822
        %v5995 = vmul.f32 %v5334, %v5827
        %v5996 = vmul.f32 %v5335, %v5832
        %v5997 = vmul.f32 %v5336, %v5837
        %v5998 = vmul.f32 %v5337, %v5842
        %v5999 = vmul.f32 %v5338, %v5847
        %v6000 = vmul.f32 %v5339, %v5852
        %v6001 = vmul.f32 %v5340, %v5857
        %v6002 = vmul.f32 %v5341, %v5862
        %v6003 = vmul.f32 %v5342, %v5867
        %v6004 = vmul.f32 %v5343, %v5872
        %v6005 = vmul.f32 %v5344, %v5877
        %v6006 = vmul.f32 %v5345, %v5882
        %v6007 = vmul.f32 %v5346, %v5887
        %v6008 = vmul.f32 %v5347, %v5892
        %v6009 = vmul.f32 %v5348, %v5897
        %v6010 = vmul.f32 %v5349, %v5902
        %v6011 = vmul.f32 %v5350, %v5907
        %v6012 = vmul.f32 %v5351, %v5912
        %v6013 = vmul.f32 %v5352, %v5917
        %v6014 = vmul.f32 %v5353, %v5922
        %v6015 = vmul.f32 %v5354, %v5927
        %v6016 = vmul.f32 %v5355, %v5932
        %v6017 = vmul.f32 %v5356, %v5937
        %v6018 = vmul.f32 %v5357, %v5942
        %v6019 = vmul.f32 %v5358, %v5947
        %v6020 = vmul.f32 %v5359, %v5952
        %v6021 = vmul.f32 %v5360, %v5957
        %v6022 = vmul.f32 %v5361, %v5962
        %v6023 = vmul.f32 %v5362, %v5967
        %v6024 = vadd.f32 %v5969, %v5970
        %v6025 = vadd.f32 %v6024, %v5971
        %v6026 = vadd.f32 %v6025, %v5972
        %v6027 = vadd.f32 %v6026, %v5973
        %v6028 = vadd.f32 %v6027, %v5974
        %v6029 = vadd.f32 %v6028, %v5975
        %v6030 = vadd.f32 %v6029, %v5976
        %v6031 = vadd.f32 %v6030, %v5977
        %v6032 = vadd.f32 %v6031, %v5978
        %v6033 = vadd.f32 %v6032, %v5979
        %v6034 = vadd.f32 %v6033, %v5980
        %v6035 = vadd.f32 %v6034, %v5981
        %v6036 = vadd.f32 %v6035, %v5982
        %v6037 = vadd.f32 %v6036, %v5983
        %v6038 = vadd.f32 %v6037, %v5984
        %v6039 = vadd.f32 %v6038, %v5985
        %v6040 = vadd.f32 %v6039, %v5986
        %v6041 = vadd.f32 %v6040, %v5987
        %v6042 = vadd.f32 %v6041, %v5988
        %v6043 = vadd.f32 %v6042, %v5989
        %v6044 = vadd.f32 %v6043, %v5990
        %v6045 = vadd.f32 %v6044, %v5991
        %v6046 = vadd.f32 %v6045, %v5992
        %v6047 = vadd.f32 %v6046, %v5993
        %v6048 = vadd.f32 %v6047, %v5994
        %v6049 = vadd.f32 %v6048, %v5995
        %v6050 = vadd.f32 %v6049, %v5996
        %v6051 = vadd.f32 %v6050, %v5997
        %v6052 = vadd.f32 %v6051, %v5998
        %v6053 = vadd.f32 %v6052, %v5999
        %v6054 = vadd.f32 %v6053, %v6000
        %v6055 = vadd.f32 %v6054, %v6001
        %v6056 = vadd.f32 %v6055, %v6002
        %v6057 = vadd.f32 %v6056, %v6003
        %v6058 = vadd.f32 %v6057, %v6004
        %v6059 = vadd.f32 %v6058, %v6005
        %v6060 = vadd.f32 %v6059, %v6006
        %v6061 = vadd.f32 %v6060, %v6007
        %v6062 = vadd.f32 %v6061, %v6008
        %v6063 = vadd.f32 %v6062, %v6009
        %v6064 = vadd.f32 %v6063, %v6010
        %v6065 = vadd.f32 %v6064, %v6011
        %v6066 = vadd.f32 %v6065, %v6012
        %v6067 = vadd.f32 %v6066, %v6013
        %v6068 = vadd.f32 %v6067, %v6014
        %v6069 = vadd.f32 %v6068, %v6015
        %v6070 = vadd.f32 %v6069, %v6016
        %v6071 = vadd.f32 %v6070, %v6017
        %v6072 = vadd.f32 %v6071, %v6018
        %v6073 = vadd.f32 %v6072, %v6019
        %v6074 = vadd.f32 %v6073, %v6020
        %v6075 = vadd.f32 %v6074, %v6021
        %v6076 = vadd.f32 %v6075, %v6022
        %v6077 = vadd.f32 %v6076, %v6023
        %v6078 = vrot.slane %v6077, 4
        %v6079 = vadd.f32 %v6077, %v6078
        %v6080 = vrot.slane %v6079, 2
        %v6081 = vadd.f32 %v6079, %v6080
        %v6082 = vrot.slane %v6081, 1
        %v6083 = vadd.f32 %v6081, %v6082
        %v6084 = vmul.f32 %v5969, %v5308
        %v6085 = vmul.f32 %v5970, %v5309
        %v6086 = vmul.f32 %v5971, %v5310
        %v6087 = vmul.f32 %v5972, %v5311
        %v6088 = vmul.f32 %v5973, %v5312
        %v6089 = vmul.f32 %v5974, %v5313
        %v6090 = vmul.f32 %v5975, %v5314
        %v6091 = vmul.f32 %v5976, %v5315
        %v6092 = vmul.f32 %v5977, %v5316
        %v6093 = vmul.f32 %v5978, %v5317
        %v6094 = vmul.f32 %v5979, %v5318
        %v6095 = vmul.f32 %v5980, %v5319
        %v6096 = vmul.f32 %v5981, %v5320
        %v6097 = vmul.f32 %v5982, %v5321
        %v6098 = vmul.f32 %v5983, %v5322
        %v6099 = vmul.f32 %v5984, %v5323
        %v6100 = vmul.f32 %v5985, %v5324
        %v6101 = vmul.f32 %v5986, %v5325
        %v6102 = vmul.f32 %v5987, %v5326
        %v6103 = vmul.f32 %v5988, %v5327
        %v6104 = vmul.f32 %v5989, %v5328
        %v6105 = vmul.f32 %v5990, %v5329
        %v6106 = vmul.f32 %v5991, %v5330
        %v6107 = vmul.f32 %v5992, %v5331
        %v6108 = vmul.f32 %v5993, %v5332
        %v6109 = vmul.f32 %v5994, %v5333
        %v6110 = vmul.f32 %v5995, %v5334
        %v6111 = vmul.f32 %v5996, %v5335
        %v6112 = vmul.f32 %v5997, %v5336
        %v6113 = vmul.f32 %v5998, %v5337
        %v6114 = vmul.f32 %v5999, %v5338
        %v6115 = vmul.f32 %v6000, %v5339
        %v6116 = vmul.f32 %v6001, %v5340
        %v6117 = vmul.f32 %v6002, %v5341
        %v6118 = vmul.f32 %v6003, %v5342
        %v6119 = vmul.f32 %v6004, %v5343
        %v6120 = vmul.f32 %v6005, %v5344
        %v6121 = vmul.f32 %v6006, %v5345
        %v6122 = vmul.f32 %v6007, %v5346
        %v6123 = vmul.f32 %v6008, %v5347
        %v6124 = vmul.f32 %v6009, %v5348
        %v6125 = vmul.f32 %v6010, %v5349
        %v6126 = vmul.f32 %v6011, %v5350
        %v6127 = vmul.f32 %v6012, %v5351
        %v6128 = vmul.f32 %v6013, %v5352
        %v6129 = vmul.f32 %v6014, %v5353
        %v6130 = vmul.f32 %v6015, %v5354
        %v6131 = vmul.f32 %v6016, %v5355
        %v6132 = vmul.f32 %v6017, %v5356
        %v6133 = vmul.f32 %v6018, %v5357
        %v6134 = vmul.f32 %v6019, %v5358
        %v6135 = vmul.f32 %v6020, %v5359
        %v6136 = vmul.f32 %v6021, %v5360
        %v6137 = vmul.f32 %v6022, %v5361
        %v6138 = vmul.f32 %v6023, %v5362
        %v6139 = vadd.f32 %v6084, %v6085
        %v6140 = vadd.f32 %v6139, %v6086
        %v6141 = vadd.f32 %v6140, %v6087
        %v6142 = vadd.f32 %v6141, %v6088
        %v6143 = vadd.f32 %v6142, %v6089
        %v6144 = vadd.f32 %v6143, %v6090
        %v6145 = vadd.f32 %v6144, %v6091
        %v6146 = vadd.f32 %v6145, %v6092
        %v6147 = vadd.f32 %v6146, %v6093
        %v6148 = vadd.f32 %v6147, %v6094
        %v6149 = vadd.f32 %v6148, %v6095
        %v6150 = vadd.f32 %v6149, %v6096
        %v6151 = vadd.f32 %v6150, %v6097
        %v6152 = vadd.f32 %v6151, %v6098
        %v6153 = vadd.f32 %v6152, %v6099
        %v6154 = vadd.f32 %v6153, %v6100
        %v6155 = vadd.f32 %v6154, %v6101
        %v6156 = vadd.f32 %v6155, %v6102
        %v6157 = vadd.f32 %v6156, %v6103
        %v6158 = vadd.f32 %v6157, %v6104
        %v6159 = vadd.f32 %v6158, %v6105
        %v6160 = vadd.f32 %v6159, %v6106
        %v6161 = vadd.f32 %v6160, %v6107
        %v6162 = vadd.f32 %v6161, %v6108
        %v6163 = vadd.f32 %v6162, %v6109
        %v6164 = vadd.f32 %v6163, %v6110
        %v6165 = vadd.f32 %v6164, %v6111
        %v6166 = vadd.f32 %v6165, %v6112
        %v6167 = vadd.f32 %v6166, %v6113
        %v6168 = vadd.f32 %v6167, %v6114
        %v6169 = vadd.f32 %v6168, %v6115
        %v6170 = vadd.f32 %v6169, %v6116
        %v6171 = vadd.f32 %v6170, %v6117
        %v6172 = vadd.f32 %v6171, %v6118
        %v6173 = vadd.f32 %v6172, %v6119
        %v6174 = vadd.f32 %v6173, %v6120
        %v6175 = vadd.f32 %v6174, %v6121
        %v6176 = vadd.f32 %v6175, %v6122
        %v6177 = vadd.f32 %v6176, %v6123
        %v6178 = vadd.f32 %v6177, %v6124
        %v6179 = vadd.f32 %v6178, %v6125
        %v6180 = vadd.f32 %v6179, %v6126
        %v6181 = vadd.f32 %v6180, %v6127
        %v6182 = vadd.f32 %v6181, %v6128
        %v6183 = vadd.f32 %v6182, %v6129
        %v6184 = vadd.f32 %v6183, %v6130
        %v6185 = vadd.f32 %v6184, %v6131
        %v6186 = vadd.f32 %v6185, %v6132
        %v6187 = vadd.f32 %v6186, %v6133
        %v6188 = vadd.f32 %v6187, %v6134
        %v6189 = vadd.f32 %v6188, %v6135
        %v6190 = vadd.f32 %v6189, %v6136
        %v6191 = vadd.f32 %v6190, %v6137
        %v6192 = vadd.f32 %v6191, %v6138
        %v6193 = vrot.slane %v6192, 4
        %v6194 = vadd.f32 %v6192, %v6193
        %v6195 = vrot.slane %v6194, 2
        %v6196 = vadd.f32 %v6194, %v6195
        %v6197 = vrot.slane %v6196, 1
        %v6198 = vadd.f32 %v6196, %v6197
        %vm6199 = vcmask 1040384
        %v6200 = vsel %vm6199, %v6083, %v6198
        %6201 = vst [vmem:[%s201] sm:$0x3] %v6200
        %s6202 = sand.u32 %s98, 1
        %s6203 = scalar_lea.sflag [#allocation3], %s6202
        %s6204 = sand.u32 %s98, 1
        %s6205 = smul.addr %s6204, 220
        %s6206 = scalar_lea.vmem [#allocation2], %s6205
        %s6207 = sand.u32 %s124, 1
        %s6208 = scalar_lea.sflag [#allocation5], %s6207
        %s6209 = sand.u32 %s124, 1
        %s6210 = smul.addr %s6209, 2
        %s6211 = scalar_lea.vmem [#allocation4], %s6210
        // Predicated region
        $region33: #{tpu_custom_call.1} parent=31 // pred_check
          %p6212 = pneg %p108
        $region34: #{tpu_custom_call.1} parent=31 // pred_check_branch
          %6214 = sbr.rel (%p6212) target = $region36
        $region35: #{tpu_custom_call.1} parent=31 // pred_region
          %s6216 = ssub.s32 3520, 3520
          %6217 = vsyncadd %s6203, %s6216
          %s6218 = smul.addr %s22, 55
          %s6219 = smul.addr %s6218, 64
          %s6220 = scalar_lea.hbm %s3, %s6219
          %s6221 = sshll.u32 %s6206, 4
          %s6222 = int_to_ptr.vmem [resolvable:$true] %s6221
          %6227 = dma.vmem_to_hbm [thread:$0]  %s6222, 3520, %s6220, %s6203, 64, 64, 4
        $region36: #{tpu_custom_call.1} parent=31 // pred_fallthru
          _
        // Predicated region
        $region37: #{tpu_custom_call.1} parent=31 // pred_check
          %p6228 = pneg %p134
        $region38: #{tpu_custom_call.1} parent=31 // pred_check_branch
          %6230 = sbr.rel (%p6228) target = $region40
        $region39: #{tpu_custom_call.1} parent=31 // pred_region
          %s6232 = ssub.s32 32, 32
          %6233 = vsyncadd %s6208, %s6232
          %s6234 = smul.addr %s22, 32
          %s6235 = scalar_lea.hbm %s4, %s6234
          %s6237 = sshll.u32 %s6211, 4
          %s6238 = int_to_ptr.vmem [resolvable:$true] %s6237
          %6240 = dma.vmem_to_hbm [thread:$0]  %s6238, 32, %s6235, %s6208
        $region40: #{tpu_custom_call.1} parent=31 // pred_fallthru
          _
      $region32: #{tpu_custom_call.1} parent=5 // pred_fallthru
        _
      %p6241 = scmp.le.s32.totalorder 2, %s17
      // Predicated region
      $region41: #{tpu_custom_call.1} parent=5 // pred_check
        %p6242 = pneg %p6241
      $region42: #{tpu_custom_call.1} parent=5 // pred_check_branch
        %6244 = sbr.rel (%p6242) target = $region44
      $region43: #{tpu_custom_call.1} parent=5 // pred_region
        %s6245 = ssub.s32 %s17, 2
        // Predicated region
        $region45: #{tpu_custom_call.1} parent=43 // pred_check
          %p6246 = pneg %p114
        $region46: #{tpu_custom_call.1} parent=43 // pred_check_branch
          %6248 = sbr.rel (%p6246) target = $region48
        $region47: #{tpu_custom_call.1} parent=43 // pred_region
          %s6249 = sand.u32 %s99, 1
          %s6250 = scalar_lea.sflag [#allocation3], %s6249
          %s6251 = sand.u32 %s99, 1
          %s6252 = smul.addr %s6251, 220
          %s6253 = scalar_lea.vmem [#allocation2], %s6252
          %6254 = dma.done %s6250, 3520
        $region48: #{tpu_custom_call.1} parent=43 // pred_fallthru
          _
        // Predicated region
        $region49: #{tpu_custom_call.1} parent=43 // pred_check
          %p6255 = pneg %p140
        $region50: #{tpu_custom_call.1} parent=43 // pred_check_branch
          %6257 = sbr.rel (%p6255) target = $region52
        $region51: #{tpu_custom_call.1} parent=43 // pred_region
          %s6258 = sand.u32 %s125, 1
          %s6259 = scalar_lea.sflag [#allocation5], %s6258
          %s6260 = sand.u32 %s125, 1
          %s6261 = smul.addr %s6260, 2
          %s6262 = scalar_lea.vmem [#allocation4], %s6261
          %6263 = dma.done %s6259, 32
        $region52: #{tpu_custom_call.1} parent=43 // pred_fallthru
          _
      $region44: #{tpu_custom_call.1} parent=5 // pred_fallthru
        _
    $region6: #{tpu_custom_call.1} parent=1 // loop_footer
      %s21 = sadd.s32 1, %s17
    $region7: #{tpu_custom_call.1} parent=1 // loop_footer_branch
      %16 = sbr.rel target = $region3
    $region8: #{tpu_custom_call.1} parent=1 // loop_exit
      _
    %6264 = vsyncpa [#allocation3], 1
    %s6265 = scalar_lea.sflag [#allocation3], 1
    %6266 = vsyncpa %s6265, 1
    %6267 = vsyncpa [#allocation5], 1
    %s6268 = scalar_lea.sflag [#allocation5], 1
    %6269 = vsyncpa %s6268, 1

</llo_original>
